<compile_context>
chip_gen: v6e
topology: v6e:2x2x1
jax: 0.10.0
libtpu: 0.0.40
codegen_flags: <defaults>
</compile_context>

<pallas_src>
import jax
import jax.numpy as jnp
from jax.experimental import pallas as pl
from jax.experimental.pallas import tpu as pltpu

ACTION_TYPES = 7
OBJECT_TYPES = 52
HELD_TYPE_VOCAB = 7  # object_type_encoder embedding table size

OUTPUT_DIM = 128
H = OUTPUT_DIM // 4        # 32
H2 = H // 2                # 16

K_IN = 512                 # fused stage-1 input width (391 real cols, zero-padded)
N1 = 640                   # fused stage-1 output width (128-aligned segments)
# stage-1 output column layout (everything else is exact zero padding):
#   [  0: 96)  a_fields  = action type / obj1 / obj2 encodings
#   [128:224)  h_small   = status / pos / rot first-layer pre-activations
#   [256:544)  held_in   = held1 type(16) | held1 objs(128) | held2 type(16) | held2 objs(128)


# ----------------------------------------------------------------------------
# Pallas kernel: full MLP stack for one tile of TM rows.
# ----------------------------------------------------------------------------
def agent_encoder_kernel(
    x_ref,                                   # (TM, 512) bf16 packed activations
    w1_ref, b1_ref,                          # fused stage-1 block-diagonal
    w2_ref, b2_ref,                          # status/pos/rot second layer
    wa1t_ref, wa1b_ref, ba1_ref,             # action encoder layer 1 (row-split)
    wa2_ref, ba2_ref,                        # action encoder layer 2
    wh1_ref, bh1_ref, wh2_ref, bh2_ref,      # held-object encoder
    wga_ref, wgh_ref, wgs_ref, bg_ref,       # agent encoder (row-split Wg)
    out_ref,
):
    f32 = jnp.float32
    bf16 = jnp.bfloat16
    relu = lambda v: jnp.maximum(v, 0.0)

    def mm(a, w_ref):                        # bf16 MXU inputs, f32 accumulate
        return jnp.dot(a.astype(bf16), w_ref[...], preferred_element_type=f32)

    # ---- all per-field encoders: one block-diagonal matmul ------------------
    y1 = mm(x_ref[...], w1_ref) + b1_ref[...]                 # (TM, 640) f32

    # ---- status / pos / rot second layer ------------------------------------
    s = mm(relu(y1[:, 128:256]), w2_ref) + b2_ref[...]        # (TM, 96): st|pos|rot

    # ---- action encoder ------------------------------------------------------
    act_h = relu(mm(y1[:, 0:128], wa1t_ref) + mm(s, wa1b_ref) + ba1_ref[...])
    act = mm(act_h, wa2_ref) + ba2_ref[...]                   # (TM, 64)

    # ---- held-object encoder -------------------------------------------------
    held_h = relu(mm(y1[:, 256:640], wh1_ref) + bh1_ref[...])
    held = mm(held_h, wh2_ref) + bh2_ref[...]                 # (TM, 64)

    # ---- agent encoder: ReLU then Linear over [act | held | pos | rot] -------
    out_ref[...] = (mm(relu(act), wga_ref) + mm(relu(held), wgh_ref)
                    + mm(relu(s), wgs_ref) + bg_ref[...])     # (TM, 128)


# ----------------------------------------------------------------------------
# Deterministic parameter init (same shapes as the PyTorch module).
# ----------------------------------------------------------------------------
def init_params(key):
    keys = iter(jax.random.split(key, 64))

    def nrm(shape, scale):
        return scale * jax.random.normal(next(keys), shape, dtype=jnp.float32)

    def lin(in_d, out_d):
        s = 1.0 / (in_d ** 0.5)
        return nrm((in_d, out_d), s), nrm((out_d,), s)  # W:(in,out), b:(out,)

    p = {}
    p["E_at"] = nrm((ACTION_TYPES, H), 1.0)
    p["W_at"], p["b_at"] = lin(H, H)
    p["E_o1"] = nrm((OBJECT_TYPES, H), 1.0)
    p["W_o1"], p["b_o1"] = lin(H, H)
    p["E_o2"] = nrm((OBJECT_TYPES, H), 1.0)
    p["W_o2"], p["b_o2"] = lin(H, H)
    p["W_s1"], p["b_s1"] = lin(1, H)
    p["W_s2"], p["b_s2"] = lin(H, H)
    p["W_a1"], p["b_a1"] = lin(4 * H, 4 * H)
    p["W_a2"], p["b_a2"] = lin(4 * H, 2 * H)
    p["W_p1"], p["b_p1"] = lin(3, H)
    p["W_p2"], p["b_p2"] = lin(H, H)
    p["W_r1"], p["b_r1"] = lin(3, H)
    p["W_r2"], p["b_r2"] = lin(H, H)
    p["E_ot"] = nrm((HELD_TYPE_VOCAB, H2), 1.0)
    p["W_ot"], p["b_ot"] = lin(H2, H2)
    p["E_ob"] = nrm((OBJECT_TYPES, H), 1.0)
    p["W_ob"], p["b_ob"] = lin(H, H)
    p["W_h1"], p["b_h1"] = lin(9 * H, 4 * H)
    p["W_h2"], p["b_h2"] = lin(4 * H, 2 * H)
    p["W_g"], p["b_g"] = lin(6 * H, OUTPUT_DIM)
    return p


# ----------------------------------------------------------------------------
# One-time weight packing (done OUTSIDE the per-call forward).
# ----------------------------------------------------------------------------
def prepare_params(p):
    f32, bf16 = jnp.float32, jnp.bfloat16

    # ReLU folded into the embedding tables: relu(E[idx]) == relu(E)[idx].
    pk = {
        "E_at": jax.nn.relu(p["E_at"]),
        "E_o1": jax.nn.relu(p["E_o1"]),
        "E_o2": jax.nn.relu(p["E_o2"]),
        "E_ot": jax.nn.relu(p["E_ot"]),
        "E_ob": jax.nn.relu(p["E_ob"]),
    }

    # ---- fused stage-1 block-diagonal weight: (512, 640) ---------------------
    # input cols : [at 0:32 | o1 32:64 | o2 64:96 | status 96 | pos 97:100 |
    #               rot 100:103 | t1 103:119 | ho1 119:247 | t2 247:263 |
    #               ho2 263:391 | zero pad 391:512]
    w1 = jnp.zeros((K_IN, N1), f32)
    b1 = jnp.zeros((1, N1), f32)
    # action type / obj1 / obj2  -> out [0:96)
    w1 = w1.at[0:32, 0:32].set(p["W_at"])
    w1 = w1.at[32:64, 32:64].set(p["W_o1"])
    w1 = w1.at[64:96, 64:96].set(p["W_o2"])
    b1 = b1.at[0, 0:96].set(jnp.concatenate([p["b_at"], p["b_o1"], p["b_o2"]]))
    # status / pos / rot first layer -> out [128:224)
    w1 = w1.at[96:97, 128:160].set(p["W_s1"])
    w1 = w1.at[97:100, 160:192].set(p["W_p1"])
    w1 = w1.at[100:103, 192:224].set(p["W_r1"])
    b1 = b1.at[0, 128:224].set(jnp.concatenate([p["b_s1"], p["b_p1"], p["b_r1"]]))
    # held types + held objects -> out [256:544)
    w1 = w1.at[103:119, 256:272].set(p["W_ot"])
    for k in range(4):
        w1 = w1.at[119 + 32 * k:151 + 32 * k, 272 + 32 * k:304 + 32 * k].set(p["W_ob"])
    w1 = w1.at[247:263, 400:416].set(p["W_ot"])
    for k in range(4):
        w1 = w1.at[263 + 32 * k:295 + 32 * k, 416 + 32 * k:448 + 32 * k].set(p["W_ob"])
    b1 = b1.at[0, 256:272].set(p["b_ot"])
    b1 = b1.at[0, 272:400].set(jnp.tile(p["b_ob"], 4))
    b1 = b1.at[0, 400:416].set(p["b_ot"])
    b1 = b1.at[0, 416:544].set(jnp.tile(p["b_ob"], 4))

    # ---- status / pos / rot second layer: (128, 96) --------------------------
    w2 = jnp.zeros((128, 96), f32)
    w2 = w2.at[0:32, 0:32].set(p["W_s2"])
    w2 = w2.at[32:64, 32:64].set(p["W_p2"])
    w2 = w2.at[64:96, 64:96].set(p["W_r2"])
    b2 = jnp.concatenate([p["b_s2"], p["b_p2"], p["b_r2"]])[None, :]

    # ---- action encoder: split Wa1 rows into [action-fields | status] --------
    wa1t = jnp.zeros((128, 128), f32).at[0:96, :].set(p["W_a1"][0:96])
    wa1b = jnp.zeros((96, 128), f32).at[0:32, :].set(p["W_a1"][96:128])
    ba1 = p["b_a1"][None, :]
    wa2, ba2 = p["W_a2"], p["b_a2"][None, :]

    # ---- held-object encoder (rows padded 288 -> 384) -------------------------
    wh1 = jnp.zeros((384, 128), f32).at[0:288, :].set(p["W_h1"])
    bh1 = p["b_h1"][None, :]
    wh2, bh2 = p["W_h2"], p["b_h2"][None, :]

    # ---- agent encoder: split Wg rows into [act | held | pos/rot] -------------
    wga = p["W_g"][0:64]
    wgh = p["W_g"][64:128]
    wgs = jnp.zeros((96, 128), f32).at[32:96, :].set(p["W_g"][128:192])
    bg = p["b_g"][None, :]

    pk["mats"] = (
        w1.astype(bf16), b1,
        w2.astype(bf16), b2,
        wa1t.astype(bf16), wa1b.astype(bf16), ba1,
        wa2.astype(bf16), ba2,
        wh1.astype(bf16), bh1, wh2.astype(bf16), bh2,
        wga.astype(bf16), wgh.astype(bf16), wgs.astype(bf16), bg,
    )
    return pk


def _pick_tm(m):
    # Largest row tile that still leaves >= 2 grid steps (v7x has 2 TensorCores),
    # capped at 512 (VMEM headroom) and floored at 16 (bf16 sublane packing).
    for tm in (512, 256, 128, 64, 32, 16):
        if m >= 2 * tm:
            return tm
    return 16


# ----------------------------------------------------------------------------
# Wrapper: embedding gathers + activation packing (glue) + pallas_call.
# ----------------------------------------------------------------------------
def agent_encoder_forward(pk, agent_pos, agent_rot, agent_action,
                          action_status, agent_held):
    B, N = agent_pos.shape[:2]
    M = B * N

    a_type = agent_action[..., 0].reshape(M).astype(jnp.int32)
    a_o1 = agent_action[..., 1].reshape(M).astype(jnp.int32)
    a_o2 = agent_action[..., 2].reshape(M).astype(jnp.int32)
    h1t = agent_held[..., 0].reshape(M).astype(jnp.int32)
    h1 = agent_held[..., 1:5].reshape(M, 4).astype(jnp.int32)
    h2t = agent_held[..., 5].reshape(M).astype(jnp.int32)
    h2 = agent_held[..., 6:10].reshape(M, 4).astype(jnp.int32)
    status = action_status.reshape(M, 1).astype(jnp.float32)
    pos = agent_pos.reshape(M, 3).astype(jnp.float32)
    rot = agent_rot.reshape(M, 3).astype(jnp.float32)

    # Single packed activation slab (ReLU already folded into the tables).
    x = jnp.concatenate([
        pk["E_at"][a_type], pk["E_o1"][a_o1], pk["E_o2"][a_o2],   # 96
        status, pos, rot,                                          # 7
        pk["E_ot"][h1t], pk["E_ob"][h1].reshape(M, 4 * H),         # 144
        pk["E_ot"][h2t], pk["E_ob"][h2].reshape(M, 4 * H),         # 144
    ], axis=-1).astype(jnp.bfloat16)                               # (M, 391)

    tm = _pick_tm(M)
    Mp = ((M + tm - 1) // tm) * tm
    x = jnp.pad(x, ((0, Mp - M), (0, K_IN - x.shape[1])))          # (Mp, 512)

    mats = pk["mats"]
    row_spec = pl.BlockSpec((tm, K_IN), lambda i: (i, 0))
    full_spec = lambda a: pl.BlockSpec(a.shape, lambda i: (0, 0))

    out = pl.pallas_call(
        agent_encoder_kernel,
        out_shape=jax.ShapeDtypeStruct((Mp, OUTPUT_DIM), jnp.float32),
        grid_spec=pltpu.PrefetchScalarGridSpec(
            num_scalar_prefetch=0,
            grid=(Mp // tm,),
            in_specs=[row_spec] + [full_spec(m) for m in mats],
            out_specs=pl.BlockSpec((tm, OUTPUT_DIM), lambda i: (i, 0)),
        ),
        compiler_params=pltpu.CompilerParams(
            dimension_semantics=("parallel",)),
    )(x, *mats)

    return out[:M].reshape(B, N, OUTPUT_DIM)


# ----------------------------------------------------------------------------
# Pure-JAX reference (mirrors the PyTorch forward) for correctness checking.
# ----------------------------------------------------------------------------
def reference_forward(p, agent_pos, agent_rot, agent_action, action_status,
                      agent_held):
    relu = jax.nn.relu

    def emb_seq(E, W, b, idx):
        return relu(E[idx]) @ W + b

    at = emb_seq(p["E_at"], p["W_at"], p["b_at"], agent_action[..., 0])
    o1 = emb_seq(p["E_o1"], p["W_o1"], p["b_o1"], agent_action[..., 1])
    o2 = emb_seq(p["E_o2"], p["W_o2"], p["b_o2"], agent_action[..., 2])
    st = relu(action_status.astype(jnp.float32) @ p["W_s1"] + p["b_s1"]) \
        @ p["W_s2"] + p["b_s2"]
    action_in = jnp.concatenate([at, o1, o2, st], axis=-1)
    action_emb = relu(action_in @ p["W_a1"] + p["b_a1"]) @ p["W_a2"] + p["b_a2"]

    pos_emb = relu(agent_pos.astype(jnp.float32) @ p["W_p1"] + p["b_p1"]) \
        @ p["W_p2"] + p["b_p2"]
    rot_emb = relu(agent_rot.astype(jnp.float32) @ p["W_r1"] + p["b_r1"]) \
        @ p["W_r2"] + p["b_r2"]

    h1t = emb_seq(p["E_ot"], p["W_ot"], p["b_ot"], agent_held[..., 0])
    h2t = emb_seq(p["E_ot"], p["W_ot"], p["b_ot"], agent_held[..., 5])
    h1 = emb_seq(p["E_ob"], p["W_ob"], p["b_ob"], agent_held[..., 1:5])
    h2 = emb_seq(p["E_ob"], p["W_ob"], p["b_ob"], agent_held[..., 6:10])
    B, N = h1.shape[:2]
    h1 = h1.reshape(B, N, -1)
    h2 = h2.reshape(B, N, -1)
    held_in = jnp.concatenate([h1t, h1, h2t, h2], axis=-1)
    held_emb = relu(held_in @ p["W_h1"] + p["b_h1"]) @ p["W_h2"] + p["b_h2"]

    agents_in = jnp.concatenate([action_emb, held_emb, pos_emb, rot_emb], axis=-1)
    return relu(agents_in) @ p["W_g"] + p["b_g"]


# ----------------------------------------------------------------------------
if __name__ == "__main__":
    key = jax.random.PRNGKey(0)
    k_param, k_pos, k_rot, k_act, k_stat, k_held_t, k_held_o = \
        jax.random.split(key, 7)

    params = init_params(k_param)
    packed = prepare_params(params)           # one-time weight packing

    B, N = 4, 64                              # M = 256 rows -> tm=128, 2 grid steps
    agent_pos = jax.random.normal(k_pos, (B, N, 3), dtype=jnp.float32)
    agent_rot = jax.random.normal(k_rot, (B, N, 3), dtype=jnp.float32)
    # agent_action = [action_type, action_obj1, action_obj2]
    action_type = jax.random.randint(k_act, (B, N, 1), 0, ACTION_TYPES)
    action_objs = jax.random.randint(k_held_o, (B, N, 2), 0, OBJECT_TYPES)
    agent_action = jnp.concatenate([action_type, action_objs], axis=-1)
    action_status = jax.random.normal(k_stat, (B, N, 1), dtype=jnp.float32)
    # agent_held = [held1_type(1), held1_objs(4), held2_type(1), held2_objs(4)]
    held_types = jax.random.randint(k_held_t, (B, N, 2), 0, HELD_TYPE_VOCAB)
    held_objs = jax.random.randint(k_held_o, (B, N, 8), 0, OBJECT_TYPES)
    agent_held = jnp.concatenate(
        [held_types[..., 0:1], held_objs[..., 0:4],
         held_types[..., 1:2], held_objs[..., 4:8]], axis=-1)

    fwd = jax.jit(agent_encoder_forward)
    out = jax.block_until_ready(fwd(packed, agent_pos, agent_rot, agent_action,
                                    action_status, agent_held))

    ref = reference_forward(params, agent_pos, agent_rot, agent_action,
                            action_status, agent_held)
    assert out.shape == (B, N, OUTPUT_DIM), out.shape
    max_err = float(jnp.max(jnp.abs(out - ref)))
    # bf16 MXU inputs with f32 accumulation -> slightly relaxed tolerance.
    assert jnp.allclose(out, ref, rtol=2e-2, atol=2e-2), max_err

    print("KERNEL_OK")
</pallas_src>

<mosaic_0001>
module attributes {stable_mosaic.version = 11 : i64} {
  func.func @agent_encoder_kernel(%arg0: i32, %arg1: memref<128x512xbf16, #tpu.memory_space<vmem>>, %arg2: memref<512x640xbf16, #tpu.memory_space<vmem>>, %arg3: memref<1x640xf32, #tpu.memory_space<vmem>>, %arg4: memref<128x96xbf16, #tpu.memory_space<vmem>>, %arg5: memref<1x96xf32, #tpu.memory_space<vmem>>, %arg6: memref<128x128xbf16, #tpu.memory_space<vmem>>, %arg7: memref<96x128xbf16, #tpu.memory_space<vmem>>, %arg8: memref<1x128xf32, #tpu.memory_space<vmem>>, %arg9: memref<128x64xbf16, #tpu.memory_space<vmem>>, %arg10: memref<1x64xf32, #tpu.memory_space<vmem>>, %arg11: memref<384x128xbf16, #tpu.memory_space<vmem>>, %arg12: memref<1x128xf32, #tpu.memory_space<vmem>>, %arg13: memref<128x64xbf16, #tpu.memory_space<vmem>>, %arg14: memref<1x64xf32, #tpu.memory_space<vmem>>, %arg15: memref<64x128xbf16, #tpu.memory_space<vmem>>, %arg16: memref<64x128xbf16, #tpu.memory_space<vmem>>, %arg17: memref<96x128xbf16, #tpu.memory_space<vmem>>, %arg18: memref<1x128xf32, #tpu.memory_space<vmem>>, %arg19: memref<128x128xf32, #tpu.memory_space<vmem>>) attributes {dimension_semantics = [#tpu.dimension_semantics<parallel>], iteration_bounds = array<i64: 2>, scalar_prefetch = 0 : i64, scratch_operands = 0 : i64, tpu.core_type = #tpu.core_type<tc>, window_params = [{transform_indices = @transform_0, window_bounds = array<i64: 128, 512>}, {pipeline_mode = #tpu.pipeline_mode<synchronous>, transform_indices = @transform_1, window_bounds = array<i64: 512, 640>}, {pipeline_mode = #tpu.pipeline_mode<synchronous>, transform_indices = @transform_2, window_bounds = array<i64: 1, 640>}, {pipeline_mode = #tpu.pipeline_mode<synchronous>, transform_indices = @transform_3, window_bounds = array<i64: 128, 96>}, {pipeline_mode = #tpu.pipeline_mode<synchronous>, transform_indices = @transform_4, window_bounds = array<i64: 1, 96>}, {pipeline_mode = #tpu.pipeline_mode<synchronous>, transform_indices = @transform_5, window_bounds = array<i64: 128, 128>}, {pipeline_mode = #tpu.pipeline_mode<synchronous>, transform_indices = @transform_6, window_bounds = array<i64: 96, 128>}, {pipeline_mode = #tpu.pipeline_mode<synchronous>, transform_indices = @transform_7, window_bounds = array<i64: 1, 128>}, {pipeline_mode = #tpu.pipeline_mode<synchronous>, transform_indices = @transform_8, window_bounds = array<i64: 128, 64>}, {pipeline_mode = #tpu.pipeline_mode<synchronous>, transform_indices = @transform_9, window_bounds = array<i64: 1, 64>}, {pipeline_mode = #tpu.pipeline_mode<synchronous>, transform_indices = @transform_10, window_bounds = array<i64: 384, 128>}, {pipeline_mode = #tpu.pipeline_mode<synchronous>, transform_indices = @transform_11, window_bounds = array<i64: 1, 128>}, {pipeline_mode = #tpu.pipeline_mode<synchronous>, transform_indices = @transform_12, window_bounds = array<i64: 128, 64>}, {pipeline_mode = #tpu.pipeline_mode<synchronous>, transform_indices = @transform_13, window_bounds = array<i64: 1, 64>}, {pipeline_mode = #tpu.pipeline_mode<synchronous>, transform_indices = @transform_14, window_bounds = array<i64: 64, 128>}, {pipeline_mode = #tpu.pipeline_mode<synchronous>, transform_indices = @transform_15, window_bounds = array<i64: 64, 128>}, {pipeline_mode = #tpu.pipeline_mode<synchronous>, transform_indices = @transform_16, window_bounds = array<i64: 96, 128>}, {pipeline_mode = #tpu.pipeline_mode<synchronous>, transform_indices = @transform_17, window_bounds = array<i64: 1, 128>}, {transform_indices = @transform_18, window_bounds = array<i64: 128, 128>}]} {
    %c0 = arith.constant 0 : index
    %c0_0 = arith.constant 0 : index
    %0 = vector.load %arg1[%c0, %c0_0] : memref<128x512xbf16, #tpu.memory_space<vmem>>, vector<128x512xbf16>
    %c0_1 = arith.constant 0 : index
    %c0_2 = arith.constant 0 : index
    %1 = vector.load %arg2[%c0_1, %c0_2] : memref<512x640xbf16, #tpu.memory_space<vmem>>, vector<512x640xbf16>
    %cst = arith.constant dense<0.000000e+00> : vector<128x640xf32>
    %2 = tpu.matmul %0, %1, %cst {dimension_numbers = #tpu.dot_dimension_numbers<[1], [0], [0], [1], [0, 0, 1, 1], [], []>} : vector<128x512xbf16>, vector<512x640xbf16>, vector<128x640xf32> -> vector<128x640xf32>
    %c0_3 = arith.constant 0 : index
    %c0_4 = arith.constant 0 : index
    %3 = vector.load %arg3[%c0_3, %c0_4] : memref<1x640xf32, #tpu.memory_space<vmem>>, vector<1x640xf32>
    %4 = vector.broadcast %3 : vector<1x640xf32> to vector<128x640xf32>
    %5 = arith.addf %2, %4 : vector<128x640xf32>
    %6 = vector.extract_strided_slice %5 {offsets = [0, 128], sizes = [128, 128], strides = [1, 1]} : vector<128x640xf32> to vector<128x128xf32>
    %cst_5 = arith.constant 0.000000e+00 : f32
    %7 = vector.broadcast %cst_5 : f32 to vector<128x128xf32>
    %8 = arith.maximumf %6, %7 : vector<128x128xf32>
    %9 = arith.truncf %8 : vector<128x128xf32> to vector<128x128xbf16>
    %c0_6 = arith.constant 0 : index
    %c0_7 = arith.constant 0 : index
    %10 = vector.load %arg4[%c0_6, %c0_7] : memref<128x96xbf16, #tpu.memory_space<vmem>>, vector<128x96xbf16>
    %cst_8 = arith.constant dense<0.000000e+00> : vector<128x96xf32>
    %11 = tpu.matmul %9, %10, %cst_8 {dimension_numbers = #tpu.dot_dimension_numbers<[1], [0], [0], [1], [0, 0, 1, 1], [], []>} : vector<128x128xbf16>, vector<128x96xbf16>, vector<128x96xf32> -> vector<128x96xf32>
    %c0_9 = arith.constant 0 : index
    %c0_10 = arith.constant 0 : index
    %12 = vector.load %arg5[%c0_9, %c0_10] : memref<1x96xf32, #tpu.memory_space<vmem>>, vector<1x96xf32>
    %13 = vector.broadcast %12 : vector<1x96xf32> to vector<128x96xf32>
    %14 = arith.addf %11, %13 : vector<128x96xf32>
    %15 = vector.extract_strided_slice %5 {offsets = [0, 0], sizes = [128, 128], strides = [1, 1]} : vector<128x640xf32> to vector<128x128xf32>
    %16 = arith.truncf %15 : vector<128x128xf32> to vector<128x128xbf16>
    %c0_11 = arith.constant 0 : index
    %c0_12 = arith.constant 0 : index
    %17 = vector.load %arg6[%c0_11, %c0_12] : memref<128x128xbf16, #tpu.memory_space<vmem>>, vector<128x128xbf16>
    %cst_13 = arith.constant dense<0.000000e+00> : vector<128x128xf32>
    %18 = tpu.matmul %16, %17, %cst_13 {dimension_numbers = #tpu.dot_dimension_numbers<[1], [0], [0], [1], [0, 0, 1, 1], [], []>} : vector<128x128xbf16>, vector<128x128xbf16>, vector<128x128xf32> -> vector<128x128xf32>
    %19 = arith.truncf %14 : vector<128x96xf32> to vector<128x96xbf16>
    %c0_14 = arith.constant 0 : index
    %c0_15 = arith.constant 0 : index
    %20 = vector.load %arg7[%c0_14, %c0_15] : memref<96x128xbf16, #tpu.memory_space<vmem>>, vector<96x128xbf16>
    %cst_16 = arith.constant dense<0.000000e+00> : vector<128x128xf32>
    %21 = tpu.matmul %19, %20, %cst_16 {dimension_numbers = #tpu.dot_dimension_numbers<[1], [0], [0], [1], [0, 0, 1, 1], [], []>} : vector<128x96xbf16>, vector<96x128xbf16>, vector<128x128xf32> -> vector<128x128xf32>
    %22 = arith.addf %18, %21 : vector<128x128xf32>
    %c0_17 = arith.constant 0 : index
    %c0_18 = arith.constant 0 : index
    %23 = vector.load %arg8[%c0_17, %c0_18] : memref<1x128xf32, #tpu.memory_space<vmem>>, vector<1x128xf32>
    %24 = vector.broadcast %23 : vector<1x128xf32> to vector<128x128xf32>
    %25 = arith.addf %22, %24 : vector<128x128xf32>
    %cst_19 = arith.constant 0.000000e+00 : f32
    %26 = vector.broadcast %cst_19 : f32 to vector<128x128xf32>
    %27 = arith.maximumf %25, %26 : vector<128x128xf32>
    %28 = arith.truncf %27 : vector<128x128xf32> to vector<128x128xbf16>
    %c0_20 = arith.constant 0 : index
    %c0_21 = arith.constant 0 : index
    %29 = vector.load %arg9[%c0_20, %c0_21] : memref<128x64xbf16, #tpu.memory_space<vmem>>, vector<128x64xbf16>
    %cst_22 = arith.constant dense<0.000000e+00> : vector<128x64xf32>
    %30 = tpu.matmul %28, %29, %cst_22 {dimension_numbers = #tpu.dot_dimension_numbers<[1], [0], [0], [1], [0, 0, 1, 1], [], []>} : vector<128x128xbf16>, vector<128x64xbf16>, vector<128x64xf32> -> vector<128x64xf32>
    %c0_23 = arith.constant 0 : index
    %c0_24 = arith.constant 0 : index
    %31 = vector.load %arg10[%c0_23, %c0_24] : memref<1x64xf32, #tpu.memory_space<vmem>>, vector<1x64xf32>
    %32 = vector.broadcast %31 : vector<1x64xf32> to vector<128x64xf32>
    %33 = arith.addf %30, %32 : vector<128x64xf32>
    %34 = vector.extract_strided_slice %5 {offsets = [0, 256], sizes = [128, 384], strides = [1, 1]} : vector<128x640xf32> to vector<128x384xf32>
    %35 = arith.truncf %34 : vector<128x384xf32> to vector<128x384xbf16>
    %c0_25 = arith.constant 0 : index
    %c0_26 = arith.constant 0 : index
    %36 = vector.load %arg11[%c0_25, %c0_26] : memref<384x128xbf16, #tpu.memory_space<vmem>>, vector<384x128xbf16>
    %cst_27 = arith.constant dense<0.000000e+00> : vector<128x128xf32>
    %37 = tpu.matmul %35, %36, %cst_27 {dimension_numbers = #tpu.dot_dimension_numbers<[1], [0], [0], [1], [0, 0, 1, 1], [], []>} : vector<128x384xbf16>, vector<384x128xbf16>, vector<128x128xf32> -> vector<128x128xf32>
    %c0_28 = arith.constant 0 : index
    %c0_29 = arith.constant 0 : index
    %38 = vector.load %arg12[%c0_28, %c0_29] : memref<1x128xf32, #tpu.memory_space<vmem>>, vector<1x128xf32>
    %39 = vector.broadcast %38 : vector<1x128xf32> to vector<128x128xf32>
    %40 = arith.addf %37, %39 : vector<128x128xf32>
    %cst_30 = arith.constant 0.000000e+00 : f32
    %41 = vector.broadcast %cst_30 : f32 to vector<128x128xf32>
    %42 = arith.maximumf %40, %41 : vector<128x128xf32>
    %43 = arith.truncf %42 : vector<128x128xf32> to vector<128x128xbf16>
    %c0_31 = arith.constant 0 : index
    %c0_32 = arith.constant 0 : index
    %44 = vector.load %arg13[%c0_31, %c0_32] : memref<128x64xbf16, #tpu.memory_space<vmem>>, vector<128x64xbf16>
    %cst_33 = arith.constant dense<0.000000e+00> : vector<128x64xf32>
    %45 = tpu.matmul %43, %44, %cst_33 {dimension_numbers = #tpu.dot_dimension_numbers<[1], [0], [0], [1], [0, 0, 1, 1], [], []>} : vector<128x128xbf16>, vector<128x64xbf16>, vector<128x64xf32> -> vector<128x64xf32>
    %c0_34 = arith.constant 0 : index
    %c0_35 = arith.constant 0 : index
    %46 = vector.load %arg14[%c0_34, %c0_35] : memref<1x64xf32, #tpu.memory_space<vmem>>, vector<1x64xf32>
    %47 = vector.broadcast %46 : vector<1x64xf32> to vector<128x64xf32>
    %48 = arith.addf %45, %47 : vector<128x64xf32>
    %cst_36 = arith.constant 0.000000e+00 : f32
    %49 = vector.broadcast %cst_36 : f32 to vector<128x64xf32>
    %50 = arith.maximumf %33, %49 : vector<128x64xf32>
    %51 = arith.truncf %50 : vector<128x64xf32> to vector<128x64xbf16>
    %c0_37 = arith.constant 0 : index
    %c0_38 = arith.constant 0 : index
    %52 = vector.load %arg15[%c0_37, %c0_38] : memref<64x128xbf16, #tpu.memory_space<vmem>>, vector<64x128xbf16>
    %cst_39 = arith.constant dense<0.000000e+00> : vector<128x128xf32>
    %53 = tpu.matmul %51, %52, %cst_39 {dimension_numbers = #tpu.dot_dimension_numbers<[1], [0], [0], [1], [0, 0, 1, 1], [], []>} : vector<128x64xbf16>, vector<64x128xbf16>, vector<128x128xf32> -> vector<128x128xf32>
    %cst_40 = arith.constant 0.000000e+00 : f32
    %54 = vector.broadcast %cst_40 : f32 to vector<128x64xf32>
    %55 = arith.maximumf %48, %54 : vector<128x64xf32>
    %56 = arith.truncf %55 : vector<128x64xf32> to vector<128x64xbf16>
    %c0_41 = arith.constant 0 : index
    %c0_42 = arith.constant 0 : index
    %57 = vector.load %arg16[%c0_41, %c0_42] : memref<64x128xbf16, #tpu.memory_space<vmem>>, vector<64x128xbf16>
    %cst_43 = arith.constant dense<0.000000e+00> : vector<128x128xf32>
    %58 = tpu.matmul %56, %57, %cst_43 {dimension_numbers = #tpu.dot_dimension_numbers<[1], [0], [0], [1], [0, 0, 1, 1], [], []>} : vector<128x64xbf16>, vector<64x128xbf16>, vector<128x128xf32> -> vector<128x128xf32>
    %59 = arith.addf %53, %58 : vector<128x128xf32>
    %cst_44 = arith.constant 0.000000e+00 : f32
    %60 = vector.broadcast %cst_44 : f32 to vector<128x96xf32>
    %61 = arith.maximumf %14, %60 : vector<128x96xf32>
    %62 = arith.truncf %61 : vector<128x96xf32> to vector<128x96xbf16>
    %c0_45 = arith.constant 0 : index
    %c0_46 = arith.constant 0 : index
    %63 = vector.load %arg17[%c0_45, %c0_46] : memref<96x128xbf16, #tpu.memory_space<vmem>>, vector<96x128xbf16>
    %cst_47 = arith.constant dense<0.000000e+00> : vector<128x128xf32>
    %64 = tpu.matmul %62, %63, %cst_47 {dimension_numbers = #tpu.dot_dimension_numbers<[1], [0], [0], [1], [0, 0, 1, 1], [], []>} : vector<128x96xbf16>, vector<96x128xbf16>, vector<128x128xf32> -> vector<128x128xf32>
    %65 = arith.addf %59, %64 : vector<128x128xf32>
    %c0_48 = arith.constant 0 : index
    %c0_49 = arith.constant 0 : index
    %66 = vector.load %arg18[%c0_48, %c0_49] : memref<1x128xf32, #tpu.memory_space<vmem>>, vector<1x128xf32>
    %67 = vector.broadcast %66 : vector<1x128xf32> to vector<128x128xf32>
    %68 = arith.addf %65, %67 : vector<128x128xf32>
    %c0_50 = arith.constant 0 : index
    %c0_51 = arith.constant 0 : index
    %69 = vector.load %arg19[%c0_50, %c0_51] : memref<128x128xf32, #tpu.memory_space<vmem>>, vector<128x128xf32>
    tpu.vector_store %arg19[%c0_50, %c0_51], %68 {strides = array<i32>} : memref<128x128xf32, #tpu.memory_space<vmem>>, vector<128x128xf32>,
    return
  }
  func.func @transform_0(%arg0: i32) -> (i32, i32) {
    %c0_i32 = arith.constant 0 : i32
    %c0_i32_0 = arith.constant 0 : i32
    return %arg0, %c0_i32 : i32, i32
  }
  func.func @transform_1(%arg0: i32) -> (i32, i32) {
    %c0_i32 = arith.constant 0 : i32
    %c0_i32_0 = arith.constant 0 : i32
    %c0_i32_1 = arith.constant 0 : i32
    return %c0_i32, %c0_i32_0 : i32, i32
  }
  func.func @transform_2(%arg0: i32) -> (i32, i32) {
    %c0_i32 = arith.constant 0 : i32
    %c0_i32_0 = arith.constant 0 : i32
    %c0_i32_1 = arith.constant 0 : i32
    return %c0_i32, %c0_i32_0 : i32, i32
  }
  func.func @transform_3(%arg0: i32) -> (i32, i32) {
    %c0_i32 = arith.constant 0 : i32
    %c0_i32_0 = arith.constant 0 : i32
    %c0_i32_1 = arith.constant 0 : i32
    return %c0_i32, %c0_i32_0 : i32, i32
  }
  func.func @transform_4(%arg0: i32) -> (i32, i32) {
    %c0_i32 = arith.constant 0 : i32
    %c0_i32_0 = arith.constant 0 : i32
    %c0_i32_1 = arith.constant 0 : i32
    return %c0_i32, %c0_i32_0 : i32, i32
  }
  func.func @transform_5(%arg0: i32) -> (i32, i32) {
    %c0_i32 = arith.constant 0 : i32
    %c0_i32_0 = arith.constant 0 : i32
    %c0_i32_1 = arith.constant 0 : i32
    return %c0_i32, %c0_i32_0 : i32, i32
  }
  func.func @transform_6(%arg0: i32) -> (i32, i32) {
    %c0_i32 = arith.constant 0 : i32
    %c0_i32_0 = arith.constant 0 : i32
    %c0_i32_1 = arith.constant 0 : i32
    return %c0_i32, %c0_i32_0 : i32, i32
  }
  func.func @transform_7(%arg0: i32) -> (i32, i32) {
    %c0_i32 = arith.constant 0 : i32
    %c0_i32_0 = arith.constant 0 : i32
    %c0_i32_1 = arith.constant 0 : i32
    return %c0_i32, %c0_i32_0 : i32, i32
  }
  func.func @transform_8(%arg0: i32) -> (i32, i32) {
    %c0_i32 = arith.constant 0 : i32
    %c0_i32_0 = arith.constant 0 : i32
    %c0_i32_1 = arith.constant 0 : i32
    return %c0_i32, %c0_i32_0 : i32, i32
  }
  func.func @transform_9(%arg0: i32) -> (i32, i32) {
    %c0_i32 = arith.constant 0 : i32
    %c0_i32_0 = arith.constant 0 : i32
    %c0_i32_1 = arith.constant 0 : i32
    return %c0_i32, %c0_i32_0 : i32, i32
  }
  func.func @transform_10(%arg0: i32) -> (i32, i32) {
    %c0_i32 = arith.constant 0 : i32
    %c0_i32_0 = arith.constant 0 : i32
    %c0_i32_1 = arith.constant 0 : i32
    return %c0_i32, %c0_i32_0 : i32, i32
  }
  func.func @transform_11(%arg0: i32) -> (i32, i32) {
    %c0_i32 = arith.constant 0 : i32
    %c0_i32_0 = arith.constant 0 : i32
    %c0_i32_1 = arith.constant 0 : i32
    return %c0_i32, %c0_i32_0 : i32, i32
  }
  func.func @transform_12(%arg0: i32) -> (i32, i32) {
    %c0_i32 = arith.constant 0 : i32
    %c0_i32_0 = arith.constant 0 : i32
    %c0_i32_1 = arith.constant 0 : i32
    return %c0_i32, %c0_i32_0 : i32, i32
  }
  func.func @transform_13(%arg0: i32) -> (i32, i32) {
    %c0_i32 = arith.constant 0 : i32
    %c0_i32_0 = arith.constant 0 : i32
    %c0_i32_1 = arith.constant 0 : i32
    return %c0_i32, %c0_i32_0 : i32, i32
  }
  func.func @transform_14(%arg0: i32) -> (i32, i32) {
    %c0_i32 = arith.constant 0 : i32
    %c0_i32_0 = arith.constant 0 : i32
    %c0_i32_1 = arith.constant 0 : i32
    return %c0_i32, %c0_i32_0 : i32, i32
  }
  func.func @transform_15(%arg0: i32) -> (i32, i32) {
    %c0_i32 = arith.constant 0 : i32
    %c0_i32_0 = arith.constant 0 : i32
    %c0_i32_1 = arith.constant 0 : i32
    return %c0_i32, %c0_i32_0 : i32, i32
  }
  func.func @transform_16(%arg0: i32) -> (i32, i32) {
    %c0_i32 = arith.constant 0 : i32
    %c0_i32_0 = arith.constant 0 : i32
    %c0_i32_1 = arith.constant 0 : i32
    return %c0_i32, %c0_i32_0 : i32, i32
  }
  func.func @transform_17(%arg0: i32) -> (i32, i32) {
    %c0_i32 = arith.constant 0 : i32
    %c0_i32_0 = arith.constant 0 : i32
    %c0_i32_1 = arith.constant 0 : i32
    return %c0_i32, %c0_i32_0 : i32, i32
  }
  func.func @transform_18(%arg0: i32) -> (i32, i32) {
    %c0_i32 = arith.constant 0 : i32
    %c0_i32_0 = arith.constant 0 : i32
    return %arg0, %c0_i32 : i32, i32
  }
}

</mosaic_0001>

<llo_original>
// kernel: agent_encoder_forward.1
$region0: #{agent_encoder_forward.1}
  #allocation0 [shape = 'u32[]', space=smem, size = 0x4, offset = 0x4, fixed_abs, tag = 'smem constant byte address 0x4 - core index']
  #allocation1 [shape = 'u32[144,128]{1,0:T(1,128)}', space=vmem, size = 0x12000, scoped, tag = 'internal scratch']
  %s0 = inlined_call_operand.vmem [shape: bf16[256,512], index: 0, kind: input, shape index: {}]
  %s1 = inlined_call_operand.vmem [shape: bf16[512,640], index: 1, kind: input, shape index: {}]
  %s2 = inlined_call_operand.vmem [shape: f32[1,640], index: 2, kind: input, shape index: {}]
  %s3 = inlined_call_operand.vmem [shape: bf16[128,96], index: 3, kind: input, shape index: {}]
  %s4 = inlined_call_operand.vmem [shape: f32[1,96], index: 4, kind: input, shape index: {}]
  %s5 = inlined_call_operand.vmem [shape: bf16[128,128], index: 5, kind: input, shape index: {}]
  %s6 = inlined_call_operand.vmem [shape: bf16[96,128], index: 6, kind: input, shape index: {}]
  %s7 = inlined_call_operand.vmem [shape: f32[1,128], index: 7, kind: input, shape index: {}]
  %s8 = inlined_call_operand.vmem [shape: bf16[128,64], index: 8, kind: input, shape index: {}]
  %s9 = inlined_call_operand.vmem [shape: f32[1,64], index: 9, kind: input, shape index: {}]
  %s10 = inlined_call_operand.vmem [shape: bf16[384,128], index: 10, kind: input, shape index: {}]
  %s11 = inlined_call_operand.vmem [shape: f32[1,128], index: 11, kind: input, shape index: {}]
  %s12 = inlined_call_operand.vmem [shape: bf16[128,64], index: 12, kind: input, shape index: {}]
  %s13 = inlined_call_operand.vmem [shape: f32[1,64], index: 13, kind: input, shape index: {}]
  %s14 = inlined_call_operand.vmem [shape: bf16[64,128], index: 14, kind: input, shape index: {}]
  %s15 = inlined_call_operand.vmem [shape: bf16[64,128], index: 15, kind: input, shape index: {}]
  %s16 = inlined_call_operand.vmem [shape: bf16[96,128], index: 16, kind: input, shape index: {}]
  %s17 = inlined_call_operand.vmem [shape: f32[1,128], index: 17, kind: input, shape index: {}]
  %s18 = inlined_call_operand.hbm [shape: f32[256,128], index: 18, kind: output, shape index: {}]
  %s19 = sld [smem:[#allocation0]]
  $region105: #{agent_encoder_forward.1} parent=0
    _
  %s21 = ssub.s32 1, %s19
  %s22 = scalar_select 0, %s21, %s19
  $region1: #{agent_encoder_forward.1} parent=0
    #allocation2 [shape = 'u8[131072]{0}', space=vmem, size = 0x20000, scoped, tag = 'output window, operand 0']
    #allocation3 [shape = 's32[2]{0}', space=sflag, size = 0x8, scoped, tag = 'scoped memory for agent_encoder_forward.1']
    %23 = vsyncpa [#allocation3], 0
    %s24 = scalar_lea.sflag [#allocation3], 1
    %25 = vsyncpa %s24, 0
    loop: start=0, step=1, limit=4
    $region2: #{agent_encoder_forward.1} parent=1 // loop_pre_header
      _
    $region3: #{agent_encoder_forward.1} parent=1 // loop_header
      %s27 = sphi 0, %s31
      %p28 = scmp.ge.s32.totalorder %s27, 4
      %s37 = sphi 0, %s39
      %s40 = sphi 0, %s37
      %s41 = sphi 0, %s40
      %s57 = sphi 0, %s41
      %s61 = sphi 0, %s61
      %s63 = sphi 0, %s61
      %s64 = sphi 0, %s63
      %s78 = sphi 0, %s64
      %s82 = sphi 0, %s82
      %s84 = sphi 0, %s82
      %s85 = sphi 0, %s84
      %s99 = sphi 0, %s85
      %s103 = sphi 0, %s103
      %s105 = sphi 0, %s103
      %s106 = sphi 0, %s105
      %s120 = sphi 0, %s106
      %s124 = sphi 0, %s124
      %s126 = sphi 0, %s124
      %s127 = sphi 0, %s126
      %s141 = sphi 0, %s127
      %s145 = sphi 0, %s145
      %s147 = sphi 0, %s145
      %s148 = sphi 0, %s147
      %s162 = sphi 0, %s148
      %s166 = sphi 0, %s166
      %s168 = sphi 0, %s166
      %s169 = sphi 0, %s168
      %s183 = sphi 0, %s169
      %s187 = sphi 0, %s187
      %s189 = sphi 0, %s187
      %s190 = sphi 0, %s189
      %s204 = sphi 0, %s190
      %s208 = sphi 0, %s208
      %s210 = sphi 0, %s208
      %s211 = sphi 0, %s210
      %s225 = sphi 0, %s211
      %s229 = sphi 0, %s229
      %s231 = sphi 0, %s229
      %s232 = sphi 0, %s231
      %s246 = sphi 0, %s232
      %s250 = sphi 0, %s250
      %s252 = sphi 0, %s250
      %s253 = sphi 0, %s252
      %s267 = sphi 0, %s253
      %s271 = sphi 0, %s271
      %s273 = sphi 0, %s271
      %s274 = sphi 0, %s273
      %s288 = sphi 0, %s274
      %s292 = sphi 0, %s292
      %s294 = sphi 0, %s292
      %s295 = sphi 0, %s294
      %s309 = sphi 0, %s295
      %s313 = sphi 0, %s313
      %s315 = sphi 0, %s313
      %s316 = sphi 0, %s315
      %s330 = sphi 0, %s316
      %s334 = sphi 0, %s334
      %s336 = sphi 0, %s334
      %s337 = sphi 0, %s336
      %s351 = sphi 0, %s337
      %s355 = sphi 0, %s355
      %s357 = sphi 0, %s355
      %s358 = sphi 0, %s357
      %s372 = sphi 0, %s358
      %s376 = sphi 0, %s376
      %s378 = sphi 0, %s376
      %s379 = sphi 0, %s378
      %s393 = sphi 0, %s379
      %s397 = sphi 0, %s397
      %s399 = sphi 0, %s397
      %s400 = sphi 0, %s399
      %s414 = sphi 0, %s400
      %s420 = sphi 0, %s422
      %s423 = sphi 0, %s420
      %s424 = sphi 0, %s423
      %s440 = sphi 0, %s424
    $region4: #{agent_encoder_forward.1} parent=1 // loop_header_branch
      %30 = sbr.rel (%p28) target = $region8
    $region5: #{agent_encoder_forward.1} parent=1 // loop_body
      %s32 = ssub.s32 %s27, 1
      %s33 = ssub.s32 %s27, 2
      %s34 = sadd.s32 %s27, 1
      %s35 = ssub.s32 %s27, %s34
      %p36 = scmp.eq.s32.totalorder %s35, 0
      %s38 = sadd.s32 %s37, 1
      %s39 = scalar_select %p36, %s37, %s38
      %p42 = pneg %p36
      %p43 = scmp.eq.s32.totalorder %s27, 1
      %p44 = por %p42, %p43
      %p45 = scmp.ne.s32.totalorder %s37, %s40
      %p46 = scmp.eq.s32.totalorder %s27, 0
      %p47 = por %p45, %p46
      %p48 = scmp.ne.s32.totalorder %s37, %s40
      %p49 = scmp.eq.s32.totalorder %s32, 1
      %p50 = por %p48, %p49
      %p51 = scmp.ne.s32.totalorder %s40, %s41
      %p52 = scmp.eq.s32.totalorder %s32, 0
      %p53 = por %p51, %p52
      %p54 = scmp.ne.s32.totalorder %s40, %s41
      %p55 = scmp.eq.s32.totalorder %s33, 1
      %p56 = por %p54, %p55
      %p58 = scmp.ne.s32.totalorder %s41, %s57
      %p59 = scmp.eq.s32.totalorder %s33, 0
      %p60 = por %p58, %p59
      %s62 = sadd.s32 %s61, 1
      %p65 = scmp.eq.s32.totalorder %s27, 1
      %p66 = scmp.ne.s32.totalorder %s61, %s63
      %p67 = scmp.eq.s32.totalorder %s27, 0
      %p68 = por %p66, %p67
      %p69 = scmp.ne.s32.totalorder %s61, %s63
      %p70 = scmp.eq.s32.totalorder %s32, 1
      %p71 = por %p69, %p70
      %p72 = scmp.ne.s32.totalorder %s63, %s64
      %p73 = scmp.eq.s32.totalorder %s32, 0
      %p74 = por %p72, %p73
      %p75 = scmp.ne.s32.totalorder %s63, %s64
      %p76 = scmp.eq.s32.totalorder %s33, 1
      %p77 = por %p75, %p76
      %p79 = scmp.ne.s32.totalorder %s64, %s78
      %p80 = scmp.eq.s32.totalorder %s33, 0
      %p81 = por %p79, %p80
      %s83 = sadd.s32 %s82, 1
      %p86 = scmp.eq.s32.totalorder %s27, 1
      %p87 = scmp.ne.s32.totalorder %s82, %s84
      %p88 = scmp.eq.s32.totalorder %s27, 0
      %p89 = por %p87, %p88
      %p90 = scmp.ne.s32.totalorder %s82, %s84
      %p91 = scmp.eq.s32.totalorder %s32, 1
      %p92 = por %p90, %p91
      %p93 = scmp.ne.s32.totalorder %s84, %s85
      %p94 = scmp.eq.s32.totalorder %s32, 0
      %p95 = por %p93, %p94
      %p96 = scmp.ne.s32.totalorder %s84, %s85
      %p97 = scmp.eq.s32.totalorder %s33, 1
      %p98 = por %p96, %p97
      %p100 = scmp.ne.s32.totalorder %s85, %s99
      %p101 = scmp.eq.s32.totalorder %s33, 0
      %p102 = por %p100, %p101
      %s104 = sadd.s32 %s103, 1
      %p107 = scmp.eq.s32.totalorder %s27, 1
      %p108 = scmp.ne.s32.totalorder %s103, %s105
      %p109 = scmp.eq.s32.totalorder %s27, 0
      %p110 = por %p108, %p109
      %p111 = scmp.ne.s32.totalorder %s103, %s105
      %p112 = scmp.eq.s32.totalorder %s32, 1
      %p113 = por %p111, %p112
      %p114 = scmp.ne.s32.totalorder %s105, %s106
      %p115 = scmp.eq.s32.totalorder %s32, 0
      %p116 = por %p114, %p115
      %p117 = scmp.ne.s32.totalorder %s105, %s106
      %p118 = scmp.eq.s32.totalorder %s33, 1
      %p119 = por %p117, %p118
      %p121 = scmp.ne.s32.totalorder %s106, %s120
      %p122 = scmp.eq.s32.totalorder %s33, 0
      %p123 = por %p121, %p122
      %s125 = sadd.s32 %s124, 1
      %p128 = scmp.eq.s32.totalorder %s27, 1
      %p129 = scmp.ne.s32.totalorder %s124, %s126
      %p130 = scmp.eq.s32.totalorder %s27, 0
      %p131 = por %p129, %p130
      %p132 = scmp.ne.s32.totalorder %s124, %s126
      %p133 = scmp.eq.s32.totalorder %s32, 1
      %p134 = por %p132, %p133
      %p135 = scmp.ne.s32.totalorder %s126, %s127
      %p136 = scmp.eq.s32.totalorder %s32, 0
      %p137 = por %p135, %p136
      %p138 = scmp.ne.s32.totalorder %s126, %s127
      %p139 = scmp.eq.s32.totalorder %s33, 1
      %p140 = por %p138, %p139
      %p142 = scmp.ne.s32.totalorder %s127, %s141
      %p143 = scmp.eq.s32.totalorder %s33, 0
      %p144 = por %p142, %p143
      %s146 = sadd.s32 %s145, 1
      %p149 = scmp.eq.s32.totalorder %s27, 1
      %p150 = scmp.ne.s32.totalorder %s145, %s147
      %p151 = scmp.eq.s32.totalorder %s27, 0
      %p152 = por %p150, %p151
      %p153 = scmp.ne.s32.totalorder %s145, %s147
      %p154 = scmp.eq.s32.totalorder %s32, 1
      %p155 = por %p153, %p154
      %p156 = scmp.ne.s32.totalorder %s147, %s148
      %p157 = scmp.eq.s32.totalorder %s32, 0
      %p158 = por %p156, %p157
      %p159 = scmp.ne.s32.totalorder %s147, %s148
      %p160 = scmp.eq.s32.totalorder %s33, 1
      %p161 = por %p159, %p160
      %p163 = scmp.ne.s32.totalorder %s148, %s162
      %p164 = scmp.eq.s32.totalorder %s33, 0
      %p165 = por %p163, %p164
      %s167 = sadd.s32 %s166, 1
      %p170 = scmp.eq.s32.totalorder %s27, 1
      %p171 = scmp.ne.s32.totalorder %s166, %s168
      %p172 = scmp.eq.s32.totalorder %s27, 0
      %p173 = por %p171, %p172
      %p174 = scmp.ne.s32.totalorder %s166, %s168
      %p175 = scmp.eq.s32.totalorder %s32, 1
      %p176 = por %p174, %p175
      %p177 = scmp.ne.s32.totalorder %s168, %s169
      %p178 = scmp.eq.s32.totalorder %s32, 0
      %p179 = por %p177, %p178
      %p180 = scmp.ne.s32.totalorder %s168, %s169
      %p181 = scmp.eq.s32.totalorder %s33, 1
      %p182 = por %p180, %p181
      %p184 = scmp.ne.s32.totalorder %s169, %s183
      %p185 = scmp.eq.s32.totalorder %s33, 0
      %p186 = por %p184, %p185
      %s188 = sadd.s32 %s187, 1
      %p191 = scmp.eq.s32.totalorder %s27, 1
      %p192 = scmp.ne.s32.totalorder %s187, %s189
      %p193 = scmp.eq.s32.totalorder %s27, 0
      %p194 = por %p192, %p193
      %p195 = scmp.ne.s32.totalorder %s187, %s189
      %p196 = scmp.eq.s32.totalorder %s32, 1
      %p197 = por %p195, %p196
      %p198 = scmp.ne.s32.totalorder %s189, %s190
      %p199 = scmp.eq.s32.totalorder %s32, 0
      %p200 = por %p198, %p199
      %p201 = scmp.ne.s32.totalorder %s189, %s190
      %p202 = scmp.eq.s32.totalorder %s33, 1
      %p203 = por %p201, %p202
      %p205 = scmp.ne.s32.totalorder %s190, %s204
      %p206 = scmp.eq.s32.totalorder %s33, 0
      %p207 = por %p205, %p206
      %s209 = sadd.s32 %s208, 1
      %p212 = scmp.eq.s32.totalorder %s27, 1
      %p213 = scmp.ne.s32.totalorder %s208, %s210
      %p214 = scmp.eq.s32.totalorder %s27, 0
      %p215 = por %p213, %p214
      %p216 = scmp.ne.s32.totalorder %s208, %s210
      %p217 = scmp.eq.s32.totalorder %s32, 1
      %p218 = por %p216, %p217
      %p219 = scmp.ne.s32.totalorder %s210, %s211
      %p220 = scmp.eq.s32.totalorder %s32, 0
      %p221 = por %p219, %p220
      %p222 = scmp.ne.s32.totalorder %s210, %s211
      %p223 = scmp.eq.s32.totalorder %s33, 1
      %p224 = por %p222, %p223
      %p226 = scmp.ne.s32.totalorder %s211, %s225
      %p227 = scmp.eq.s32.totalorder %s33, 0
      %p228 = por %p226, %p227
      %s230 = sadd.s32 %s229, 1
      %p233 = scmp.eq.s32.totalorder %s27, 1
      %p234 = scmp.ne.s32.totalorder %s229, %s231
      %p235 = scmp.eq.s32.totalorder %s27, 0
      %p236 = por %p234, %p235
      %p237 = scmp.ne.s32.totalorder %s229, %s231
      %p238 = scmp.eq.s32.totalorder %s32, 1
      %p239 = por %p237, %p238
      %p240 = scmp.ne.s32.totalorder %s231, %s232
      %p241 = scmp.eq.s32.totalorder %s32, 0
      %p242 = por %p240, %p241
      %p243 = scmp.ne.s32.totalorder %s231, %s232
      %p244 = scmp.eq.s32.totalorder %s33, 1
      %p245 = por %p243, %p244
      %p247 = scmp.ne.s32.totalorder %s232, %s246
      %p248 = scmp.eq.s32.totalorder %s33, 0
      %p249 = por %p247, %p248
      %s251 = sadd.s32 %s250, 1
      %p254 = scmp.eq.s32.totalorder %s27, 1
      %p255 = scmp.ne.s32.totalorder %s250, %s252
      %p256 = scmp.eq.s32.totalorder %s27, 0
      %p257 = por %p255, %p256
      %p258 = scmp.ne.s32.totalorder %s250, %s252
      %p259 = scmp.eq.s32.totalorder %s32, 1
      %p260 = por %p258, %p259
      %p261 = scmp.ne.s32.totalorder %s252, %s253
      %p262 = scmp.eq.s32.totalorder %s32, 0
      %p263 = por %p261, %p262
      %p264 = scmp.ne.s32.totalorder %s252, %s253
      %p265 = scmp.eq.s32.totalorder %s33, 1
      %p266 = por %p264, %p265
      %p268 = scmp.ne.s32.totalorder %s253, %s267
      %p269 = scmp.eq.s32.totalorder %s33, 0
      %p270 = por %p268, %p269
      %s272 = sadd.s32 %s271, 1
      %p275 = scmp.eq.s32.totalorder %s27, 1
      %p276 = scmp.ne.s32.totalorder %s271, %s273
      %p277 = scmp.eq.s32.totalorder %s27, 0
      %p278 = por %p276, %p277
      %p279 = scmp.ne.s32.totalorder %s271, %s273
      %p280 = scmp.eq.s32.totalorder %s32, 1
      %p281 = por %p279, %p280
      %p282 = scmp.ne.s32.totalorder %s273, %s274
      %p283 = scmp.eq.s32.totalorder %s32, 0
      %p284 = por %p282, %p283
      %p285 = scmp.ne.s32.totalorder %s273, %s274
      %p286 = scmp.eq.s32.totalorder %s33, 1
      %p287 = por %p285, %p286
      %p289 = scmp.ne.s32.totalorder %s274, %s288
      %p290 = scmp.eq.s32.totalorder %s33, 0
      %p291 = por %p289, %p290
      %s293 = sadd.s32 %s292, 1
      %p296 = scmp.eq.s32.totalorder %s27, 1
      %p297 = scmp.ne.s32.totalorder %s292, %s294
      %p298 = scmp.eq.s32.totalorder %s27, 0
      %p299 = por %p297, %p298
      %p300 = scmp.ne.s32.totalorder %s292, %s294
      %p301 = scmp.eq.s32.totalorder %s32, 1
      %p302 = por %p300, %p301
      %p303 = scmp.ne.s32.totalorder %s294, %s295
      %p304 = scmp.eq.s32.totalorder %s32, 0
      %p305 = por %p303, %p304
      %p306 = scmp.ne.s32.totalorder %s294, %s295
      %p307 = scmp.eq.s32.totalorder %s33, 1
      %p308 = por %p306, %p307
      %p310 = scmp.ne.s32.totalorder %s295, %s309
      %p311 = scmp.eq.s32.totalorder %s33, 0
      %p312 = por %p310, %p311
      %s314 = sadd.s32 %s313, 1
      %p317 = scmp.eq.s32.totalorder %s27, 1
      %p318 = scmp.ne.s32.totalorder %s313, %s315
      %p319 = scmp.eq.s32.totalorder %s27, 0
      %p320 = por %p318, %p319
      %p321 = scmp.ne.s32.totalorder %s313, %s315
      %p322 = scmp.eq.s32.totalorder %s32, 1
      %p323 = por %p321, %p322
      %p324 = scmp.ne.s32.totalorder %s315, %s316
      %p325 = scmp.eq.s32.totalorder %s32, 0
      %p326 = por %p324, %p325
      %p327 = scmp.ne.s32.totalorder %s315, %s316
      %p328 = scmp.eq.s32.totalorder %s33, 1
      %p329 = por %p327, %p328
      %p331 = scmp.ne.s32.totalorder %s316, %s330
      %p332 = scmp.eq.s32.totalorder %s33, 0
      %p333 = por %p331, %p332
      %s335 = sadd.s32 %s334, 1
      %p338 = scmp.eq.s32.totalorder %s27, 1
      %p339 = scmp.ne.s32.totalorder %s334, %s336
      %p340 = scmp.eq.s32.totalorder %s27, 0
      %p341 = por %p339, %p340
      %p342 = scmp.ne.s32.totalorder %s334, %s336
      %p343 = scmp.eq.s32.totalorder %s32, 1
      %p344 = por %p342, %p343
      %p345 = scmp.ne.s32.totalorder %s336, %s337
      %p346 = scmp.eq.s32.totalorder %s32, 0
      %p347 = por %p345, %p346
      %p348 = scmp.ne.s32.totalorder %s336, %s337
      %p349 = scmp.eq.s32.totalorder %s33, 1
      %p350 = por %p348, %p349
      %p352 = scmp.ne.s32.totalorder %s337, %s351
      %p353 = scmp.eq.s32.totalorder %s33, 0
      %p354 = por %p352, %p353
      %s356 = sadd.s32 %s355, 1
      %p359 = scmp.eq.s32.totalorder %s27, 1
      %p360 = scmp.ne.s32.totalorder %s355, %s357
      %p361 = scmp.eq.s32.totalorder %s27, 0
      %p362 = por %p360, %p361
      %p363 = scmp.ne.s32.totalorder %s355, %s357
      %p364 = scmp.eq.s32.totalorder %s32, 1
      %p365 = por %p363, %p364
      %p366 = scmp.ne.s32.totalorder %s357, %s358
      %p367 = scmp.eq.s32.totalorder %s32, 0
      %p368 = por %p366, %p367
      %p369 = scmp.ne.s32.totalorder %s357, %s358
      %p370 = scmp.eq.s32.totalorder %s33, 1
      %p371 = por %p369, %p370
      %p373 = scmp.ne.s32.totalorder %s358, %s372
      %p374 = scmp.eq.s32.totalorder %s33, 0
      %p375 = por %p373, %p374
      %s377 = sadd.s32 %s376, 1
      %p380 = scmp.eq.s32.totalorder %s27, 1
      %p381 = scmp.ne.s32.totalorder %s376, %s378
      %p382 = scmp.eq.s32.totalorder %s27, 0
      %p383 = por %p381, %p382
      %p384 = scmp.ne.s32.totalorder %s376, %s378
      %p385 = scmp.eq.s32.totalorder %s32, 1
      %p386 = por %p384, %p385
      %p387 = scmp.ne.s32.totalorder %s378, %s379
      %p388 = scmp.eq.s32.totalorder %s32, 0
      %p389 = por %p387, %p388
      %p390 = scmp.ne.s32.totalorder %s378, %s379
      %p391 = scmp.eq.s32.totalorder %s33, 1
      %p392 = por %p390, %p391
      %p394 = scmp.ne.s32.totalorder %s379, %s393
      %p395 = scmp.eq.s32.totalorder %s33, 0
      %p396 = por %p394, %p395
      %s398 = sadd.s32 %s397, 1
      %p401 = scmp.eq.s32.totalorder %s27, 1
      %p402 = scmp.ne.s32.totalorder %s397, %s399
      %p403 = scmp.eq.s32.totalorder %s27, 0
      %p404 = por %p402, %p403
      %p405 = scmp.ne.s32.totalorder %s397, %s399
      %p406 = scmp.eq.s32.totalorder %s32, 1
      %p407 = por %p405, %p406
      %p408 = scmp.ne.s32.totalorder %s399, %s400
      %p409 = scmp.eq.s32.totalorder %s32, 0
      %p410 = por %p408, %p409
      %p411 = scmp.ne.s32.totalorder %s399, %s400
      %p412 = scmp.eq.s32.totalorder %s33, 1
      %p413 = por %p411, %p412
      %p415 = scmp.ne.s32.totalorder %s400, %s414
      %p416 = scmp.eq.s32.totalorder %s33, 0
      %p417 = por %p415, %p416
      %s418 = ssub.s32 %s27, %s34
      %p419 = scmp.eq.s32.totalorder %s418, 0
      %s421 = sadd.s32 %s420, 1
      %s422 = scalar_select %p419, %s420, %s421
      %p425 = pneg %p419
      %p426 = scmp.eq.s32.totalorder %s27, 1
      %p427 = por %p425, %p426
      %p428 = scmp.ne.s32.totalorder %s420, %s423
      %p429 = scmp.eq.s32.totalorder %s27, 0
      %p430 = por %p428, %p429
      %p431 = scmp.ne.s32.totalorder %s420, %s423
      %p432 = scmp.eq.s32.totalorder %s32, 1
      %p433 = por %p431, %p432
      %p434 = scmp.ne.s32.totalorder %s423, %s424
      %p435 = scmp.eq.s32.totalorder %s32, 0
      %p436 = por %p434, %p435
      %p437 = scmp.ne.s32.totalorder %s423, %s424
      %p438 = scmp.eq.s32.totalorder %s33, 1
      %p439 = por %p437, %p438
      %p441 = scmp.ne.s32.totalorder %s424, %s440
      %p442 = scmp.eq.s32.totalorder %s33, 0
      %p443 = por %p441, %p442
      %p444 = scmp.le.s32.totalorder 1, %s27
      %p445 = scmp.lt.s32.totalorder %s27, 3
      %p446 = pnand %p444, %p445
      %p447 = pneg %p446
      // Predicated region
      $region9: #{agent_encoder_forward.1} parent=5 // pred_check
        _
      $region10: #{agent_encoder_forward.1} parent=5 // pred_check_branch
        %449 = sbr.rel (%p446) target = $region12
      $region11: #{agent_encoder_forward.1} parent=5 // pred_region
        %s450 = ssub.s32 %s27, 1
        // Predicated region
        $region13: #{agent_encoder_forward.1} parent=11 // pred_check
          %p451 = pneg %p74
        $region14: #{agent_encoder_forward.1} parent=11 // pred_check_branch
          %453 = sbr.rel (%p451) target = $region16
        $region15: #{agent_encoder_forward.1} parent=11 // pred_region
          _
        $region16: #{agent_encoder_forward.1} parent=11 // pred_fallthru
          _
        // Predicated region
        $region17: #{agent_encoder_forward.1} parent=11 // pred_check
          %p454 = pneg %p95
        $region18: #{agent_encoder_forward.1} parent=11 // pred_check_branch
          %456 = sbr.rel (%p454) target = $region20
        $region19: #{agent_encoder_forward.1} parent=11 // pred_region
          _
        $region20: #{agent_encoder_forward.1} parent=11 // pred_fallthru
          _
        // Predicated region
        $region21: #{agent_encoder_forward.1} parent=11 // pred_check
          %p457 = pneg %p116
        $region22: #{agent_encoder_forward.1} parent=11 // pred_check_branch
          %459 = sbr.rel (%p457) target = $region24
        $region23: #{agent_encoder_forward.1} parent=11 // pred_region
          _
        $region24: #{agent_encoder_forward.1} parent=11 // pred_fallthru
          _
        // Predicated region
        $region25: #{agent_encoder_forward.1} parent=11 // pred_check
          %p460 = pneg %p137
        $region26: #{agent_encoder_forward.1} parent=11 // pred_check_branch
          %462 = sbr.rel (%p460) target = $region28
        $region27: #{agent_encoder_forward.1} parent=11 // pred_region
          _
        $region28: #{agent_encoder_forward.1} parent=11 // pred_fallthru
          _
        // Predicated region
        $region29: #{agent_encoder_forward.1} parent=11 // pred_check
          %p463 = pneg %p158
        $region30: #{agent_encoder_forward.1} parent=11 // pred_check_branch
          %465 = sbr.rel (%p463) target = $region32
        $region31: #{agent_encoder_forward.1} parent=11 // pred_region
          _
        $region32: #{agent_encoder_forward.1} parent=11 // pred_fallthru
          _
        // Predicated region
        $region33: #{agent_encoder_forward.1} parent=11 // pred_check
          %p466 = pneg %p179
        $region34: #{agent_encoder_forward.1} parent=11 // pred_check_branch
          %468 = sbr.rel (%p466) target = $region36
        $region35: #{agent_encoder_forward.1} parent=11 // pred_region
          _
        $region36: #{agent_encoder_forward.1} parent=11 // pred_fallthru
          _
        // Predicated region
        $region37: #{agent_encoder_forward.1} parent=11 // pred_check
          %p469 = pneg %p200
        $region38: #{agent_encoder_forward.1} parent=11 // pred_check_branch
          %471 = sbr.rel (%p469) target = $region40
        $region39: #{agent_encoder_forward.1} parent=11 // pred_region
          _
        $region40: #{agent_encoder_forward.1} parent=11 // pred_fallthru
          _
        // Predicated region
        $region41: #{agent_encoder_forward.1} parent=11 // pred_check
          %p472 = pneg %p221
        $region42: #{agent_encoder_forward.1} parent=11 // pred_check_branch
          %474 = sbr.rel (%p472) target = $region44
        $region43: #{agent_encoder_forward.1} parent=11 // pred_region
          _
        $region44: #{agent_encoder_forward.1} parent=11 // pred_fallthru
          _
        // Predicated region
        $region45: #{agent_encoder_forward.1} parent=11 // pred_check
          %p475 = pneg %p242
        $region46: #{agent_encoder_forward.1} parent=11 // pred_check_branch
          %477 = sbr.rel (%p475) target = $region48
        $region47: #{agent_encoder_forward.1} parent=11 // pred_region
          _
        $region48: #{agent_encoder_forward.1} parent=11 // pred_fallthru
          _
        // Predicated region
        $region49: #{agent_encoder_forward.1} parent=11 // pred_check
          %p478 = pneg %p263
        $region50: #{agent_encoder_forward.1} parent=11 // pred_check_branch
          %480 = sbr.rel (%p478) target = $region52
        $region51: #{agent_encoder_forward.1} parent=11 // pred_region
          _
        $region52: #{agent_encoder_forward.1} parent=11 // pred_fallthru
          _
        // Predicated region
        $region53: #{agent_encoder_forward.1} parent=11 // pred_check
          %p481 = pneg %p284
        $region54: #{agent_encoder_forward.1} parent=11 // pred_check_branch
          %483 = sbr.rel (%p481) target = $region56
        $region55: #{agent_encoder_forward.1} parent=11 // pred_region
          _
        $region56: #{agent_encoder_forward.1} parent=11 // pred_fallthru
          _
        // Predicated region
        $region57: #{agent_encoder_forward.1} parent=11 // pred_check
          %p484 = pneg %p305
        $region58: #{agent_encoder_forward.1} parent=11 // pred_check_branch
          %486 = sbr.rel (%p484) target = $region60
        $region59: #{agent_encoder_forward.1} parent=11 // pred_region
          _
        $region60: #{agent_encoder_forward.1} parent=11 // pred_fallthru
          _
        // Predicated region
        $region61: #{agent_encoder_forward.1} parent=11 // pred_check
          %p487 = pneg %p326
        $region62: #{agent_encoder_forward.1} parent=11 // pred_check_branch
          %489 = sbr.rel (%p487) target = $region64
        $region63: #{agent_encoder_forward.1} parent=11 // pred_region
          _
        $region64: #{agent_encoder_forward.1} parent=11 // pred_fallthru
          _
        // Predicated region
        $region65: #{agent_encoder_forward.1} parent=11 // pred_check
          %p490 = pneg %p347
        $region66: #{agent_encoder_forward.1} parent=11 // pred_check_branch
          %492 = sbr.rel (%p490) target = $region68
        $region67: #{agent_encoder_forward.1} parent=11 // pred_region
          _
        $region68: #{agent_encoder_forward.1} parent=11 // pred_fallthru
          _
        // Predicated region
        $region69: #{agent_encoder_forward.1} parent=11 // pred_check
          %p493 = pneg %p368
        $region70: #{agent_encoder_forward.1} parent=11 // pred_check_branch
          %495 = sbr.rel (%p493) target = $region72
        $region71: #{agent_encoder_forward.1} parent=11 // pred_region
          _
        $region72: #{agent_encoder_forward.1} parent=11 // pred_fallthru
          _
        // Predicated region
        $region73: #{agent_encoder_forward.1} parent=11 // pred_check
          %p496 = pneg %p389
        $region74: #{agent_encoder_forward.1} parent=11 // pred_check_branch
          %498 = sbr.rel (%p496) target = $region76
        $region75: #{agent_encoder_forward.1} parent=11 // pred_region
          _
        $region76: #{agent_encoder_forward.1} parent=11 // pred_fallthru
          _
        // Predicated region
        $region77: #{agent_encoder_forward.1} parent=11 // pred_check
          %p499 = pneg %p410
        $region78: #{agent_encoder_forward.1} parent=11 // pred_check_branch
          %501 = sbr.rel (%p499) target = $region80
        $region79: #{agent_encoder_forward.1} parent=11 // pred_region
          _
        $region80: #{agent_encoder_forward.1} parent=11 // pred_fallthru
          _
      $region12: #{agent_encoder_forward.1} parent=5 // pred_fallthru
        _
      %p502 = scmp.lt.s32.totalorder %s27, 2
      // Predicated region
      $region81: #{agent_encoder_forward.1} parent=5 // pred_check
        %p503 = pneg %p502
      $region82: #{agent_encoder_forward.1} parent=5 // pred_check_branch
        %505 = sbr.rel (%p503) target = $region84
      $region83: #{agent_encoder_forward.1} parent=5 // pred_region
        // Predicated region
        $region85: #{agent_encoder_forward.1} parent=83 // pred_check
          %p506 = pneg %p47
        $region86: #{agent_encoder_forward.1} parent=83 // pred_check_branch
          %508 = sbr.rel (%p506) target = $region88
        $region87: #{agent_encoder_forward.1} parent=83 // pred_region
          %s509 = smul.u32 16, %s27
          %p510 = scmp.lt.s32.totalorder %s509, 31
          %s511 = scalar_select %p510, %s509, 31
          %s512 = smul.addr %s511, 4
          %s513 = smul.addr %s512, 4
          %s514 = scalar_lea.vmem %s0, %s513
          %s515 = smul.u32 16, %s27
        $region88: #{agent_encoder_forward.1} parent=83 // pred_fallthru
          _
      $region84: #{agent_encoder_forward.1} parent=5 // pred_fallthru
        _
      %p516 = scmp.le.s32.totalorder 1, %s27
      %p517 = scmp.lt.s32.totalorder %s27, 3
      %p518 = pnand %p516, %p517
      %p519 = pneg %p518
      // Predicated region
      $region89: #{agent_encoder_forward.1} parent=5 // pred_check
        _
      $region90: #{agent_encoder_forward.1} parent=5 // pred_check_branch
        %521 = sbr.rel (%p518) target = $region92
      $region91: #{agent_encoder_forward.1} parent=5 // pred_region
        %s522 = ssub.s32 %s27, 1
        %s523 = smul.u32 16, %s32
        %p524 = scmp.lt.s32.totalorder %s523, 31
        %s525 = scalar_select %p524, %s523, 31
        %s526 = smul.addr %s525, 4
        %s527 = smul.addr %s526, 4
        %s528 = scalar_lea.vmem %s0, %s527
        %p529 = pneg %p53
        %p530 = pneg %p50
        %p531 = pneg %p74
        %p532 = pneg %p71
        %p533 = pneg %p95
        %p534 = pneg %p92
        %p535 = pneg %p116
        %p536 = pneg %p113
        %p537 = pneg %p137
        %p538 = pneg %p134
        %p539 = pneg %p158
        %p540 = pneg %p155
        %p541 = pneg %p179
        %p542 = pneg %p176
        %p543 = pneg %p200
        %p544 = pneg %p197
        %p545 = pneg %p221
        %p546 = pneg %p218
        %p547 = pneg %p242
        %p548 = pneg %p239
        %p549 = pneg %p263
        %p550 = pneg %p260
        %p551 = pneg %p284
        %p552 = pneg %p281
        %p553 = pneg %p305
        %p554 = pneg %p302
        %p555 = pneg %p326
        %p556 = pneg %p323
        %p557 = pneg %p347
        %p558 = pneg %p344
        %p559 = pneg %p368
        %p560 = pneg %p365
        %p561 = pneg %p389
        %p562 = pneg %p386
        %p563 = pneg %p410
        %p564 = pneg %p407
        %p565 = pneg %p436
        %p566 = pneg %p433
        %s567 = sand.u32 %s423, 1
        %s568 = scalar_lea.sflag [#allocation3], %s567
        %s569 = sand.u32 %s423, 1
        %s570 = smul.addr %s569, 128
        %s571 = scalar_lea.vmem [#allocation2], %s570
        %s572 = smul.u32 16, %s32
        %p573 = scmp.lt.s32.totalorder %s572, 31
        %s574 = scalar_select %p573, %s572, 31
        %s575 = smul.addr %s574, 4
        %s576 = smul.addr %s575, 4
        %s577 = scalar_lea.vmem %s0, %s576
        %s578 = smul.u32 16, %s32
        %s579 = smul.u32 16, %s32
        %v581 = vld [vmem:[%s577] sm:$0xff]
        %v582 = vld [vmem:[%s577 + $0x8] sm:$0xff]
        %v583 = vld [vmem:[%s577 + $0x10] sm:$0xff]
        %v584 = vld [vmem:[%s577 + $0x18] sm:$0xff]
        %v585 = vld [vmem:[%s577 + $0x20] sm:$0xff]
        %v586 = vld [vmem:[%s577 + $0x28] sm:$0xff]
        %v587 = vld [vmem:[%s577 + $0x30] sm:$0xff]
        %v588 = vld [vmem:[%s577 + $0x38] sm:$0xff]
        %v589 = vld [vmem:[%s577 + $0x40] sm:$0xff]
        %v590 = vld [vmem:[%s577 + $0x48] sm:$0xff]
        %v591 = vld [vmem:[%s577 + $0x50] sm:$0xff]
        %v592 = vld [vmem:[%s577 + $0x58] sm:$0xff]
        %v593 = vld [vmem:[%s577 + $0x60] sm:$0xff]
        %v594 = vld [vmem:[%s577 + $0x68] sm:$0xff]
        %v595 = vld [vmem:[%s577 + $0x70] sm:$0xff]
        %v596 = vld [vmem:[%s577 + $0x78] sm:$0xff]
        %v597 = vld [vmem:[%s577 + $0x80] sm:$0xff]
        %v598 = vld [vmem:[%s577 + $0x88] sm:$0xff]
        %v599 = vld [vmem:[%s577 + $0x90] sm:$0xff]
        %v600 = vld [vmem:[%s577 + $0x98] sm:$0xff]
        %v601 = vld [vmem:[%s577 + $0xa0] sm:$0xff]
        %v602 = vld [vmem:[%s577 + $0xa8] sm:$0xff]
        %v603 = vld [vmem:[%s577 + $0xb0] sm:$0xff]
        %v604 = vld [vmem:[%s577 + $0xb8] sm:$0xff]
        %v605 = vld [vmem:[%s577 + $0xc0] sm:$0xff]
        %v606 = vld [vmem:[%s577 + $0xc8] sm:$0xff]
        %v607 = vld [vmem:[%s577 + $0xd0] sm:$0xff]
        %v608 = vld [vmem:[%s577 + $0xd8] sm:$0xff]
        %v609 = vld [vmem:[%s577 + $0xe0] sm:$0xff]
        %v610 = vld [vmem:[%s577 + $0xe8] sm:$0xff]
        %v611 = vld [vmem:[%s577 + $0xf0] sm:$0xff]
        %v612 = vld [vmem:[%s577 + $0xf8] sm:$0xff]
        %v613 = vld [vmem:[%s1] sm:$0xff]
        %v614 = vld [vmem:[%s1 + $0x8] sm:$0xff]
        %v615 = vld [vmem:[%s1 + $0x10] sm:$0xf]
        %v616 = vld [vmem:[%s1 + $0x14] sm:$0xff]
        %v617 = vld [vmem:[%s1 + $0x1c] sm:$0xff]
        %v618 = vld [vmem:[%s1 + $0x24] sm:$0xf]
        %v619 = vld [vmem:[%s1 + $0x28] sm:$0xff]
        %v620 = vld [vmem:[%s1 + $0x30] sm:$0xff]
        %v621 = vld [vmem:[%s1 + $0x38] sm:$0xf]
        %v622 = vld [vmem:[%s1 + $0x3c] sm:$0xff]
        %v623 = vld [vmem:[%s1 + $0x44] sm:$0xff]
        %v624 = vld [vmem:[%s1 + $0x4c] sm:$0xf]
        %v625 = vld [vmem:[%s1 + $0x50] sm:$0xff]
        %v626 = vld [vmem:[%s1 + $0x58] sm:$0xff]
        %v627 = vld [vmem:[%s1 + $0x60] sm:$0xf]
        %v628 = vld [vmem:[%s1 + $0x64] sm:$0xff]
        %v629 = vld [vmem:[%s1 + $0x6c] sm:$0xff]
        %v630 = vld [vmem:[%s1 + $0x74] sm:$0xf]
        %v631 = vld [vmem:[%s1 + $0x78] sm:$0xff]
        %v632 = vld [vmem:[%s1 + $0x80] sm:$0xff]
        %v633 = vld [vmem:[%s1 + $0x88] sm:$0xf]
        %v634 = vld [vmem:[%s1 + $0x8c] sm:$0xff]
        %v635 = vld [vmem:[%s1 + $0x94] sm:$0xff]
        %v636 = vld [vmem:[%s1 + $0x9c] sm:$0xf]
        %v637 = vld [vmem:[%s1 + $0xa0] sm:$0xff]
        %v638 = vld [vmem:[%s1 + $0xa8] sm:$0xff]
        %v639 = vld [vmem:[%s1 + $0xb0] sm:$0xf]
        %v640 = vld [vmem:[%s1 + $0xb4] sm:$0xff]
        %v641 = vld [vmem:[%s1 + $0xbc] sm:$0xff]
        %v642 = vld [vmem:[%s1 + $0xc4] sm:$0xf]
        %v643 = vld [vmem:[%s1 + $0xc8] sm:$0xff]
        %v644 = vld [vmem:[%s1 + $0xd0] sm:$0xff]
        %v645 = vld [vmem:[%s1 + $0xd8] sm:$0xf]
        %v646 = vld [vmem:[%s1 + $0xdc] sm:$0xff]
        %v647 = vld [vmem:[%s1 + $0xe4] sm:$0xff]
        %v648 = vld [vmem:[%s1 + $0xec] sm:$0xf]
        %v649 = vld [vmem:[%s1 + $0xf0] sm:$0xff]
        %v650 = vld [vmem:[%s1 + $0xf8] sm:$0xff]
        %v651 = vld [vmem:[%s1 + $0x100] sm:$0xf]
        %v652 = vld [vmem:[%s1 + $0x104] sm:$0xff]
        %v653 = vld [vmem:[%s1 + $0x10c] sm:$0xff]
        %v654 = vld [vmem:[%s1 + $0x114] sm:$0xf]
        %v655 = vld [vmem:[%s1 + $0x118] sm:$0xff]
        %v656 = vld [vmem:[%s1 + $0x120] sm:$0xff]
        %v657 = vld [vmem:[%s1 + $0x128] sm:$0xf]
        %v658 = vld [vmem:[%s1 + $0x12c] sm:$0xff]
        %v659 = vld [vmem:[%s1 + $0x134] sm:$0xff]
        %v660 = vld [vmem:[%s1 + $0x13c] sm:$0xf]
        %v661 = vld [vmem:[%s1 + $0x140] sm:$0xff]
        %v662 = vld [vmem:[%s1 + $0x148] sm:$0xff]
        %v663 = vld [vmem:[%s1 + $0x150] sm:$0xf]
        %v664 = vld [vmem:[%s1 + $0x154] sm:$0xff]
        %v665 = vld [vmem:[%s1 + $0x15c] sm:$0xff]
        %v666 = vld [vmem:[%s1 + $0x164] sm:$0xf]
        %v667 = vld [vmem:[%s1 + $0x168] sm:$0xff]
        %v668 = vld [vmem:[%s1 + $0x170] sm:$0xff]
        %v669 = vld [vmem:[%s1 + $0x178] sm:$0xf]
        %v670 = vld [vmem:[%s1 + $0x17c] sm:$0xff]
        %v671 = vld [vmem:[%s1 + $0x184] sm:$0xff]
        %v672 = vld [vmem:[%s1 + $0x18c] sm:$0xf]
        %v673 = vld [vmem:[%s1 + $0x190] sm:$0xff]
        %v674 = vld [vmem:[%s1 + $0x198] sm:$0xff]
        %v675 = vld [vmem:[%s1 + $0x1a0] sm:$0xf]
        %v676 = vld [vmem:[%s1 + $0x1a4] sm:$0xff]
        %v677 = vld [vmem:[%s1 + $0x1ac] sm:$0xff]
        %v678 = vld [vmem:[%s1 + $0x1b4] sm:$0xf]
        %v679 = vld [vmem:[%s1 + $0x1b8] sm:$0xff]
        %v680 = vld [vmem:[%s1 + $0x1c0] sm:$0xff]
        %v681 = vld [vmem:[%s1 + $0x1c8] sm:$0xf]
        %v682 = vld [vmem:[%s1 + $0x1cc] sm:$0xff]
        %v683 = vld [vmem:[%s1 + $0x1d4] sm:$0xff]
        %v684 = vld [vmem:[%s1 + $0x1dc] sm:$0xf]
        %v685 = vld [vmem:[%s1 + $0x1e0] sm:$0xff]
        %v686 = vld [vmem:[%s1 + $0x1e8] sm:$0xff]
        %v687 = vld [vmem:[%s1 + $0x1f0] sm:$0xf]
        %v688 = vld [vmem:[%s1 + $0x1f4] sm:$0xff]
        %v689 = vld [vmem:[%s1 + $0x1fc] sm:$0xff]
        %v690 = vld [vmem:[%s1 + $0x204] sm:$0xf]
        %v691 = vld [vmem:[%s1 + $0x208] sm:$0xff]
        %v692 = vld [vmem:[%s1 + $0x210] sm:$0xff]
        %v693 = vld [vmem:[%s1 + $0x218] sm:$0xf]
        %v694 = vld [vmem:[%s1 + $0x21c] sm:$0xff]
        %v695 = vld [vmem:[%s1 + $0x224] sm:$0xff]
        %v696 = vld [vmem:[%s1 + $0x22c] sm:$0xf]
        %v697 = vld [vmem:[%s1 + $0x230] sm:$0xff]
        %v698 = vld [vmem:[%s1 + $0x238] sm:$0xff]
        %v699 = vld [vmem:[%s1 + $0x240] sm:$0xf]
        %v700 = vld [vmem:[%s1 + $0x244] sm:$0xff]
        %v701 = vld [vmem:[%s1 + $0x24c] sm:$0xff]
        %v702 = vld [vmem:[%s1 + $0x254] sm:$0xf]
        %v703 = vld [vmem:[%s1 + $0x258] sm:$0xff]
        %v704 = vld [vmem:[%s1 + $0x260] sm:$0xff]
        %v705 = vld [vmem:[%s1 + $0x268] sm:$0xf]
        %v706 = vld [vmem:[%s1 + $0x26c] sm:$0xff]
        %v707 = vld [vmem:[%s1 + $0x274] sm:$0xff]
        %v708 = vld [vmem:[%s1 + $0x27c] sm:$0xf]
        %v709 = vld [vmem:[%s1 + $0x280] sm:$0xff]
        %v710 = vld [vmem:[%s1 + $0x288] sm:$0xff]
        %v711 = vld [vmem:[%s1 + $0x290] sm:$0xf]
        %v712 = vld [vmem:[%s1 + $0x294] sm:$0xff]
        %v713 = vld [vmem:[%s1 + $0x29c] sm:$0xff]
        %v714 = vld [vmem:[%s1 + $0x2a4] sm:$0xf]
        %v715 = vld [vmem:[%s1 + $0x2a8] sm:$0xff]
        %v716 = vld [vmem:[%s1 + $0x2b0] sm:$0xff]
        %v717 = vld [vmem:[%s1 + $0x2b8] sm:$0xf]
        %v718 = vld [vmem:[%s1 + $0x2bc] sm:$0xff]
        %v719 = vld [vmem:[%s1 + $0x2c4] sm:$0xff]
        %v720 = vld [vmem:[%s1 + $0x2cc] sm:$0xf]
        %v721 = vld [vmem:[%s1 + $0x2d0] sm:$0xff]
        %v722 = vld [vmem:[%s1 + $0x2d8] sm:$0xff]
        %v723 = vld [vmem:[%s1 + $0x2e0] sm:$0xf]
        %v724 = vld [vmem:[%s1 + $0x2e4] sm:$0xff]
        %v725 = vld [vmem:[%s1 + $0x2ec] sm:$0xff]
        %v726 = vld [vmem:[%s1 + $0x2f4] sm:$0xf]
        %v727 = vld [vmem:[%s1 + $0x2f8] sm:$0xff]
        %v728 = vld [vmem:[%s1 + $0x300] sm:$0xff]
        %v729 = vld [vmem:[%s1 + $0x308] sm:$0xf]
        %v730 = vld [vmem:[%s1 + $0x30c] sm:$0xff]
        %v731 = vld [vmem:[%s1 + $0x314] sm:$0xff]
        %v732 = vld [vmem:[%s1 + $0x31c] sm:$0xf]
        %v733 = vld [vmem:[%s1 + $0x320] sm:$0xff]
        %v734 = vld [vmem:[%s1 + $0x328] sm:$0xff]
        %v735 = vld [vmem:[%s1 + $0x330] sm:$0xf]
        %v736 = vld [vmem:[%s1 + $0x334] sm:$0xff]
        %v737 = vld [vmem:[%s1 + $0x33c] sm:$0xff]
        %v738 = vld [vmem:[%s1 + $0x344] sm:$0xf]
        %v739 = vld [vmem:[%s1 + $0x348] sm:$0xff]
        %v740 = vld [vmem:[%s1 + $0x350] sm:$0xff]
        %v741 = vld [vmem:[%s1 + $0x358] sm:$0xf]
        %v742 = vld [vmem:[%s1 + $0x35c] sm:$0xff]
        %v743 = vld [vmem:[%s1 + $0x364] sm:$0xff]
        %v744 = vld [vmem:[%s1 + $0x36c] sm:$0xf]
        %v745 = vld [vmem:[%s1 + $0x370] sm:$0xff]
        %v746 = vld [vmem:[%s1 + $0x378] sm:$0xff]
        %v747 = vld [vmem:[%s1 + $0x380] sm:$0xf]
        %v748 = vld [vmem:[%s1 + $0x384] sm:$0xff]
        %v749 = vld [vmem:[%s1 + $0x38c] sm:$0xff]
        %v750 = vld [vmem:[%s1 + $0x394] sm:$0xf]
        %v751 = vld [vmem:[%s1 + $0x398] sm:$0xff]
        %v752 = vld [vmem:[%s1 + $0x3a0] sm:$0xff]
        %v753 = vld [vmem:[%s1 + $0x3a8] sm:$0xf]
        %v754 = vld [vmem:[%s1 + $0x3ac] sm:$0xff]
        %v755 = vld [vmem:[%s1 + $0x3b4] sm:$0xff]
        %v756 = vld [vmem:[%s1 + $0x3bc] sm:$0xf]
        %v757 = vld [vmem:[%s1 + $0x3c0] sm:$0xff]
        %v758 = vld [vmem:[%s1 + $0x3c8] sm:$0xff]
        %v759 = vld [vmem:[%s1 + $0x3d0] sm:$0xf]
        %v760 = vld [vmem:[%s1 + $0x3d4] sm:$0xff]
        %v761 = vld [vmem:[%s1 + $0x3dc] sm:$0xff]
        %v762 = vld [vmem:[%s1 + $0x3e4] sm:$0xf]
        %v763 = vld [vmem:[%s1 + $0x3e8] sm:$0xff]
        %v764 = vld [vmem:[%s1 + $0x3f0] sm:$0xff]
        %v765 = vld [vmem:[%s1 + $0x3f8] sm:$0xf]
        %v766 = vld [vmem:[%s1 + $0x3fc] sm:$0xff]
        %v767 = vld [vmem:[%s1 + $0x404] sm:$0xff]
        %v768 = vld [vmem:[%s1 + $0x40c] sm:$0xf]
        %v769 = vld [vmem:[%s1 + $0x410] sm:$0xff]
        %v770 = vld [vmem:[%s1 + $0x418] sm:$0xff]
        %v771 = vld [vmem:[%s1 + $0x420] sm:$0xf]
        %v772 = vld [vmem:[%s1 + $0x424] sm:$0xff]
        %v773 = vld [vmem:[%s1 + $0x42c] sm:$0xff]
        %v774 = vld [vmem:[%s1 + $0x434] sm:$0xf]
        %v775 = vld [vmem:[%s1 + $0x438] sm:$0xff]
        %v776 = vld [vmem:[%s1 + $0x440] sm:$0xff]
        %v777 = vld [vmem:[%s1 + $0x448] sm:$0xf]
        %v778 = vld [vmem:[%s1 + $0x44c] sm:$0xff]
        %v779 = vld [vmem:[%s1 + $0x454] sm:$0xff]
        %v780 = vld [vmem:[%s1 + $0x45c] sm:$0xf]
        %v781 = vld [vmem:[%s1 + $0x460] sm:$0xff]
        %v782 = vld [vmem:[%s1 + $0x468] sm:$0xff]
        %v783 = vld [vmem:[%s1 + $0x470] sm:$0xf]
        %v784 = vld [vmem:[%s1 + $0x474] sm:$0xff]
        %v785 = vld [vmem:[%s1 + $0x47c] sm:$0xff]
        %v786 = vld [vmem:[%s1 + $0x484] sm:$0xf]
        %v787 = vld [vmem:[%s1 + $0x488] sm:$0xff]
        %v788 = vld [vmem:[%s1 + $0x490] sm:$0xff]
        %v789 = vld [vmem:[%s1 + $0x498] sm:$0xf]
        %v790 = vld [vmem:[%s1 + $0x49c] sm:$0xff]
        %v791 = vld [vmem:[%s1 + $0x4a4] sm:$0xff]
        %v792 = vld [vmem:[%s1 + $0x4ac] sm:$0xf]
        %v793 = vld [vmem:[%s1 + $0x4b0] sm:$0xff]
        %v794 = vld [vmem:[%s1 + $0x4b8] sm:$0xff]
        %v795 = vld [vmem:[%s1 + $0x4c0] sm:$0xf]
        %v796 = vld [vmem:[%s1 + $0x4c4] sm:$0xff]
        %v797 = vld [vmem:[%s1 + $0x4cc] sm:$0xff]
        %v798 = vld [vmem:[%s1 + $0x4d4] sm:$0xf]
        %v799 = vld [vmem:[%s1 + $0x4d8] sm:$0xff]
        %v800 = vld [vmem:[%s1 + $0x4e0] sm:$0xff]
        %v801 = vld [vmem:[%s1 + $0x4e8] sm:$0xf]
        %v802 = vld [vmem:[%s1 + $0x4ec] sm:$0xff]
        %v803 = vld [vmem:[%s1 + $0x4f4] sm:$0xff]
        %v804 = vld [vmem:[%s1 + $0x4fc] sm:$0xf]
        %v805 = vld [vmem:[%s2] sm:$0x1f]
        %v807 = vlaneseq
        %v808 = vshrl.u32 %v807, 7
        %v809 = vsub.s32 0, %v808
        %v810 = vrot.slane %v805, %v809
        %v811 = vlaneseq
        %v812 = vshrl.u32 %v811, 7
        %v813 = vsub.s32 1, %v812
        %v814 = vrot.slane %v805, %v813
        %v815 = vlaneseq
        %v816 = vshrl.u32 %v815, 7
        %v817 = vsub.s32 2, %v816
        %v818 = vrot.slane %v805, %v817
        %v819 = vlaneseq
        %v820 = vshrl.u32 %v819, 7
        %v821 = vsub.s32 3, %v820
        %v822 = vrot.slane %v805, %v821
        %v823 = vlaneseq
        %v824 = vshrl.u32 %v823, 7
        %v825 = vsub.s32 4, %v824
        %v826 = vrot.slane %v805, %v825
        %v864 = vunpack.c.l.b16 %v581
        %v865 = vunpack.c.h.b16 %v581
        %v866 = vunpack.c.l.b16 %v582
        %v867 = vunpack.c.h.b16 %v582
        %v868 = vunpack.c.l.b16 %v583
        %v869 = vunpack.c.h.b16 %v583
        %v870 = vunpack.c.l.b16 %v584
        %v871 = vunpack.c.h.b16 %v584
        %v872 = vunpack.c.l.b16 %v585
        %v873 = vunpack.c.h.b16 %v585
        %v874 = vunpack.c.l.b16 %v586
        %v875 = vunpack.c.h.b16 %v586
        %v876 = vunpack.c.l.b16 %v587
        %v877 = vunpack.c.h.b16 %v587
        %v878 = vunpack.c.l.b16 %v588
        %v879 = vunpack.c.h.b16 %v588
        %v880 = vunpack.c.l.b16 %v589
        %v881 = vunpack.c.h.b16 %v589
        %v882 = vunpack.c.l.b16 %v590
        %v883 = vunpack.c.h.b16 %v590
        %v884 = vunpack.c.l.b16 %v591
        %v885 = vunpack.c.h.b16 %v591
        %v886 = vunpack.c.l.b16 %v592
        %v887 = vunpack.c.h.b16 %v592
        %v888 = vunpack.c.l.b16 %v593
        %v889 = vunpack.c.h.b16 %v593
        %v890 = vunpack.c.l.b16 %v594
        %v891 = vunpack.c.h.b16 %v594
        %v892 = vunpack.c.l.b16 %v595
        %v893 = vunpack.c.h.b16 %v595
        %v894 = vunpack.c.l.b16 %v596
        %v895 = vunpack.c.h.b16 %v596
        %v896 = vunpack.c.l.b16 %v597
        %v897 = vunpack.c.h.b16 %v597
        %v898 = vunpack.c.l.b16 %v598
        %v899 = vunpack.c.h.b16 %v598
        %v900 = vunpack.c.l.b16 %v599
        %v901 = vunpack.c.h.b16 %v599
        %v902 = vunpack.c.l.b16 %v600
        %v903 = vunpack.c.h.b16 %v600
        %v904 = vunpack.c.l.b16 %v601
        %v905 = vunpack.c.h.b16 %v601
        %v906 = vunpack.c.l.b16 %v602
        %v907 = vunpack.c.h.b16 %v602
        %v908 = vunpack.c.l.b16 %v603
        %v909 = vunpack.c.h.b16 %v603
        %v910 = vunpack.c.l.b16 %v604
        %v911 = vunpack.c.h.b16 %v604
        %v912 = vunpack.c.l.b16 %v605
        %v913 = vunpack.c.h.b16 %v605
        %v914 = vunpack.c.l.b16 %v606
        %v915 = vunpack.c.h.b16 %v606
        %v916 = vunpack.c.l.b16 %v607
        %v917 = vunpack.c.h.b16 %v607
        %v918 = vunpack.c.l.b16 %v608
        %v919 = vunpack.c.h.b16 %v608
        %v920 = vunpack.c.l.b16 %v609
        %v921 = vunpack.c.h.b16 %v609
        %v922 = vunpack.c.l.b16 %v610
        %v923 = vunpack.c.h.b16 %v610
        %v924 = vunpack.c.l.b16 %v611
        %v925 = vunpack.c.h.b16 %v611
        %v926 = vunpack.c.l.b16 %v612
        %v927 = vunpack.c.h.b16 %v612
        %v928 = vpack.c.b16 %v868, %v864
        %v929 = vpack.c.b16 %v869, %v865
        %v930 = vpack.c.b16 %v870, %v866
        %v931 = vpack.c.b16 %v871, %v867
        %v932 = vpack.c.b16 %v876, %v872
        %v933 = vpack.c.b16 %v877, %v873
        %v934 = vpack.c.b16 %v878, %v874
        %v935 = vpack.c.b16 %v879, %v875
        %v936 = vpack.c.b16 %v884, %v880
        %v937 = vpack.c.b16 %v885, %v881
        %v938 = vpack.c.b16 %v886, %v882
        %v939 = vpack.c.b16 %v887, %v883
        %v940 = vpack.c.b16 %v892, %v888
        %v941 = vpack.c.b16 %v893, %v889
        %v942 = vpack.c.b16 %v894, %v890
        %v943 = vpack.c.b16 %v895, %v891
        %v944 = vpack.c.b16 %v900, %v896
        %v945 = vpack.c.b16 %v901, %v897
        %v946 = vpack.c.b16 %v902, %v898
        %v947 = vpack.c.b16 %v903, %v899
        %v948 = vpack.c.b16 %v908, %v904
        %v949 = vpack.c.b16 %v909, %v905
        %v950 = vpack.c.b16 %v910, %v906
        %v951 = vpack.c.b16 %v911, %v907
        %v952 = vpack.c.b16 %v916, %v912
        %v953 = vpack.c.b16 %v917, %v913
        %v954 = vpack.c.b16 %v918, %v914
        %v955 = vpack.c.b16 %v919, %v915
        %v956 = vpack.c.b16 %v924, %v920
        %v957 = vpack.c.b16 %v925, %v921
        %v958 = vpack.c.b16 %v926, %v922
        %v959 = vpack.c.b16 %v927, %v923
        %v1184 = vunpack.c.l.b16 %v613
        %v1185 = vunpack.c.h.b16 %v613
        %v1186 = vunpack.c.l.b16 %v614
        %v1187 = vunpack.c.h.b16 %v614
        %v1188 = vunpack.c.l.b16 %v615
        %v1189 = vunpack.c.l.b16 %v616
        %v1190 = vunpack.c.h.b16 %v616
        %v1191 = vunpack.c.l.b16 %v617
        %v1192 = vunpack.c.h.b16 %v617
        %v1193 = vunpack.c.l.b16 %v618
        %v1194 = vunpack.c.l.b16 %v619
        %v1195 = vunpack.c.h.b16 %v619
        %v1196 = vunpack.c.l.b16 %v620
        %v1197 = vunpack.c.h.b16 %v620
        %v1198 = vunpack.c.l.b16 %v621
        %v1199 = vunpack.c.l.b16 %v622
        %v1200 = vunpack.c.h.b16 %v622
        %v1201 = vunpack.c.l.b16 %v623
        %v1202 = vunpack.c.h.b16 %v623
        %v1203 = vunpack.c.l.b16 %v624
        %v1204 = vunpack.c.l.b16 %v625
        %v1205 = vunpack.c.h.b16 %v625
        %v1206 = vunpack.c.l.b16 %v626
        %v1207 = vunpack.c.h.b16 %v626
        %v1208 = vunpack.c.l.b16 %v627
        %v1209 = vunpack.c.l.b16 %v628
        %v1210 = vunpack.c.h.b16 %v628
        %v1211 = vunpack.c.l.b16 %v629
        %v1212 = vunpack.c.h.b16 %v629
        %v1213 = vunpack.c.l.b16 %v630
        %v1214 = vunpack.c.l.b16 %v631
        %v1215 = vunpack.c.h.b16 %v631
        %v1216 = vunpack.c.l.b16 %v632
        %v1217 = vunpack.c.h.b16 %v632
        %v1218 = vunpack.c.l.b16 %v633
        %v1219 = vunpack.c.l.b16 %v634
        %v1220 = vunpack.c.h.b16 %v634
        %v1221 = vunpack.c.l.b16 %v635
        %v1222 = vunpack.c.h.b16 %v635
        %v1223 = vunpack.c.l.b16 %v636
        %v1224 = vunpack.c.l.b16 %v637
        %v1225 = vunpack.c.h.b16 %v637
        %v1226 = vunpack.c.l.b16 %v638
        %v1227 = vunpack.c.h.b16 %v638
        %v1228 = vunpack.c.l.b16 %v639
        %v1229 = vunpack.c.l.b16 %v640
        %v1230 = vunpack.c.h.b16 %v640
        %v1231 = vunpack.c.l.b16 %v641
        %v1232 = vunpack.c.h.b16 %v641
        %v1233 = vunpack.c.l.b16 %v642
        %v1234 = vunpack.c.l.b16 %v643
        %v1235 = vunpack.c.h.b16 %v643
        %v1236 = vunpack.c.l.b16 %v644
        %v1237 = vunpack.c.h.b16 %v644
        %v1238 = vunpack.c.l.b16 %v645
        %v1239 = vunpack.c.l.b16 %v646
        %v1240 = vunpack.c.h.b16 %v646
        %v1241 = vunpack.c.l.b16 %v647
        %v1242 = vunpack.c.h.b16 %v647
        %v1243 = vunpack.c.l.b16 %v648
        %v1244 = vunpack.c.l.b16 %v649
        %v1245 = vunpack.c.h.b16 %v649
        %v1246 = vunpack.c.l.b16 %v650
        %v1247 = vunpack.c.h.b16 %v650
        %v1248 = vunpack.c.l.b16 %v651
        %v1249 = vunpack.c.l.b16 %v652
        %v1250 = vunpack.c.h.b16 %v652
        %v1251 = vunpack.c.l.b16 %v653
        %v1252 = vunpack.c.h.b16 %v653
        %v1253 = vunpack.c.l.b16 %v654
        %v1254 = vunpack.c.l.b16 %v655
        %v1255 = vunpack.c.h.b16 %v655
        %v1256 = vunpack.c.l.b16 %v656
        %v1257 = vunpack.c.h.b16 %v656
        %v1258 = vunpack.c.l.b16 %v657
        %v1259 = vunpack.c.l.b16 %v658
        %v1260 = vunpack.c.h.b16 %v658
        %v1261 = vunpack.c.l.b16 %v659
        %v1262 = vunpack.c.h.b16 %v659
        %v1263 = vunpack.c.l.b16 %v660
        %v1264 = vunpack.c.l.b16 %v661
        %v1265 = vunpack.c.h.b16 %v661
        %v1266 = vunpack.c.l.b16 %v662
        %v1267 = vunpack.c.h.b16 %v662
        %v1268 = vunpack.c.l.b16 %v663
        %v1269 = vunpack.c.l.b16 %v664
        %v1270 = vunpack.c.h.b16 %v664
        %v1271 = vunpack.c.l.b16 %v665
        %v1272 = vunpack.c.h.b16 %v665
        %v1273 = vunpack.c.l.b16 %v666
        %v1274 = vunpack.c.l.b16 %v667
        %v1275 = vunpack.c.h.b16 %v667
        %v1276 = vunpack.c.l.b16 %v668
        %v1277 = vunpack.c.h.b16 %v668
        %v1278 = vunpack.c.l.b16 %v669
        %v1279 = vunpack.c.l.b16 %v670
        %v1280 = vunpack.c.h.b16 %v670
        %v1281 = vunpack.c.l.b16 %v671
        %v1282 = vunpack.c.h.b16 %v671
        %v1283 = vunpack.c.l.b16 %v672
        %v1284 = vunpack.c.l.b16 %v673
        %v1285 = vunpack.c.h.b16 %v673
        %v1286 = vunpack.c.l.b16 %v674
        %v1287 = vunpack.c.h.b16 %v674
        %v1288 = vunpack.c.l.b16 %v675
        %v1289 = vunpack.c.l.b16 %v676
        %v1290 = vunpack.c.h.b16 %v676
        %v1291 = vunpack.c.l.b16 %v677
        %v1292 = vunpack.c.h.b16 %v677
        %v1293 = vunpack.c.l.b16 %v678
        %v1294 = vunpack.c.l.b16 %v679
        %v1295 = vunpack.c.h.b16 %v679
        %v1296 = vunpack.c.l.b16 %v680
        %v1297 = vunpack.c.h.b16 %v680
        %v1298 = vunpack.c.l.b16 %v681
        %v1299 = vunpack.c.l.b16 %v682
        %v1300 = vunpack.c.h.b16 %v682
        %v1301 = vunpack.c.l.b16 %v683
        %v1302 = vunpack.c.h.b16 %v683
        %v1303 = vunpack.c.l.b16 %v684
        %v1304 = vunpack.c.l.b16 %v685
        %v1305 = vunpack.c.h.b16 %v685
        %v1306 = vunpack.c.l.b16 %v686
        %v1307 = vunpack.c.h.b16 %v686
        %v1308 = vunpack.c.l.b16 %v687
        %v1309 = vunpack.c.l.b16 %v688
        %v1310 = vunpack.c.h.b16 %v688
        %v1311 = vunpack.c.l.b16 %v689
        %v1312 = vunpack.c.h.b16 %v689
        %v1313 = vunpack.c.l.b16 %v690
        %v1314 = vunpack.c.l.b16 %v691
        %v1315 = vunpack.c.h.b16 %v691
        %v1316 = vunpack.c.l.b16 %v692
        %v1317 = vunpack.c.h.b16 %v692
        %v1318 = vunpack.c.l.b16 %v693
        %v1319 = vunpack.c.l.b16 %v694
        %v1320 = vunpack.c.h.b16 %v694
        %v1321 = vunpack.c.l.b16 %v695
        %v1322 = vunpack.c.h.b16 %v695
        %v1323 = vunpack.c.l.b16 %v696
        %v1324 = vunpack.c.l.b16 %v697
        %v1325 = vunpack.c.h.b16 %v697
        %v1326 = vunpack.c.l.b16 %v698
        %v1327 = vunpack.c.h.b16 %v698
        %v1328 = vunpack.c.l.b16 %v699
        %v1329 = vunpack.c.l.b16 %v700
        %v1330 = vunpack.c.h.b16 %v700
        %v1331 = vunpack.c.l.b16 %v701
        %v1332 = vunpack.c.h.b16 %v701
        %v1333 = vunpack.c.l.b16 %v702
        %v1334 = vunpack.c.l.b16 %v703
        %v1335 = vunpack.c.h.b16 %v703
        %v1336 = vunpack.c.l.b16 %v704
        %v1337 = vunpack.c.h.b16 %v704
        %v1338 = vunpack.c.l.b16 %v705
        %v1339 = vunpack.c.l.b16 %v706
        %v1340 = vunpack.c.h.b16 %v706
        %v1341 = vunpack.c.l.b16 %v707
        %v1342 = vunpack.c.h.b16 %v707
        %v1343 = vunpack.c.l.b16 %v708
        %v1344 = vunpack.c.l.b16 %v709
        %v1345 = vunpack.c.h.b16 %v709
        %v1346 = vunpack.c.l.b16 %v710
        %v1347 = vunpack.c.h.b16 %v710
        %v1348 = vunpack.c.l.b16 %v711
        %v1349 = vunpack.c.l.b16 %v712
        %v1350 = vunpack.c.h.b16 %v712
        %v1351 = vunpack.c.l.b16 %v713
        %v1352 = vunpack.c.h.b16 %v713
        %v1353 = vunpack.c.l.b16 %v714
        %v1354 = vunpack.c.l.b16 %v715
        %v1355 = vunpack.c.h.b16 %v715
        %v1356 = vunpack.c.l.b16 %v716
        %v1357 = vunpack.c.h.b16 %v716
        %v1358 = vunpack.c.l.b16 %v717
        %v1359 = vunpack.c.l.b16 %v718
        %v1360 = vunpack.c.h.b16 %v718
        %v1361 = vunpack.c.l.b16 %v719
        %v1362 = vunpack.c.h.b16 %v719
        %v1363 = vunpack.c.l.b16 %v720
        %v1364 = vunpack.c.l.b16 %v721
        %v1365 = vunpack.c.h.b16 %v721
        %v1366 = vunpack.c.l.b16 %v722
        %v1367 = vunpack.c.h.b16 %v722
        %v1368 = vunpack.c.l.b16 %v723
        %v1369 = vunpack.c.l.b16 %v724
        %v1370 = vunpack.c.h.b16 %v724
        %v1371 = vunpack.c.l.b16 %v725
        %v1372 = vunpack.c.h.b16 %v725
        %v1373 = vunpack.c.l.b16 %v726
        %v1374 = vunpack.c.l.b16 %v727
        %v1375 = vunpack.c.h.b16 %v727
        %v1376 = vunpack.c.l.b16 %v728
        %v1377 = vunpack.c.h.b16 %v728
        %v1378 = vunpack.c.l.b16 %v729
        %v1379 = vunpack.c.l.b16 %v730
        %v1380 = vunpack.c.h.b16 %v730
        %v1381 = vunpack.c.l.b16 %v731
        %v1382 = vunpack.c.h.b16 %v731
        %v1383 = vunpack.c.l.b16 %v732
        %v1384 = vunpack.c.l.b16 %v733
        %v1385 = vunpack.c.h.b16 %v733
        %v1386 = vunpack.c.l.b16 %v734
        %v1387 = vunpack.c.h.b16 %v734
        %v1388 = vunpack.c.l.b16 %v735
        %v1389 = vunpack.c.l.b16 %v736
        %v1390 = vunpack.c.h.b16 %v736
        %v1391 = vunpack.c.l.b16 %v737
        %v1392 = vunpack.c.h.b16 %v737
        %v1393 = vunpack.c.l.b16 %v738
        %v1394 = vunpack.c.l.b16 %v739
        %v1395 = vunpack.c.h.b16 %v739
        %v1396 = vunpack.c.l.b16 %v740
        %v1397 = vunpack.c.h.b16 %v740
        %v1398 = vunpack.c.l.b16 %v741
        %v1399 = vunpack.c.l.b16 %v742
        %v1400 = vunpack.c.h.b16 %v742
        %v1401 = vunpack.c.l.b16 %v743
        %v1402 = vunpack.c.h.b16 %v743
        %v1403 = vunpack.c.l.b16 %v744
        %v1404 = vunpack.c.l.b16 %v745
        %v1405 = vunpack.c.h.b16 %v745
        %v1406 = vunpack.c.l.b16 %v746
        %v1407 = vunpack.c.h.b16 %v746
        %v1408 = vunpack.c.l.b16 %v747
        %v1409 = vunpack.c.l.b16 %v748
        %v1410 = vunpack.c.h.b16 %v748
        %v1411 = vunpack.c.l.b16 %v749
        %v1412 = vunpack.c.h.b16 %v749
        %v1413 = vunpack.c.l.b16 %v750
        %v1414 = vunpack.c.l.b16 %v751
        %v1415 = vunpack.c.h.b16 %v751
        %v1416 = vunpack.c.l.b16 %v752
        %v1417 = vunpack.c.h.b16 %v752
        %v1418 = vunpack.c.l.b16 %v753
        %v1419 = vunpack.c.l.b16 %v754
        %v1420 = vunpack.c.h.b16 %v754
        %v1421 = vunpack.c.l.b16 %v755
        %v1422 = vunpack.c.h.b16 %v755
        %v1423 = vunpack.c.l.b16 %v756
        %v1424 = vunpack.c.l.b16 %v757
        %v1425 = vunpack.c.h.b16 %v757
        %v1426 = vunpack.c.l.b16 %v758
        %v1427 = vunpack.c.h.b16 %v758
        %v1428 = vunpack.c.l.b16 %v759
        %v1429 = vunpack.c.l.b16 %v760
        %v1430 = vunpack.c.h.b16 %v760
        %v1431 = vunpack.c.l.b16 %v761
        %v1432 = vunpack.c.h.b16 %v761
        %v1433 = vunpack.c.l.b16 %v762
        %v1434 = vunpack.c.l.b16 %v763
        %v1435 = vunpack.c.h.b16 %v763
        %v1436 = vunpack.c.l.b16 %v764
        %v1437 = vunpack.c.h.b16 %v764
        %v1438 = vunpack.c.l.b16 %v765
        %v1439 = vunpack.c.l.b16 %v766
        %v1440 = vunpack.c.h.b16 %v766
        %v1441 = vunpack.c.l.b16 %v767
        %v1442 = vunpack.c.h.b16 %v767
        %v1443 = vunpack.c.l.b16 %v768
        %v1444 = vunpack.c.l.b16 %v769
        %v1445 = vunpack.c.h.b16 %v769
        %v1446 = vunpack.c.l.b16 %v770
        %v1447 = vunpack.c.h.b16 %v770
        %v1448 = vunpack.c.l.b16 %v771
        %v1449 = vunpack.c.l.b16 %v772
        %v1450 = vunpack.c.h.b16 %v772
        %v1451 = vunpack.c.l.b16 %v773
        %v1452 = vunpack.c.h.b16 %v773
        %v1453 = vunpack.c.l.b16 %v774
        %v1454 = vunpack.c.l.b16 %v775
        %v1455 = vunpack.c.h.b16 %v775
        %v1456 = vunpack.c.l.b16 %v776
        %v1457 = vunpack.c.h.b16 %v776
        %v1458 = vunpack.c.l.b16 %v777
        %v1459 = vunpack.c.l.b16 %v778
        %v1460 = vunpack.c.h.b16 %v778
        %v1461 = vunpack.c.l.b16 %v779
        %v1462 = vunpack.c.h.b16 %v779
        %v1463 = vunpack.c.l.b16 %v780
        %v1464 = vunpack.c.l.b16 %v781
        %v1465 = vunpack.c.h.b16 %v781
        %v1466 = vunpack.c.l.b16 %v782
        %v1467 = vunpack.c.h.b16 %v782
        %v1468 = vunpack.c.l.b16 %v783
        %v1469 = vunpack.c.l.b16 %v784
        %v1470 = vunpack.c.h.b16 %v784
        %v1471 = vunpack.c.l.b16 %v785
        %v1472 = vunpack.c.h.b16 %v785
        %v1473 = vunpack.c.l.b16 %v786
        %v1474 = vunpack.c.l.b16 %v787
        %v1475 = vunpack.c.h.b16 %v787
        %v1476 = vunpack.c.l.b16 %v788
        %v1477 = vunpack.c.h.b16 %v788
        %v1478 = vunpack.c.l.b16 %v789
        %v1479 = vunpack.c.l.b16 %v790
        %v1480 = vunpack.c.h.b16 %v790
        %v1481 = vunpack.c.l.b16 %v791
        %v1482 = vunpack.c.h.b16 %v791
        %v1483 = vunpack.c.l.b16 %v792
        %v1484 = vunpack.c.l.b16 %v793
        %v1485 = vunpack.c.h.b16 %v793
        %v1486 = vunpack.c.l.b16 %v794
        %v1487 = vunpack.c.h.b16 %v794
        %v1488 = vunpack.c.l.b16 %v795
        %v1489 = vunpack.c.l.b16 %v796
        %v1490 = vunpack.c.h.b16 %v796
        %v1491 = vunpack.c.l.b16 %v797
        %v1492 = vunpack.c.h.b16 %v797
        %v1493 = vunpack.c.l.b16 %v798
        %v1494 = vunpack.c.l.b16 %v799
        %v1495 = vunpack.c.h.b16 %v799
        %v1496 = vunpack.c.l.b16 %v800
        %v1497 = vunpack.c.h.b16 %v800
        %v1498 = vunpack.c.l.b16 %v801
        %v1499 = vunpack.c.l.b16 %v802
        %v1500 = vunpack.c.h.b16 %v802
        %v1501 = vunpack.c.l.b16 %v803
        %v1502 = vunpack.c.h.b16 %v803
        %v1503 = vunpack.c.l.b16 %v804
        %v1504 = vpack.c.b16 %v1189, %v1184
        %v1505 = vpack.c.b16 %v1190, %v1185
        %v1506 = vpack.c.b16 %v1191, %v1186
        %v1507 = vpack.c.b16 %v1192, %v1187
        %v1508 = vpack.c.b16 %v1193, %v1188
        %v1509 = vpack.c.b16 %v1199, %v1194
        %v1510 = vpack.c.b16 %v1200, %v1195
        %v1511 = vpack.c.b16 %v1201, %v1196
        %v1512 = vpack.c.b16 %v1202, %v1197
        %v1513 = vpack.c.b16 %v1203, %v1198
        %v1514 = vpack.c.b16 %v1209, %v1204
        %v1515 = vpack.c.b16 %v1210, %v1205
        %v1516 = vpack.c.b16 %v1211, %v1206
        %v1517 = vpack.c.b16 %v1212, %v1207
        %v1518 = vpack.c.b16 %v1213, %v1208
        %v1519 = vpack.c.b16 %v1219, %v1214
        %v1520 = vpack.c.b16 %v1220, %v1215
        %v1521 = vpack.c.b16 %v1221, %v1216
        %v1522 = vpack.c.b16 %v1222, %v1217
        %v1523 = vpack.c.b16 %v1223, %v1218
        %v1524 = vpack.c.b16 %v1229, %v1224
        %v1525 = vpack.c.b16 %v1230, %v1225
        %v1526 = vpack.c.b16 %v1231, %v1226
        %v1527 = vpack.c.b16 %v1232, %v1227
        %v1528 = vpack.c.b16 %v1233, %v1228
        %v1529 = vpack.c.b16 %v1239, %v1234
        %v1530 = vpack.c.b16 %v1240, %v1235
        %v1531 = vpack.c.b16 %v1241, %v1236
        %v1532 = vpack.c.b16 %v1242, %v1237
        %v1533 = vpack.c.b16 %v1243, %v1238
        %v1534 = vpack.c.b16 %v1249, %v1244
        %v1535 = vpack.c.b16 %v1250, %v1245
        %v1536 = vpack.c.b16 %v1251, %v1246
        %v1537 = vpack.c.b16 %v1252, %v1247
        %v1538 = vpack.c.b16 %v1253, %v1248
        %v1539 = vpack.c.b16 %v1259, %v1254
        %v1540 = vpack.c.b16 %v1260, %v1255
        %v1541 = vpack.c.b16 %v1261, %v1256
        %v1542 = vpack.c.b16 %v1262, %v1257
        %v1543 = vpack.c.b16 %v1263, %v1258
        %v1544 = vpack.c.b16 %v1269, %v1264
        %v1545 = vpack.c.b16 %v1270, %v1265
        %v1546 = vpack.c.b16 %v1271, %v1266
        %v1547 = vpack.c.b16 %v1272, %v1267
        %v1548 = vpack.c.b16 %v1273, %v1268
        %v1549 = vpack.c.b16 %v1279, %v1274
        %v1550 = vpack.c.b16 %v1280, %v1275
        %v1551 = vpack.c.b16 %v1281, %v1276
        %v1552 = vpack.c.b16 %v1282, %v1277
        %v1553 = vpack.c.b16 %v1283, %v1278
        %v1554 = vpack.c.b16 %v1289, %v1284
        %v1555 = vpack.c.b16 %v1290, %v1285
        %v1556 = vpack.c.b16 %v1291, %v1286
        %v1557 = vpack.c.b16 %v1292, %v1287
        %v1558 = vpack.c.b16 %v1293, %v1288
        %v1559 = vpack.c.b16 %v1299, %v1294
        %v1560 = vpack.c.b16 %v1300, %v1295
        %v1561 = vpack.c.b16 %v1301, %v1296
        %v1562 = vpack.c.b16 %v1302, %v1297
        %v1563 = vpack.c.b16 %v1303, %v1298
        %v1564 = vpack.c.b16 %v1309, %v1304
        %v1565 = vpack.c.b16 %v1310, %v1305
        %v1566 = vpack.c.b16 %v1311, %v1306
        %v1567 = vpack.c.b16 %v1312, %v1307
        %v1568 = vpack.c.b16 %v1313, %v1308
        %v1569 = vpack.c.b16 %v1319, %v1314
        %v1570 = vpack.c.b16 %v1320, %v1315
        %v1571 = vpack.c.b16 %v1321, %v1316
        %v1572 = vpack.c.b16 %v1322, %v1317
        %v1573 = vpack.c.b16 %v1323, %v1318
        %v1574 = vpack.c.b16 %v1329, %v1324
        %v1575 = vpack.c.b16 %v1330, %v1325
        %v1576 = vpack.c.b16 %v1331, %v1326
        %v1577 = vpack.c.b16 %v1332, %v1327
        %v1578 = vpack.c.b16 %v1333, %v1328
        %v1579 = vpack.c.b16 %v1339, %v1334
        %v1580 = vpack.c.b16 %v1340, %v1335
        %v1581 = vpack.c.b16 %v1341, %v1336
        %v1582 = vpack.c.b16 %v1342, %v1337
        %v1583 = vpack.c.b16 %v1343, %v1338
        %v1584 = vpack.c.b16 %v1349, %v1344
        %v1585 = vpack.c.b16 %v1350, %v1345
        %v1586 = vpack.c.b16 %v1351, %v1346
        %v1587 = vpack.c.b16 %v1352, %v1347
        %v1588 = vpack.c.b16 %v1353, %v1348
        %v1589 = vpack.c.b16 %v1359, %v1354
        %v1590 = vpack.c.b16 %v1360, %v1355
        %v1591 = vpack.c.b16 %v1361, %v1356
        %v1592 = vpack.c.b16 %v1362, %v1357
        %v1593 = vpack.c.b16 %v1363, %v1358
        %v1594 = vpack.c.b16 %v1369, %v1364
        %v1595 = vpack.c.b16 %v1370, %v1365
        %v1596 = vpack.c.b16 %v1371, %v1366
        %v1597 = vpack.c.b16 %v1372, %v1367
        %v1598 = vpack.c.b16 %v1373, %v1368
        %v1599 = vpack.c.b16 %v1379, %v1374
        %v1600 = vpack.c.b16 %v1380, %v1375
        %v1601 = vpack.c.b16 %v1381, %v1376
        %v1602 = vpack.c.b16 %v1382, %v1377
        %v1603 = vpack.c.b16 %v1383, %v1378
        %v1604 = vpack.c.b16 %v1389, %v1384
        %v1605 = vpack.c.b16 %v1390, %v1385
        %v1606 = vpack.c.b16 %v1391, %v1386
        %v1607 = vpack.c.b16 %v1392, %v1387
        %v1608 = vpack.c.b16 %v1393, %v1388
        %v1609 = vpack.c.b16 %v1399, %v1394
        %v1610 = vpack.c.b16 %v1400, %v1395
        %v1611 = vpack.c.b16 %v1401, %v1396
        %v1612 = vpack.c.b16 %v1402, %v1397
        %v1613 = vpack.c.b16 %v1403, %v1398
        %v1614 = vpack.c.b16 %v1409, %v1404
        %v1615 = vpack.c.b16 %v1410, %v1405
        %v1616 = vpack.c.b16 %v1411, %v1406
        %v1617 = vpack.c.b16 %v1412, %v1407
        %v1618 = vpack.c.b16 %v1413, %v1408
        %v1619 = vpack.c.b16 %v1419, %v1414
        %v1620 = vpack.c.b16 %v1420, %v1415
        %v1621 = vpack.c.b16 %v1421, %v1416
        %v1622 = vpack.c.b16 %v1422, %v1417
        %v1623 = vpack.c.b16 %v1423, %v1418
        %v1624 = vpack.c.b16 %v1429, %v1424
        %v1625 = vpack.c.b16 %v1430, %v1425
        %v1626 = vpack.c.b16 %v1431, %v1426
        %v1627 = vpack.c.b16 %v1432, %v1427
        %v1628 = vpack.c.b16 %v1433, %v1428
        %v1629 = vpack.c.b16 %v1439, %v1434
        %v1630 = vpack.c.b16 %v1440, %v1435
        %v1631 = vpack.c.b16 %v1441, %v1436
        %v1632 = vpack.c.b16 %v1442, %v1437
        %v1633 = vpack.c.b16 %v1443, %v1438
        %v1634 = vpack.c.b16 %v1449, %v1444
        %v1635 = vpack.c.b16 %v1450, %v1445
        %v1636 = vpack.c.b16 %v1451, %v1446
        %v1637 = vpack.c.b16 %v1452, %v1447
        %v1638 = vpack.c.b16 %v1453, %v1448
        %v1639 = vpack.c.b16 %v1459, %v1454
        %v1640 = vpack.c.b16 %v1460, %v1455
        %v1641 = vpack.c.b16 %v1461, %v1456
        %v1642 = vpack.c.b16 %v1462, %v1457
        %v1643 = vpack.c.b16 %v1463, %v1458
        %v1644 = vpack.c.b16 %v1469, %v1464
        %v1645 = vpack.c.b16 %v1470, %v1465
        %v1646 = vpack.c.b16 %v1471, %v1466
        %v1647 = vpack.c.b16 %v1472, %v1467
        %v1648 = vpack.c.b16 %v1473, %v1468
        %v1649 = vpack.c.b16 %v1479, %v1474
        %v1650 = vpack.c.b16 %v1480, %v1475
        %v1651 = vpack.c.b16 %v1481, %v1476
        %v1652 = vpack.c.b16 %v1482, %v1477
        %v1653 = vpack.c.b16 %v1483, %v1478
        %v1654 = vpack.c.b16 %v1489, %v1484
        %v1655 = vpack.c.b16 %v1490, %v1485
        %v1656 = vpack.c.b16 %v1491, %v1486
        %v1657 = vpack.c.b16 %v1492, %v1487
        %v1658 = vpack.c.b16 %v1493, %v1488
        %v1659 = vpack.c.b16 %v1499, %v1494
        %v1660 = vpack.c.b16 %v1500, %v1495
        %v1661 = vpack.c.b16 %v1501, %v1496
        %v1662 = vpack.c.b16 %v1502, %v1497
        %v1663 = vpack.c.b16 %v1503, %v1498
        %1824 = vmatprep.subr.bf16.mxu0 %v1540
        %1825 = vmatpush1.bf16.msra.mxu0 %v1539
        %1826 = vmatprep.subr.bf16.mxu0 %v1535
        %1827 = vmatpush1.bf16.msra.mxu0 %v1534
        %1828 = vmatprep.subr.bf16.mxu0 %v1530
        %1829 = vmatpush1.bf16.msra.mxu0 %v1529
        %1830 = vmatprep.subr.bf16.mxu0 %v1525
        %1831 = vmatpush1.bf16.msra.mxu0 %v1524
        %1832 = vmatprep.subr.bf16.mxu0 %v1520
        %1833 = vmatpush1.bf16.msra.mxu0 %v1519
        %1834 = vmatprep.subr.bf16.mxu0 %v1515
        %1835 = vmatpush1.bf16.msra.mxu0 %v1514
        %1836 = vmatprep.subr.bf16.mxu0 %v1510
        %1837 = vmatpush1.bf16.msra.mxu0 %v1509
        %1838 = vmatprep.subr.bf16.mxu0 %v1505
        %1839 = vmatpush1.bf16.msra.mxu0 %v1504
        %1840 = vmatprep.subr.bf16.mxu0 %v1580
        %1841 = vmatpush2.bf16.msra.mxu0 %v1579
        %1842 = vmatprep.subr.bf16.mxu0 %v1575
        %1843 = vmatpush2.bf16.msra.mxu0 %v1574
        %1844 = vmatprep.subr.bf16.mxu0 %v1570
        %1845 = vmatpush2.bf16.msra.mxu0 %v1569
        %1846 = vmatprep.subr.bf16.mxu0 %v1565
        %1847 = vmatpush2.bf16.msra.mxu0 %v1564
        %1848 = vmatprep.subr.bf16.mxu0 %v1560
        %1849 = vmatpush2.bf16.msra.mxu0 %v1559
        %1850 = vmatprep.subr.bf16.mxu0 %v1555
        %1851 = vmatpush2.bf16.msra.mxu0 %v1554
        %1852 = vmatprep.subr.bf16.mxu0 %v1550
        %1853 = vmatpush2.bf16.msra.mxu0 %v1549
        %1854 = vmatprep.subr.bf16.mxu0 %v1545
        %1855 = vmatpush2.bf16.msra.mxu0 %v1544
        %1856 = vmatprep.mubr.bf16.mxu0 %v929
        %1857 = vmatmul.mubr.bf16.gmra.mxu0 %v928
        %v1858 = vpop.f32.mrf.mxu0
        %v1859 = vadd.f32 %v810, %v1858
        %v1860 = vpop.f32.mrf.mxu0
        %v1861 = vadd.f32 %v814, %v1860
        %v1862 = vpop.f32.mrf.mxu0
        %v1863 = vadd.f32 %v810, %v1862
        %v1864 = vpop.f32.mrf.mxu0
        %v1865 = vadd.f32 %v814, %v1864
        %1866 = vmatprep.mubr.bf16.mxu0 %v933
        %1867 = vmatmul.mubr.bf16.gmra.mxu0 %v932
        %v1868 = vpop.f32.mrf.mxu0
        %v1869 = vadd.f32 %v810, %v1868
        %v1870 = vpop.f32.mrf.mxu0
        %v1871 = vadd.f32 %v814, %v1870
        %v1872 = vpop.f32.mrf.mxu0
        %v1873 = vadd.f32 %v810, %v1872
        %v1874 = vpop.f32.mrf.mxu0
        %v1875 = vadd.f32 %v814, %v1874
        %1876 = vmatprep.mubr.bf16.mxu0 %v937
        %1877 = vmatmul.mubr.bf16.gmra.mxu0 %v936
        %v1878 = vpop.f32.mrf.mxu0
        %v1879 = vadd.f32 %v810, %v1878
        %v1880 = vpop.f32.mrf.mxu0
        %v1881 = vadd.f32 %v814, %v1880
        %v1882 = vpop.f32.mrf.mxu0
        %v1883 = vadd.f32 %v810, %v1882
        %v1884 = vpop.f32.mrf.mxu0
        %v1885 = vadd.f32 %v814, %v1884
        %1886 = vmatprep.mubr.bf16.mxu0 %v941
        %1887 = vmatmul.mubr.bf16.gmra.mxu0 %v940
        %v1888 = vpop.f32.mrf.mxu0
        %v1889 = vadd.f32 %v810, %v1888
        %v1890 = vpop.f32.mrf.mxu0
        %v1891 = vadd.f32 %v814, %v1890
        %v1892 = vpop.f32.mrf.mxu0
        %v1893 = vadd.f32 %v810, %v1892
        %v1894 = vpop.f32.mrf.mxu0
        %v1895 = vadd.f32 %v814, %v1894
        %1896 = vmatprep.mubr.bf16.mxu0 %v945
        %1897 = vmatmul.mubr.bf16.gmra.mxu0 %v944
        %v1898 = vpop.f32.mrf.mxu0
        %v1899 = vadd.f32 %v810, %v1898
        %v1900 = vpop.f32.mrf.mxu0
        %v1901 = vadd.f32 %v814, %v1900
        %v1902 = vpop.f32.mrf.mxu0
        %v1903 = vadd.f32 %v810, %v1902
        %v1904 = vpop.f32.mrf.mxu0
        %v1905 = vadd.f32 %v814, %v1904
        %1906 = vmatprep.mubr.bf16.mxu0 %v949
        %1907 = vmatmul.mubr.bf16.gmra.mxu0 %v948
        %v1908 = vpop.f32.mrf.mxu0
        %v1909 = vadd.f32 %v810, %v1908
        %v1910 = vpop.f32.mrf.mxu0
        %v1911 = vadd.f32 %v814, %v1910
        %v1912 = vpop.f32.mrf.mxu0
        %v1913 = vadd.f32 %v810, %v1912
        %v1914 = vpop.f32.mrf.mxu0
        %v1915 = vadd.f32 %v814, %v1914
        %1916 = vmatprep.mubr.bf16.mxu0 %v953
        %1917 = vmatmul.mubr.bf16.gmra.mxu0 %v952
        %v1918 = vpop.f32.mrf.mxu0
        %v1919 = vadd.f32 %v810, %v1918
        %v1920 = vpop.f32.mrf.mxu0
        %v1921 = vadd.f32 %v814, %v1920
        %v1922 = vpop.f32.mrf.mxu0
        %v1923 = vadd.f32 %v810, %v1922
        %v1924 = vpop.f32.mrf.mxu0
        %v1925 = vadd.f32 %v814, %v1924
        %1926 = vmatprep.mubr.bf16.mxu0 %v957
        %1927 = vmatmul.mubr.bf16.gmra.mxu0 %v956
        %v1928 = vpop.f32.mrf.mxu0
        %v1929 = vadd.f32 %v810, %v1928
        %v1930 = vpop.f32.mrf.mxu0
        %v1931 = vadd.f32 %v814, %v1930
        %v1932 = vpop.f32.mrf.mxu0
        %v1933 = vadd.f32 %v810, %v1932
        %v1934 = vpop.f32.mrf.mxu0
        %v1935 = vadd.f32 %v814, %v1934
        %1936 = vdwg.mxu0
        %1937 = vmatprep.subr.bf16.mxu0 %v1620
        %1938 = vmatpush1.bf16.msra.mxu0 %v1619
        %1939 = vmatprep.subr.bf16.mxu0 %v1615
        %1940 = vmatpush1.bf16.msra.mxu0 %v1614
        %1941 = vmatprep.subr.bf16.mxu0 %v1610
        %1942 = vmatpush1.bf16.msra.mxu0 %v1609
        %1943 = vmatprep.subr.bf16.mxu0 %v1605
        %1944 = vmatpush1.bf16.msra.mxu0 %v1604
        %1945 = vmatprep.subr.bf16.mxu0 %v1600
        %1946 = vmatpush1.bf16.msra.mxu0 %v1599
        %1947 = vmatprep.subr.bf16.mxu0 %v1595
        %1948 = vmatpush1.bf16.msra.mxu0 %v1594
        %1949 = vmatprep.subr.bf16.mxu0 %v1590
        %1950 = vmatpush1.bf16.msra.mxu0 %v1589
        %1951 = vmatprep.subr.bf16.mxu0 %v1585
        %1952 = vmatpush1.bf16.msra.mxu0 %v1584
        %1953 = vmatprep.subr.bf16.mxu0 %v1660
        %1954 = vmatpush2.bf16.msra.mxu0 %v1659
        %1955 = vmatprep.subr.bf16.mxu0 %v1655
        %1956 = vmatpush2.bf16.msra.mxu0 %v1654
        %1957 = vmatprep.subr.bf16.mxu0 %v1650
        %1958 = vmatpush2.bf16.msra.mxu0 %v1649
        %1959 = vmatprep.subr.bf16.mxu0 %v1645
        %1960 = vmatpush2.bf16.msra.mxu0 %v1644
        %1961 = vmatprep.subr.bf16.mxu0 %v1640
        %1962 = vmatpush2.bf16.msra.mxu0 %v1639
        %1963 = vmatprep.subr.bf16.mxu0 %v1635
        %1964 = vmatpush2.bf16.msra.mxu0 %v1634
        %1965 = vmatprep.subr.bf16.mxu0 %v1630
        %1966 = vmatpush2.bf16.msra.mxu0 %v1629
        %1967 = vmatprep.subr.bf16.mxu0 %v1625
        %1968 = vmatpush2.bf16.msra.mxu0 %v1624
        %1969 = vmatprep.mubr.bf16.mxu0 %v931
        %1970 = vmatmul.mubr.bf16.gmra.mxu0 %v930
        %v1971 = vpop.f32.mrf.mxu0
        %v1972 = vadd.f32 %v1859, %v1971
        %v1973 = vpop.f32.mrf.mxu0
        %v1974 = vadd.f32 %v1861, %v1973
        %v1975 = vpop.f32.mrf.mxu0
        %v1976 = vadd.f32 %v1863, %v1975
        %v1977 = vpop.f32.mrf.mxu0
        %v1978 = vadd.f32 %v1865, %v1977
        %1979 = vmatprep.mubr.bf16.mxu0 %v935
        %1980 = vmatmul.mubr.bf16.gmra.mxu0 %v934
        %v1981 = vpop.f32.mrf.mxu0
        %v1982 = vadd.f32 %v1869, %v1981
        %v1983 = vpop.f32.mrf.mxu0
        %v1984 = vadd.f32 %v1871, %v1983
        %v1985 = vpop.f32.mrf.mxu0
        %v1986 = vadd.f32 %v1873, %v1985
        %v1987 = vpop.f32.mrf.mxu0
        %v1988 = vadd.f32 %v1875, %v1987
        %1989 = vmatprep.mubr.bf16.mxu0 %v939
        %1990 = vmatmul.mubr.bf16.gmra.mxu0 %v938
        %v1991 = vpop.f32.mrf.mxu0
        %v1992 = vadd.f32 %v1879, %v1991
        %v1993 = vpop.f32.mrf.mxu0
        %v1994 = vadd.f32 %v1881, %v1993
        %v1995 = vpop.f32.mrf.mxu0
        %v1996 = vadd.f32 %v1883, %v1995
        %v1997 = vpop.f32.mrf.mxu0
        %v1998 = vadd.f32 %v1885, %v1997
        %1999 = vmatprep.mubr.bf16.mxu0 %v943
        %2000 = vmatmul.mubr.bf16.gmra.mxu0 %v942
        %v2001 = vpop.f32.mrf.mxu0
        %v2002 = vadd.f32 %v1889, %v2001
        %v2003 = vpop.f32.mrf.mxu0
        %v2004 = vadd.f32 %v1891, %v2003
        %v2005 = vpop.f32.mrf.mxu0
        %v2006 = vadd.f32 %v1893, %v2005
        %v2007 = vpop.f32.mrf.mxu0
        %v2008 = vadd.f32 %v1895, %v2007
        %2009 = vmatprep.mubr.bf16.mxu0 %v947
        %2010 = vmatmul.mubr.bf16.gmra.mxu0 %v946
        %v2011 = vpop.f32.mrf.mxu0
        %v2012 = vadd.f32 %v1899, %v2011
        %v2013 = vpop.f32.mrf.mxu0
        %v2014 = vadd.f32 %v1901, %v2013
        %v2015 = vpop.f32.mrf.mxu0
        %v2016 = vadd.f32 %v1903, %v2015
        %v2017 = vpop.f32.mrf.mxu0
        %v2018 = vadd.f32 %v1905, %v2017
        %2019 = vmatprep.mubr.bf16.mxu0 %v951
        %2020 = vmatmul.mubr.bf16.gmra.mxu0 %v950
        %v2021 = vpop.f32.mrf.mxu0
        %v2022 = vadd.f32 %v1909, %v2021
        %v2023 = vpop.f32.mrf.mxu0
        %v2024 = vadd.f32 %v1911, %v2023
        %v2025 = vpop.f32.mrf.mxu0
        %v2026 = vadd.f32 %v1913, %v2025
        %v2027 = vpop.f32.mrf.mxu0
        %v2028 = vadd.f32 %v1915, %v2027
        %2029 = vmatprep.mubr.bf16.mxu0 %v955
        %2030 = vmatmul.mubr.bf16.gmra.mxu0 %v954
        %v2031 = vpop.f32.mrf.mxu0
        %v2032 = vadd.f32 %v1919, %v2031
        %v2033 = vpop.f32.mrf.mxu0
        %v2034 = vadd.f32 %v1921, %v2033
        %v2035 = vpop.f32.mrf.mxu0
        %v2036 = vadd.f32 %v1923, %v2035
        %v2037 = vpop.f32.mrf.mxu0
        %v2038 = vadd.f32 %v1925, %v2037
        %2039 = vmatprep.mubr.bf16.mxu0 %v959
        %2040 = vmatmul.mubr.bf16.gmra.mxu0 %v958
        %v2041 = vpop.f32.mrf.mxu0
        %v2042 = vadd.f32 %v1929, %v2041
        %v2043 = vpop.f32.mrf.mxu0
        %v2044 = vadd.f32 %v1931, %v2043
        %v2045 = vpop.f32.mrf.mxu0
        %v2046 = vadd.f32 %v1933, %v2045
        %v2047 = vpop.f32.mrf.mxu0
        %v2048 = vadd.f32 %v1935, %v2047
        %2049 = vdwg.mxu0
        %2050 = vmatprep.subr.bf16.mxu0 %v1542
        %2051 = vmatpush1.bf16.msra.mxu0 %v1541
        %2052 = vmatprep.subr.bf16.mxu0 %v1537
        %2053 = vmatpush1.bf16.msra.mxu0 %v1536
        %2054 = vmatprep.subr.bf16.mxu0 %v1532
        %2055 = vmatpush1.bf16.msra.mxu0 %v1531
        %2056 = vmatprep.subr.bf16.mxu0 %v1527
        %2057 = vmatpush1.bf16.msra.mxu0 %v1526
        %2058 = vmatprep.subr.bf16.mxu0 %v1522
        %2059 = vmatpush1.bf16.msra.mxu0 %v1521
        %2060 = vmatprep.subr.bf16.mxu0 %v1517
        %2061 = vmatpush1.bf16.msra.mxu0 %v1516
        %2062 = vmatprep.subr.bf16.mxu0 %v1512
        %2063 = vmatpush1.bf16.msra.mxu0 %v1511
        %2064 = vmatprep.subr.bf16.mxu0 %v1507
        %2065 = vmatpush1.bf16.msra.mxu0 %v1506
        %2066 = vmatprep.subr.bf16.mxu0 %v1582
        %2067 = vmatpush2.bf16.msra.mxu0 %v1581
        %2068 = vmatprep.subr.bf16.mxu0 %v1577
        %2069 = vmatpush2.bf16.msra.mxu0 %v1576
        %2070 = vmatprep.subr.bf16.mxu0 %v1572
        %2071 = vmatpush2.bf16.msra.mxu0 %v1571
        %2072 = vmatprep.subr.bf16.mxu0 %v1567
        %2073 = vmatpush2.bf16.msra.mxu0 %v1566
        %2074 = vmatprep.subr.bf16.mxu0 %v1562
        %2075 = vmatpush2.bf16.msra.mxu0 %v1561
        %2076 = vmatprep.subr.bf16.mxu0 %v1557
        %2077 = vmatpush2.bf16.msra.mxu0 %v1556
        %2078 = vmatprep.subr.bf16.mxu0 %v1552
        %2079 = vmatpush2.bf16.msra.mxu0 %v1551
        %2080 = vmatprep.subr.bf16.mxu0 %v1547
        %2081 = vmatpush2.bf16.msra.mxu0 %v1546
        %2082 = vmatprep.mubr.bf16.mxu0 %v929
        %2083 = vmatmul.mubr.bf16.gmra.mxu0 %v928
        %v2084 = vpop.f32.mrf.mxu0
        %v2085 = vadd.f32 %v818, %v2084
        %v2086 = vpop.f32.mrf.mxu0
        %v2087 = vadd.f32 %v822, %v2086
        %v2088 = vpop.f32.mrf.mxu0
        %v2089 = vadd.f32 %v818, %v2088
        %v2090 = vpop.f32.mrf.mxu0
        %v2091 = vadd.f32 %v822, %v2090
        %2092 = vmatprep.mubr.bf16.mxu0 %v933
        %2093 = vmatmul.mubr.bf16.gmra.mxu0 %v932
        %v2094 = vpop.f32.mrf.mxu0
        %v2095 = vadd.f32 %v818, %v2094
        %v2096 = vpop.f32.mrf.mxu0
        %v2097 = vadd.f32 %v822, %v2096
        %v2098 = vpop.f32.mrf.mxu0
        %v2099 = vadd.f32 %v818, %v2098
        %v2100 = vpop.f32.mrf.mxu0
        %v2101 = vadd.f32 %v822, %v2100
        %2102 = vmatprep.mubr.bf16.mxu0 %v937
        %2103 = vmatmul.mubr.bf16.gmra.mxu0 %v936
        %v2104 = vpop.f32.mrf.mxu0
        %v2105 = vadd.f32 %v818, %v2104
        %v2106 = vpop.f32.mrf.mxu0
        %v2107 = vadd.f32 %v822, %v2106
        %v2108 = vpop.f32.mrf.mxu0
        %v2109 = vadd.f32 %v818, %v2108
        %v2110 = vpop.f32.mrf.mxu0
        %v2111 = vadd.f32 %v822, %v2110
        %2112 = vmatprep.mubr.bf16.mxu0 %v941
        %2113 = vmatmul.mubr.bf16.gmra.mxu0 %v940
        %v2114 = vpop.f32.mrf.mxu0
        %v2115 = vadd.f32 %v818, %v2114
        %v2116 = vpop.f32.mrf.mxu0
        %v2117 = vadd.f32 %v822, %v2116
        %v2118 = vpop.f32.mrf.mxu0
        %v2119 = vadd.f32 %v818, %v2118
        %v2120 = vpop.f32.mrf.mxu0
        %v2121 = vadd.f32 %v822, %v2120
        %2122 = vmatprep.mubr.bf16.mxu0 %v945
        %2123 = vmatmul.mubr.bf16.gmra.mxu0 %v944
        %v2124 = vpop.f32.mrf.mxu0
        %v2125 = vadd.f32 %v818, %v2124
        %v2126 = vpop.f32.mrf.mxu0
        %v2127 = vadd.f32 %v822, %v2126
        %v2128 = vpop.f32.mrf.mxu0
        %v2129 = vadd.f32 %v818, %v2128
        %v2130 = vpop.f32.mrf.mxu0
        %v2131 = vadd.f32 %v822, %v2130
        %2132 = vmatprep.mubr.bf16.mxu0 %v949
        %2133 = vmatmul.mubr.bf16.gmra.mxu0 %v948
        %v2134 = vpop.f32.mrf.mxu0
        %v2135 = vadd.f32 %v818, %v2134
        %v2136 = vpop.f32.mrf.mxu0
        %v2137 = vadd.f32 %v822, %v2136
        %v2138 = vpop.f32.mrf.mxu0
        %v2139 = vadd.f32 %v818, %v2138
        %v2140 = vpop.f32.mrf.mxu0
        %v2141 = vadd.f32 %v822, %v2140
        %2142 = vmatprep.mubr.bf16.mxu0 %v953
        %2143 = vmatmul.mubr.bf16.gmra.mxu0 %v952
        %v2144 = vpop.f32.mrf.mxu0
        %v2145 = vadd.f32 %v818, %v2144
        %v2146 = vpop.f32.mrf.mxu0
        %v2147 = vadd.f32 %v822, %v2146
        %v2148 = vpop.f32.mrf.mxu0
        %v2149 = vadd.f32 %v818, %v2148
        %v2150 = vpop.f32.mrf.mxu0
        %v2151 = vadd.f32 %v822, %v2150
        %2152 = vmatprep.mubr.bf16.mxu0 %v957
        %2153 = vmatmul.mubr.bf16.gmra.mxu0 %v956
        %v2154 = vpop.f32.mrf.mxu0
        %v2155 = vadd.f32 %v818, %v2154
        %v2156 = vpop.f32.mrf.mxu0
        %v2157 = vadd.f32 %v822, %v2156
        %v2158 = vpop.f32.mrf.mxu0
        %v2159 = vadd.f32 %v818, %v2158
        %v2160 = vpop.f32.mrf.mxu0
        %v2161 = vadd.f32 %v822, %v2160
        %2162 = vdwg.mxu0
        %2163 = vmatprep.subr.bf16.mxu0 %v1622
        %2164 = vmatpush1.bf16.msra.mxu0 %v1621
        %2165 = vmatprep.subr.bf16.mxu0 %v1617
        %2166 = vmatpush1.bf16.msra.mxu0 %v1616
        %2167 = vmatprep.subr.bf16.mxu0 %v1612
        %2168 = vmatpush1.bf16.msra.mxu0 %v1611
        %2169 = vmatprep.subr.bf16.mxu0 %v1607
        %2170 = vmatpush1.bf16.msra.mxu0 %v1606
        %2171 = vmatprep.subr.bf16.mxu0 %v1602
        %2172 = vmatpush1.bf16.msra.mxu0 %v1601
        %2173 = vmatprep.subr.bf16.mxu0 %v1597
        %2174 = vmatpush1.bf16.msra.mxu0 %v1596
        %2175 = vmatprep.subr.bf16.mxu0 %v1592
        %2176 = vmatpush1.bf16.msra.mxu0 %v1591
        %2177 = vmatprep.subr.bf16.mxu0 %v1587
        %2178 = vmatpush1.bf16.msra.mxu0 %v1586
        %2179 = vmatprep.subr.bf16.mxu0 %v1662
        %2180 = vmatpush2.bf16.msra.mxu0 %v1661
        %2181 = vmatprep.subr.bf16.mxu0 %v1657
        %2182 = vmatpush2.bf16.msra.mxu0 %v1656
        %2183 = vmatprep.subr.bf16.mxu0 %v1652
        %2184 = vmatpush2.bf16.msra.mxu0 %v1651
        %2185 = vmatprep.subr.bf16.mxu0 %v1647
        %2186 = vmatpush2.bf16.msra.mxu0 %v1646
        %2187 = vmatprep.subr.bf16.mxu0 %v1642
        %2188 = vmatpush2.bf16.msra.mxu0 %v1641
        %2189 = vmatprep.subr.bf16.mxu0 %v1637
        %2190 = vmatpush2.bf16.msra.mxu0 %v1636
        %2191 = vmatprep.subr.bf16.mxu0 %v1632
        %2192 = vmatpush2.bf16.msra.mxu0 %v1631
        %2193 = vmatprep.subr.bf16.mxu0 %v1627
        %2194 = vmatpush2.bf16.msra.mxu0 %v1626
        %2195 = vmatprep.mubr.bf16.mxu0 %v931
        %2196 = vmatmul.mubr.bf16.gmra.mxu0 %v930
        %v2197 = vpop.f32.mrf.mxu0
        %v2198 = vadd.f32 %v2085, %v2197
        %v2199 = vpop.f32.mrf.mxu0
        %v2200 = vadd.f32 %v2087, %v2199
        %v2201 = vpop.f32.mrf.mxu0
        %v2202 = vadd.f32 %v2089, %v2201
        %v2203 = vpop.f32.mrf.mxu0
        %v2204 = vadd.f32 %v2091, %v2203
        %2205 = vmatprep.mubr.bf16.mxu0 %v935
        %2206 = vmatmul.mubr.bf16.gmra.mxu0 %v934
        %v2207 = vpop.f32.mrf.mxu0
        %v2208 = vadd.f32 %v2095, %v2207
        %v2209 = vpop.f32.mrf.mxu0
        %v2210 = vadd.f32 %v2097, %v2209
        %v2211 = vpop.f32.mrf.mxu0
        %v2212 = vadd.f32 %v2099, %v2211
        %v2213 = vpop.f32.mrf.mxu0
        %v2214 = vadd.f32 %v2101, %v2213
        %2215 = vmatprep.mubr.bf16.mxu0 %v939
        %2216 = vmatmul.mubr.bf16.gmra.mxu0 %v938
        %v2217 = vpop.f32.mrf.mxu0
        %v2218 = vadd.f32 %v2105, %v2217
        %v2219 = vpop.f32.mrf.mxu0
        %v2220 = vadd.f32 %v2107, %v2219
        %v2221 = vpop.f32.mrf.mxu0
        %v2222 = vadd.f32 %v2109, %v2221
        %v2223 = vpop.f32.mrf.mxu0
        %v2224 = vadd.f32 %v2111, %v2223
        %2225 = vmatprep.mubr.bf16.mxu0 %v943
        %2226 = vmatmul.mubr.bf16.gmra.mxu0 %v942
        %v2227 = vpop.f32.mrf.mxu0
        %v2228 = vadd.f32 %v2115, %v2227
        %v2229 = vpop.f32.mrf.mxu0
        %v2230 = vadd.f32 %v2117, %v2229
        %v2231 = vpop.f32.mrf.mxu0
        %v2232 = vadd.f32 %v2119, %v2231
        %v2233 = vpop.f32.mrf.mxu0
        %v2234 = vadd.f32 %v2121, %v2233
        %2235 = vmatprep.mubr.bf16.mxu0 %v947
        %2236 = vmatmul.mubr.bf16.gmra.mxu0 %v946
        %v2237 = vpop.f32.mrf.mxu0
        %v2238 = vadd.f32 %v2125, %v2237
        %v2239 = vpop.f32.mrf.mxu0
        %v2240 = vadd.f32 %v2127, %v2239
        %v2241 = vpop.f32.mrf.mxu0
        %v2242 = vadd.f32 %v2129, %v2241
        %v2243 = vpop.f32.mrf.mxu0
        %v2244 = vadd.f32 %v2131, %v2243
        %2245 = vmatprep.mubr.bf16.mxu0 %v951
        %2246 = vmatmul.mubr.bf16.gmra.mxu0 %v950
        %v2247 = vpop.f32.mrf.mxu0
        %v2248 = vadd.f32 %v2135, %v2247
        %v2249 = vpop.f32.mrf.mxu0
        %v2250 = vadd.f32 %v2137, %v2249
        %v2251 = vpop.f32.mrf.mxu0
        %v2252 = vadd.f32 %v2139, %v2251
        %v2253 = vpop.f32.mrf.mxu0
        %v2254 = vadd.f32 %v2141, %v2253
        %2255 = vmatprep.mubr.bf16.mxu0 %v955
        %2256 = vmatmul.mubr.bf16.gmra.mxu0 %v954
        %v2257 = vpop.f32.mrf.mxu0
        %v2258 = vadd.f32 %v2145, %v2257
        %v2259 = vpop.f32.mrf.mxu0
        %v2260 = vadd.f32 %v2147, %v2259
        %v2261 = vpop.f32.mrf.mxu0
        %v2262 = vadd.f32 %v2149, %v2261
        %v2263 = vpop.f32.mrf.mxu0
        %v2264 = vadd.f32 %v2151, %v2263
        %2265 = vmatprep.mubr.bf16.mxu0 %v959
        %2266 = vmatmul.mubr.bf16.gmra.mxu0 %v958
        %v2267 = vpop.f32.mrf.mxu0
        %v2268 = vadd.f32 %v2155, %v2267
        %v2269 = vpop.f32.mrf.mxu0
        %v2270 = vadd.f32 %v2157, %v2269
        %v2271 = vpop.f32.mrf.mxu0
        %v2272 = vadd.f32 %v2159, %v2271
        %v2273 = vpop.f32.mrf.mxu0
        %v2274 = vadd.f32 %v2161, %v2273
        %2275 = vdwg.mxu0
        %2276 = vmatprep.subr.bf16.mxu0 0
        %2277 = vmatpush1.bf16.msra.mxu0 %v1543
        %2278 = vmatprep.subr.bf16.mxu0 0
        %2279 = vmatpush1.bf16.msra.mxu0 %v1538
        %2280 = vmatprep.subr.bf16.mxu0 0
        %2281 = vmatpush1.bf16.msra.mxu0 %v1533
        %2282 = vmatprep.subr.bf16.mxu0 0
        %2283 = vmatpush1.bf16.msra.mxu0 %v1528
        %2284 = vmatprep.subr.bf16.mxu0 0
        %2285 = vmatpush1.bf16.msra.mxu0 %v1523
        %2286 = vmatprep.subr.bf16.mxu0 0
        %2287 = vmatpush1.bf16.msra.mxu0 %v1518
        %2288 = vmatprep.subr.bf16.mxu0 0
        %2289 = vmatpush1.bf16.msra.mxu0 %v1513
        %2290 = vmatprep.subr.bf16.mxu0 0
        %2291 = vmatpush1.bf16.msra.mxu0 %v1508
        %2292 = vmatprep.subr.bf16.mxu0 0
        %2293 = vmatpush2.bf16.msra.mxu0 %v1583
        %2294 = vmatprep.subr.bf16.mxu0 0
        %2295 = vmatpush2.bf16.msra.mxu0 %v1578
        %2296 = vmatprep.subr.bf16.mxu0 0
        %2297 = vmatpush2.bf16.msra.mxu0 %v1573
        %2298 = vmatprep.subr.bf16.mxu0 0
        %2299 = vmatpush2.bf16.msra.mxu0 %v1568
        %2300 = vmatprep.subr.bf16.mxu0 0
        %2301 = vmatpush2.bf16.msra.mxu0 %v1563
        %2302 = vmatprep.subr.bf16.mxu0 0
        %2303 = vmatpush2.bf16.msra.mxu0 %v1558
        %2304 = vmatprep.subr.bf16.mxu0 0
        %2305 = vmatpush2.bf16.msra.mxu0 %v1553
        %2306 = vmatprep.subr.bf16.mxu0 0
        %2307 = vmatpush2.bf16.msra.mxu0 %v1548
        %2308 = vmatprep.mubr.bf16.mxu0 %v929
        %2309 = vmatmul.mubr.bf16.gmra.mxu0 %v928
        %v2310 = vpop.f32.mrf.mxu0
        %v2311 = vadd.f32 %v826, %v2310
        %v2312 = vpop.f32.mrf.mxu0
        %v2313 = vpop.f32.mrf.mxu0
        %v2314 = vadd.f32 %v826, %v2313
        %v2315 = vpop.f32.mrf.mxu0
        %2316 = vmatprep.mubr.bf16.mxu0 %v933
        %2317 = vmatmul.mubr.bf16.gmra.mxu0 %v932
        %v2318 = vpop.f32.mrf.mxu0
        %v2319 = vadd.f32 %v826, %v2318
        %v2320 = vpop.f32.mrf.mxu0
        %v2321 = vpop.f32.mrf.mxu0
        %v2322 = vadd.f32 %v826, %v2321
        %v2323 = vpop.f32.mrf.mxu0
        %2324 = vmatprep.mubr.bf16.mxu0 %v937
        %2325 = vmatmul.mubr.bf16.gmra.mxu0 %v936
        %v2326 = vpop.f32.mrf.mxu0
        %v2327 = vadd.f32 %v826, %v2326
        %v2328 = vpop.f32.mrf.mxu0
        %v2329 = vpop.f32.mrf.mxu0
        %v2330 = vadd.f32 %v826, %v2329
        %v2331 = vpop.f32.mrf.mxu0
        %2332 = vmatprep.mubr.bf16.mxu0 %v941
        %2333 = vmatmul.mubr.bf16.gmra.mxu0 %v940
        %v2334 = vpop.f32.mrf.mxu0
        %v2335 = vadd.f32 %v826, %v2334
        %v2336 = vpop.f32.mrf.mxu0
        %v2337 = vpop.f32.mrf.mxu0
        %v2338 = vadd.f32 %v826, %v2337
        %v2339 = vpop.f32.mrf.mxu0
        %2340 = vmatprep.mubr.bf16.mxu0 %v945
        %2341 = vmatmul.mubr.bf16.gmra.mxu0 %v944
        %v2342 = vpop.f32.mrf.mxu0
        %v2343 = vadd.f32 %v826, %v2342
        %v2344 = vpop.f32.mrf.mxu0
        %v2345 = vpop.f32.mrf.mxu0
        %v2346 = vadd.f32 %v826, %v2345
        %v2347 = vpop.f32.mrf.mxu0
        %2348 = vmatprep.mubr.bf16.mxu0 %v949
        %2349 = vmatmul.mubr.bf16.gmra.mxu0 %v948
        %v2350 = vpop.f32.mrf.mxu0
        %v2351 = vadd.f32 %v826, %v2350
        %v2352 = vpop.f32.mrf.mxu0
        %v2353 = vpop.f32.mrf.mxu0
        %v2354 = vadd.f32 %v826, %v2353
        %v2355 = vpop.f32.mrf.mxu0
        %2356 = vmatprep.mubr.bf16.mxu0 %v953
        %2357 = vmatmul.mubr.bf16.gmra.mxu0 %v952
        %v2358 = vpop.f32.mrf.mxu0
        %v2359 = vadd.f32 %v826, %v2358
        %v2360 = vpop.f32.mrf.mxu0
        %v2361 = vpop.f32.mrf.mxu0
        %v2362 = vadd.f32 %v826, %v2361
        %v2363 = vpop.f32.mrf.mxu0
        %2364 = vmatprep.mubr.bf16.mxu0 %v957
        %2365 = vmatmul.mubr.bf16.gmra.mxu0 %v956
        %v2366 = vpop.f32.mrf.mxu0
        %v2367 = vadd.f32 %v826, %v2366
        %v2368 = vpop.f32.mrf.mxu0
        %v2369 = vpop.f32.mrf.mxu0
        %v2370 = vadd.f32 %v826, %v2369
        %v2371 = vpop.f32.mrf.mxu0
        %2372 = vdwg.mxu0
        %2373 = vmatprep.subr.bf16.mxu0 0
        %2374 = vmatpush1.bf16.msra.mxu0 %v1623
        %2375 = vmatprep.subr.bf16.mxu0 0
        %2376 = vmatpush1.bf16.msra.mxu0 %v1618
        %2377 = vmatprep.subr.bf16.mxu0 0
        %2378 = vmatpush1.bf16.msra.mxu0 %v1613
        %2379 = vmatprep.subr.bf16.mxu0 0
        %2380 = vmatpush1.bf16.msra.mxu0 %v1608
        %2381 = vmatprep.subr.bf16.mxu0 0
        %2382 = vmatpush1.bf16.msra.mxu0 %v1603
        %2383 = vmatprep.subr.bf16.mxu0 0
        %2384 = vmatpush1.bf16.msra.mxu0 %v1598
        %2385 = vmatprep.subr.bf16.mxu0 0
        %2386 = vmatpush1.bf16.msra.mxu0 %v1593
        %2387 = vmatprep.subr.bf16.mxu0 0
        %2388 = vmatpush1.bf16.msra.mxu0 %v1588
        %2389 = vmatprep.subr.bf16.mxu0 0
        %2390 = vmatpush2.bf16.msra.mxu0 %v1663
        %2391 = vmatprep.subr.bf16.mxu0 0
        %2392 = vmatpush2.bf16.msra.mxu0 %v1658
        %2393 = vmatprep.subr.bf16.mxu0 0
        %2394 = vmatpush2.bf16.msra.mxu0 %v1653
        %2395 = vmatprep.subr.bf16.mxu0 0
        %2396 = vmatpush2.bf16.msra.mxu0 %v1648
        %2397 = vmatprep.subr.bf16.mxu0 0
        %2398 = vmatpush2.bf16.msra.mxu0 %v1643
        %2399 = vmatprep.subr.bf16.mxu0 0
        %2400 = vmatpush2.bf16.msra.mxu0 %v1638
        %2401 = vmatprep.subr.bf16.mxu0 0
        %2402 = vmatpush2.bf16.msra.mxu0 %v1633
        %2403 = vmatprep.subr.bf16.mxu0 0
        %2404 = vmatpush2.bf16.msra.mxu0 %v1628
        %2405 = vmatprep.mubr.bf16.mxu0 %v931
        %2406 = vmatmul.mubr.bf16.gmra.mxu0 %v930
        %v2407 = vpop.f32.mrf.mxu0
        %v2408 = vadd.f32 %v2311, %v2407
        %v2409 = vpop.f32.mrf.mxu0
        %v2410 = vpop.f32.mrf.mxu0
        %v2411 = vadd.f32 %v2314, %v2410
        %v2412 = vpop.f32.mrf.mxu0
        %2413 = vmatprep.mubr.bf16.mxu0 %v935
        %2414 = vmatmul.mubr.bf16.gmra.mxu0 %v934
        %v2415 = vpop.f32.mrf.mxu0
        %v2416 = vadd.f32 %v2319, %v2415
        %v2417 = vpop.f32.mrf.mxu0
        %v2418 = vpop.f32.mrf.mxu0
        %v2419 = vadd.f32 %v2322, %v2418
        %v2420 = vpop.f32.mrf.mxu0
        %2421 = vmatprep.mubr.bf16.mxu0 %v939
        %2422 = vmatmul.mubr.bf16.gmra.mxu0 %v938
        %v2423 = vpop.f32.mrf.mxu0
        %v2424 = vadd.f32 %v2327, %v2423
        %v2425 = vpop.f32.mrf.mxu0
        %v2426 = vpop.f32.mrf.mxu0
        %v2427 = vadd.f32 %v2330, %v2426
        %v2428 = vpop.f32.mrf.mxu0
        %2429 = vmatprep.mubr.bf16.mxu0 %v943
        %2430 = vmatmul.mubr.bf16.gmra.mxu0 %v942
        %v2431 = vpop.f32.mrf.mxu0
        %v2432 = vadd.f32 %v2335, %v2431
        %v2433 = vpop.f32.mrf.mxu0
        %v2434 = vpop.f32.mrf.mxu0
        %v2435 = vadd.f32 %v2338, %v2434
        %v2436 = vpop.f32.mrf.mxu0
        %2437 = vmatprep.mubr.bf16.mxu0 %v947
        %2438 = vmatmul.mubr.bf16.gmra.mxu0 %v946
        %v2439 = vpop.f32.mrf.mxu0
        %v2440 = vadd.f32 %v2343, %v2439
        %v2441 = vpop.f32.mrf.mxu0
        %v2442 = vpop.f32.mrf.mxu0
        %v2443 = vadd.f32 %v2346, %v2442
        %v2444 = vpop.f32.mrf.mxu0
        %2445 = vmatprep.mubr.bf16.mxu0 %v951
        %2446 = vmatmul.mubr.bf16.gmra.mxu0 %v950
        %v2447 = vpop.f32.mrf.mxu0
        %v2448 = vadd.f32 %v2351, %v2447
        %v2449 = vpop.f32.mrf.mxu0
        %v2450 = vpop.f32.mrf.mxu0
        %v2451 = vadd.f32 %v2354, %v2450
        %v2452 = vpop.f32.mrf.mxu0
        %2453 = vmatprep.mubr.bf16.mxu0 %v955
        %2454 = vmatmul.mubr.bf16.gmra.mxu0 %v954
        %v2455 = vpop.f32.mrf.mxu0
        %v2456 = vadd.f32 %v2359, %v2455
        %v2457 = vpop.f32.mrf.mxu0
        %v2458 = vpop.f32.mrf.mxu0
        %v2459 = vadd.f32 %v2362, %v2458
        %v2460 = vpop.f32.mrf.mxu0
        %2461 = vmatprep.mubr.bf16.mxu0 %v959
        %2462 = vmatmul.mubr.bf16.gmra.mxu0 %v958
        %v2463 = vpop.f32.mrf.mxu0
        %v2464 = vadd.f32 %v2367, %v2463
        %v2465 = vpop.f32.mrf.mxu0
        %v2466 = vpop.f32.mrf.mxu0
        %v2467 = vadd.f32 %v2370, %v2466
        %v2468 = vpop.f32.mrf.mxu0
        %2469 = vdwg.mxu0
        %v2470 = vmax.f32 %v1974, 0.0
        %v2471 = vmax.f32 %v1978, 0.0
        %v2472 = vmax.f32 %v1984, 0.0
        %v2473 = vmax.f32 %v1988, 0.0
        %v2474 = vmax.f32 %v1994, 0.0
        %v2475 = vmax.f32 %v1998, 0.0
        %v2476 = vmax.f32 %v2004, 0.0
        %v2477 = vmax.f32 %v2008, 0.0
        %v2478 = vmax.f32 %v2014, 0.0
        %v2479 = vmax.f32 %v2018, 0.0
        %v2480 = vmax.f32 %v2024, 0.0
        %v2481 = vmax.f32 %v2028, 0.0
        %v2482 = vmax.f32 %v2034, 0.0
        %v2483 = vmax.f32 %v2038, 0.0
        %v2484 = vmax.f32 %v2044, 0.0
        %v2485 = vmax.f32 %v2048, 0.0
        %v2486 = vpack.c.bf16 %v2471, %v2470
        %v2487 = vpack.c.bf16 %v2473, %v2472
        %v2488 = vpack.c.bf16 %v2475, %v2474
        %v2489 = vpack.c.bf16 %v2477, %v2476
        %v2490 = vpack.c.bf16 %v2479, %v2478
        %v2491 = vpack.c.bf16 %v2481, %v2480
        %v2492 = vpack.c.bf16 %v2483, %v2482
        %v2493 = vpack.c.bf16 %v2485, %v2484
        %v2494 = vld [vmem:[%s3] sm:$0xf]
        %v2495 = vld [vmem:[%s3 + $0x4] sm:$0xf]
        %v2496 = vld [vmem:[%s3 + $0x8] sm:$0xf]
        %v2497 = vld [vmem:[%s3 + $0xc] sm:$0xf]
        %v2498 = vld [vmem:[%s3 + $0x10] sm:$0xf]
        %v2499 = vld [vmem:[%s3 + $0x14] sm:$0xf]
        %v2500 = vld [vmem:[%s3 + $0x18] sm:$0xf]
        %v2501 = vld [vmem:[%s3 + $0x1c] sm:$0xf]
        %v2502 = vld [vmem:[%s3 + $0x20] sm:$0xf]
        %v2503 = vld [vmem:[%s3 + $0x24] sm:$0xf]
        %v2504 = vld [vmem:[%s3 + $0x28] sm:$0xf]
        %v2505 = vld [vmem:[%s3 + $0x2c] sm:$0xf]
        %v2506 = vld [vmem:[%s3 + $0x30] sm:$0xf]
        %v2507 = vld [vmem:[%s3 + $0x34] sm:$0xf]
        %v2508 = vld [vmem:[%s3 + $0x38] sm:$0xf]
        %v2509 = vld [vmem:[%s3 + $0x3c] sm:$0xf]
        %v2510 = vld [vmem:[%s4] sm:$0x1]
        %v2512 = vlaneseq
        %v2513 = vshrl.u32 %v2512, 7
        %v2514 = vsub.s32 0, %v2513
        %v2515 = vrot.slane %v2510, %v2514
        %v2533 = vunpack.c.l.b16 %v2494
        %v2534 = vunpack.c.l.b16 %v2495
        %v2535 = vunpack.c.l.b16 %v2496
        %v2536 = vunpack.c.l.b16 %v2497
        %v2537 = vunpack.c.l.b16 %v2498
        %v2538 = vunpack.c.l.b16 %v2499
        %v2539 = vunpack.c.l.b16 %v2500
        %v2540 = vunpack.c.l.b16 %v2501
        %v2541 = vunpack.c.l.b16 %v2502
        %v2542 = vunpack.c.l.b16 %v2503
        %v2543 = vunpack.c.l.b16 %v2504
        %v2544 = vunpack.c.l.b16 %v2505
        %v2545 = vunpack.c.l.b16 %v2506
        %v2546 = vunpack.c.l.b16 %v2507
        %v2547 = vunpack.c.l.b16 %v2508
        %v2548 = vunpack.c.l.b16 %v2509
        %v2549 = vpack.c.b16 %v2534, %v2533
        %v2550 = vpack.c.b16 %v2536, %v2535
        %v2551 = vpack.c.b16 %v2538, %v2537
        %v2552 = vpack.c.b16 %v2540, %v2539
        %v2553 = vpack.c.b16 %v2542, %v2541
        %v2554 = vpack.c.b16 %v2544, %v2543
        %v2555 = vpack.c.b16 %v2546, %v2545
        %v2556 = vpack.c.b16 %v2548, %v2547
        %2565 = vmatprep.subr.bf16.mxu0 0
        %2566 = vmatpush1.bf16.msra.mxu0 %v2556
        %2567 = vmatprep.subr.bf16.mxu0 0
        %2568 = vmatpush1.bf16.msra.mxu0 %v2555
        %2569 = vmatprep.subr.bf16.mxu0 0
        %2570 = vmatpush1.bf16.msra.mxu0 %v2554
        %2571 = vmatprep.subr.bf16.mxu0 0
        %2572 = vmatpush1.bf16.msra.mxu0 %v2553
        %2573 = vmatprep.subr.bf16.mxu0 0
        %2574 = vmatpush1.bf16.msra.mxu0 %v2552
        %2575 = vmatprep.subr.bf16.mxu0 0
        %2576 = vmatpush1.bf16.msra.mxu0 %v2551
        %2577 = vmatprep.subr.bf16.mxu0 0
        %2578 = vmatpush1.bf16.msra.mxu0 %v2550
        %2579 = vmatprep.subr.bf16.mxu0 0
        %2580 = vmatpush1.bf16.msra.mxu0 %v2549
        %2581 = vmatprep.subr.bf16.mxu0 0
        %2582 = vmatpush2.bf16.msra.mxu0 0
        %2583 = vmatprep.subr.bf16.mxu0 0
        %2584 = vmatpush2.bf16.msra.mxu0 0
        %2585 = vmatprep.subr.bf16.mxu0 0
        %2586 = vmatpush2.bf16.msra.mxu0 0
        %2587 = vmatprep.subr.bf16.mxu0 0
        %2588 = vmatpush2.bf16.msra.mxu0 0
        %2589 = vmatprep.subr.bf16.mxu0 0
        %2590 = vmatpush2.bf16.msra.mxu0 0
        %2591 = vmatprep.subr.bf16.mxu0 0
        %2592 = vmatpush2.bf16.msra.mxu0 0
        %2593 = vmatprep.subr.bf16.mxu0 0
        %2594 = vmatpush2.bf16.msra.mxu0 0
        %2595 = vmatprep.subr.bf16.mxu0 0
        %2596 = vmatpush2.bf16.msra.mxu0 0
        %2597 = vmatprep.mubr.bf16.mxu0 0
        %2598 = vmatmul.mubr.bf16.gmra.mxu0 %v2486
        %v2599 = vpop.f32.mrf.mxu0
        %v2600 = vadd.f32 %v2515, %v2599
        %v2601 = vpop.f32.mrf.mxu0
        %v2602 = vpop.f32.mrf.mxu0
        %v2603 = vadd.f32 %v2515, %v2602
        %v2604 = vpop.f32.mrf.mxu0
        %2605 = vmatprep.mubr.bf16.mxu0 0
        %2606 = vmatmul.mubr.bf16.gmra.mxu0 %v2487
        %v2607 = vpop.f32.mrf.mxu0
        %v2608 = vadd.f32 %v2515, %v2607
        %v2609 = vpop.f32.mrf.mxu0
        %v2610 = vpop.f32.mrf.mxu0
        %v2611 = vadd.f32 %v2515, %v2610
        %v2612 = vpop.f32.mrf.mxu0
        %2613 = vmatprep.mubr.bf16.mxu0 0
        %2614 = vmatmul.mubr.bf16.gmra.mxu0 %v2488
        %v2615 = vpop.f32.mrf.mxu0
        %v2616 = vadd.f32 %v2515, %v2615
        %v2617 = vpop.f32.mrf.mxu0
        %v2618 = vpop.f32.mrf.mxu0
        %v2619 = vadd.f32 %v2515, %v2618
        %v2620 = vpop.f32.mrf.mxu0
        %2621 = vmatprep.mubr.bf16.mxu0 0
        %2622 = vmatmul.mubr.bf16.gmra.mxu0 %v2489
        %v2623 = vpop.f32.mrf.mxu0
        %v2624 = vadd.f32 %v2515, %v2623
        %v2625 = vpop.f32.mrf.mxu0
        %v2626 = vpop.f32.mrf.mxu0
        %v2627 = vadd.f32 %v2515, %v2626
        %v2628 = vpop.f32.mrf.mxu0
        %2629 = vmatprep.mubr.bf16.mxu0 0
        %2630 = vmatmul.mubr.bf16.gmra.mxu0 %v2490
        %v2631 = vpop.f32.mrf.mxu0
        %v2632 = vadd.f32 %v2515, %v2631
        %v2633 = vpop.f32.mrf.mxu0
        %v2634 = vpop.f32.mrf.mxu0
        %v2635 = vadd.f32 %v2515, %v2634
        %v2636 = vpop.f32.mrf.mxu0
        %2637 = vmatprep.mubr.bf16.mxu0 0
        %2638 = vmatmul.mubr.bf16.gmra.mxu0 %v2491
        %v2639 = vpop.f32.mrf.mxu0
        %v2640 = vadd.f32 %v2515, %v2639
        %v2641 = vpop.f32.mrf.mxu0
        %v2642 = vpop.f32.mrf.mxu0
        %v2643 = vadd.f32 %v2515, %v2642
        %v2644 = vpop.f32.mrf.mxu0
        %2645 = vmatprep.mubr.bf16.mxu0 0
        %2646 = vmatmul.mubr.bf16.gmra.mxu0 %v2492
        %v2647 = vpop.f32.mrf.mxu0
        %v2648 = vadd.f32 %v2515, %v2647
        %v2649 = vpop.f32.mrf.mxu0
        %v2650 = vpop.f32.mrf.mxu0
        %v2651 = vadd.f32 %v2515, %v2650
        %v2652 = vpop.f32.mrf.mxu0
        %2653 = vmatprep.mubr.bf16.mxu0 0
        %2654 = vmatmul.mubr.bf16.gmra.mxu0 %v2493
        %v2655 = vpop.f32.mrf.mxu0
        %v2656 = vadd.f32 %v2515, %v2655
        %v2657 = vpop.f32.mrf.mxu0
        %v2658 = vpop.f32.mrf.mxu0
        %v2659 = vadd.f32 %v2515, %v2658
        %v2660 = vpop.f32.mrf.mxu0
        %2661 = vdwg.mxu0
        %v2662 = vpack.c.bf16 %v1976, %v1972
        %v2663 = vpack.c.bf16 %v1986, %v1982
        %v2664 = vpack.c.bf16 %v1996, %v1992
        %v2665 = vpack.c.bf16 %v2006, %v2002
        %v2666 = vpack.c.bf16 %v2016, %v2012
        %v2667 = vpack.c.bf16 %v2026, %v2022
        %v2668 = vpack.c.bf16 %v2036, %v2032
        %v2669 = vpack.c.bf16 %v2046, %v2042
        %v2670 = vld [vmem:[%s5] sm:$0xf]
        %v2671 = vld [vmem:[%s5 + $0x4] sm:$0xf]
        %v2672 = vld [vmem:[%s5 + $0x8] sm:$0xf]
        %v2673 = vld [vmem:[%s5 + $0xc] sm:$0xf]
        %v2674 = vld [vmem:[%s5 + $0x10] sm:$0xf]
        %v2675 = vld [vmem:[%s5 + $0x14] sm:$0xf]
        %v2676 = vld [vmem:[%s5 + $0x18] sm:$0xf]
        %v2677 = vld [vmem:[%s5 + $0x1c] sm:$0xf]
        %v2678 = vld [vmem:[%s5 + $0x20] sm:$0xf]
        %v2679 = vld [vmem:[%s5 + $0x24] sm:$0xf]
        %v2680 = vld [vmem:[%s5 + $0x28] sm:$0xf]
        %v2681 = vld [vmem:[%s5 + $0x2c] sm:$0xf]
        %v2682 = vld [vmem:[%s5 + $0x30] sm:$0xf]
        %v2683 = vld [vmem:[%s5 + $0x34] sm:$0xf]
        %v2684 = vld [vmem:[%s5 + $0x38] sm:$0xf]
        %v2685 = vld [vmem:[%s5 + $0x3c] sm:$0xf]
        %v2686 = vpack.c.bf16 %v2603, %v2600
        %v2687 = vpack.c.bf16 %v2611, %v2608
        %v2688 = vpack.c.bf16 %v2619, %v2616
        %v2689 = vpack.c.bf16 %v2627, %v2624
        %v2690 = vpack.c.bf16 %v2635, %v2632
        %v2691 = vpack.c.bf16 %v2643, %v2640
        %v2692 = vpack.c.bf16 %v2651, %v2648
        %v2693 = vpack.c.bf16 %v2659, %v2656
        %v2694 = vld [vmem:[%s6] sm:$0xf]
        %v2695 = vld [vmem:[%s6 + $0x4] sm:$0xf]
        %v2696 = vld [vmem:[%s6 + $0x8] sm:$0xf]
        %v2697 = vld [vmem:[%s6 + $0xc] sm:$0xf]
        %v2698 = vld [vmem:[%s6 + $0x10] sm:$0xf]
        %v2699 = vld [vmem:[%s6 + $0x14] sm:$0xf]
        %v2700 = vld [vmem:[%s6 + $0x18] sm:$0xf]
        %v2701 = vld [vmem:[%s6 + $0x1c] sm:$0xf]
        %v2702 = vld [vmem:[%s6 + $0x20] sm:$0xf]
        %v2703 = vld [vmem:[%s6 + $0x24] sm:$0xf]
        %v2704 = vld [vmem:[%s6 + $0x28] sm:$0xf]
        %v2705 = vld [vmem:[%s6 + $0x2c] sm:$0xf]
        %v2718 = vunpack.c.l.b16 %v2694
        %v2719 = vunpack.c.l.b16 %v2695
        %v2720 = vunpack.c.l.b16 %v2696
        %v2721 = vunpack.c.l.b16 %v2697
        %v2722 = vunpack.c.l.b16 %v2698
        %v2723 = vunpack.c.l.b16 %v2699
        %v2724 = vunpack.c.l.b16 %v2700
        %v2725 = vunpack.c.l.b16 %v2701
        %v2726 = vunpack.c.l.b16 %v2702
        %v2727 = vunpack.c.l.b16 %v2703
        %v2728 = vunpack.c.l.b16 %v2704
        %v2729 = vunpack.c.l.b16 %v2705
        %v2730 = vpack.c.b16 %v2719, %v2718
        %v2731 = vpack.c.b16 %v2721, %v2720
        %v2732 = vpack.c.b16 %v2723, %v2722
        %v2733 = vpack.c.b16 %v2725, %v2724
        %v2734 = vpack.c.b16 %v2727, %v2726
        %v2735 = vpack.c.b16 %v2729, %v2728
        %vm2742 = vcmask 785408
        %v2744 = vsel %vm2742, %v2686, 0
        %v2747 = vsel %vm2742, %v2687, 0
        %v2750 = vsel %vm2742, %v2688, 0
        %v2753 = vsel %vm2742, %v2689, 0
        %v2756 = vsel %vm2742, %v2690, 0
        %v2759 = vsel %vm2742, %v2691, 0
        %v2762 = vsel %vm2742, %v2692, 0
        %v2765 = vsel %vm2742, %v2693, 0
        %2767 = vmatprep.subr.bf16.mxu0 0
        %2768 = vmatpush1.bf16.msra.mxu0 0
        %2769 = vmatprep.subr.bf16.mxu0 0
        %2770 = vmatpush1.bf16.msra.mxu0 0
        %2771 = vmatprep.subr.bf16.mxu0 0
        %2772 = vmatpush1.bf16.msra.mxu0 %v2735
        %2773 = vmatprep.subr.bf16.mxu0 0
        %2774 = vmatpush1.bf16.msra.mxu0 %v2734
        %2775 = vmatprep.subr.bf16.mxu0 0
        %2776 = vmatpush1.bf16.msra.mxu0 %v2733
        %2777 = vmatprep.subr.bf16.mxu0 0
        %2778 = vmatpush1.bf16.msra.mxu0 %v2732
        %2779 = vmatprep.subr.bf16.mxu0 0
        %2780 = vmatpush1.bf16.msra.mxu0 %v2731
        %2781 = vmatprep.subr.bf16.mxu0 0
        %2782 = vmatpush1.bf16.msra.mxu0 %v2730
        %2783 = vmatprep.subr.bf16.mxu0 0
        %2784 = vmatpush2.bf16.msra.mxu0 0
        %2785 = vmatprep.subr.bf16.mxu0 0
        %2786 = vmatpush2.bf16.msra.mxu0 0
        %2787 = vmatprep.subr.bf16.mxu0 0
        %2788 = vmatpush2.bf16.msra.mxu0 0
        %2789 = vmatprep.subr.bf16.mxu0 0
        %2790 = vmatpush2.bf16.msra.mxu0 0
        %2791 = vmatprep.subr.bf16.mxu0 0
        %2792 = vmatpush2.bf16.msra.mxu0 0
        %2793 = vmatprep.subr.bf16.mxu0 0
        %2794 = vmatpush2.bf16.msra.mxu0 0
        %2795 = vmatprep.subr.bf16.mxu0 0
        %2796 = vmatpush2.bf16.msra.mxu0 0
        %2797 = vmatprep.subr.bf16.mxu0 0
        %2798 = vmatpush2.bf16.msra.mxu0 0
        %2799 = vmatprep.mubr.bf16.mxu0 0
        %2800 = vmatmul.mubr.bf16.gmra.mxu0 %v2744
        %v2801 = vpop.f32.mrf.mxu0
        %v2802 = vadd.f32 0.0, %v2801
        %v2803 = vpop.f32.mrf.mxu0
        %v2804 = vpop.f32.mrf.mxu0
        %v2805 = vadd.f32 0.0, %v2804
        %v2806 = vpop.f32.mrf.mxu0
        %2807 = vmatprep.mubr.bf16.mxu0 0
        %2808 = vmatmul.mubr.bf16.gmra.mxu0 %v2747
        %v2809 = vpop.f32.mrf.mxu0
        %v2810 = vadd.f32 0.0, %v2809
        %v2811 = vpop.f32.mrf.mxu0
        %v2812 = vpop.f32.mrf.mxu0
        %v2813 = vadd.f32 0.0, %v2812
        %v2814 = vpop.f32.mrf.mxu0
        %2815 = vmatprep.mubr.bf16.mxu0 0
        %2816 = vmatmul.mubr.bf16.gmra.mxu0 %v2750
        %v2817 = vpop.f32.mrf.mxu0
        %v2818 = vadd.f32 0.0, %v2817
        %v2819 = vpop.f32.mrf.mxu0
        %v2820 = vpop.f32.mrf.mxu0
        %v2821 = vadd.f32 0.0, %v2820
        %v2822 = vpop.f32.mrf.mxu0
        %2823 = vmatprep.mubr.bf16.mxu0 0
        %2824 = vmatmul.mubr.bf16.gmra.mxu0 %v2753
        %v2825 = vpop.f32.mrf.mxu0
        %v2826 = vadd.f32 0.0, %v2825
        %v2827 = vpop.f32.mrf.mxu0
        %v2828 = vpop.f32.mrf.mxu0
        %v2829 = vadd.f32 0.0, %v2828
        %v2830 = vpop.f32.mrf.mxu0
        %2831 = vmatprep.mubr.bf16.mxu0 0
        %2832 = vmatmul.mubr.bf16.gmra.mxu0 %v2756
        %v2833 = vpop.f32.mrf.mxu0
        %v2834 = vadd.f32 0.0, %v2833
        %v2835 = vpop.f32.mrf.mxu0
        %v2836 = vpop.f32.mrf.mxu0
        %v2837 = vadd.f32 0.0, %v2836
        %v2838 = vpop.f32.mrf.mxu0
        %2839 = vmatprep.mubr.bf16.mxu0 0
        %2840 = vmatmul.mubr.bf16.gmra.mxu0 %v2759
        %v2841 = vpop.f32.mrf.mxu0
        %v2842 = vadd.f32 0.0, %v2841
        %v2843 = vpop.f32.mrf.mxu0
        %v2844 = vpop.f32.mrf.mxu0
        %v2845 = vadd.f32 0.0, %v2844
        %v2846 = vpop.f32.mrf.mxu0
        %2847 = vmatprep.mubr.bf16.mxu0 0
        %2848 = vmatmul.mubr.bf16.gmra.mxu0 %v2762
        %v2849 = vpop.f32.mrf.mxu0
        %v2850 = vadd.f32 0.0, %v2849
        %v2851 = vpop.f32.mrf.mxu0
        %v2852 = vpop.f32.mrf.mxu0
        %v2853 = vadd.f32 0.0, %v2852
        %v2854 = vpop.f32.mrf.mxu0
        %2855 = vmatprep.mubr.bf16.mxu0 0
        %2856 = vmatmul.mubr.bf16.gmra.mxu0 %v2765
        %v2857 = vpop.f32.mrf.mxu0
        %v2858 = vadd.f32 0.0, %v2857
        %v2859 = vpop.f32.mrf.mxu0
        %v2860 = vpop.f32.mrf.mxu0
        %v2861 = vadd.f32 0.0, %v2860
        %v2862 = vpop.f32.mrf.mxu0
        %2863 = vdwg.mxu0
        %v2880 = vunpack.c.l.b16 %v2670
        %v2881 = vunpack.c.l.b16 %v2671
        %v2882 = vunpack.c.l.b16 %v2672
        %v2883 = vunpack.c.l.b16 %v2673
        %v2884 = vunpack.c.l.b16 %v2674
        %v2885 = vunpack.c.l.b16 %v2675
        %v2886 = vunpack.c.l.b16 %v2676
        %v2887 = vunpack.c.l.b16 %v2677
        %v2888 = vunpack.c.l.b16 %v2678
        %v2889 = vunpack.c.l.b16 %v2679
        %v2890 = vunpack.c.l.b16 %v2680
        %v2891 = vunpack.c.l.b16 %v2681
        %v2892 = vunpack.c.l.b16 %v2682
        %v2893 = vunpack.c.l.b16 %v2683
        %v2894 = vunpack.c.l.b16 %v2684
        %v2895 = vunpack.c.l.b16 %v2685
        %v2896 = vpack.c.b16 %v2881, %v2880
        %v2897 = vpack.c.b16 %v2883, %v2882
        %v2898 = vpack.c.b16 %v2885, %v2884
        %v2899 = vpack.c.b16 %v2887, %v2886
        %v2900 = vpack.c.b16 %v2889, %v2888
        %v2901 = vpack.c.b16 %v2891, %v2890
        %v2902 = vpack.c.b16 %v2893, %v2892
        %v2903 = vpack.c.b16 %v2895, %v2894
        %2912 = vmatprep.subr.bf16.mxu0 0
        %2913 = vmatpush1.bf16.msra.mxu0 %v2903
        %2914 = vmatprep.subr.bf16.mxu0 0
        %2915 = vmatpush1.bf16.msra.mxu0 %v2902
        %2916 = vmatprep.subr.bf16.mxu0 0
        %2917 = vmatpush1.bf16.msra.mxu0 %v2901
        %2918 = vmatprep.subr.bf16.mxu0 0
        %2919 = vmatpush1.bf16.msra.mxu0 %v2900
        %2920 = vmatprep.subr.bf16.mxu0 0
        %2921 = vmatpush1.bf16.msra.mxu0 %v2899
        %2922 = vmatprep.subr.bf16.mxu0 0
        %2923 = vmatpush1.bf16.msra.mxu0 %v2898
        %2924 = vmatprep.subr.bf16.mxu0 0
        %2925 = vmatpush1.bf16.msra.mxu0 %v2897
        %2926 = vmatprep.subr.bf16.mxu0 0
        %2927 = vmatpush1.bf16.msra.mxu0 %v2896
        %2928 = vmatprep.subr.bf16.mxu0 0
        %2929 = vmatpush2.bf16.msra.mxu0 0
        %2930 = vmatprep.subr.bf16.mxu0 0
        %2931 = vmatpush2.bf16.msra.mxu0 0
        %2932 = vmatprep.subr.bf16.mxu0 0
        %2933 = vmatpush2.bf16.msra.mxu0 0
        %2934 = vmatprep.subr.bf16.mxu0 0
        %2935 = vmatpush2.bf16.msra.mxu0 0
        %2936 = vmatprep.subr.bf16.mxu0 0
        %2937 = vmatpush2.bf16.msra.mxu0 0
        %2938 = vmatprep.subr.bf16.mxu0 0
        %2939 = vmatpush2.bf16.msra.mxu0 0
        %2940 = vmatprep.subr.bf16.mxu0 0
        %2941 = vmatpush2.bf16.msra.mxu0 0
        %2942 = vmatprep.subr.bf16.mxu0 0
        %2943 = vmatpush2.bf16.msra.mxu0 0
        %2944 = vmatprep.mubr.bf16.mxu0 0
        %2945 = vmatmul.mubr.bf16.gmra.mxu0 %v2662
        %v2946 = vpop.f32.mrf.mxu0
        %v2947 = vadd.f32 %v2802, %v2946
        %v2948 = vpop.f32.mrf.mxu0
        %v2949 = vpop.f32.mrf.mxu0
        %v2950 = vadd.f32 %v2805, %v2949
        %v2951 = vpop.f32.mrf.mxu0
        %2952 = vmatprep.mubr.bf16.mxu0 0
        %2953 = vmatmul.mubr.bf16.gmra.mxu0 %v2663
        %v2954 = vpop.f32.mrf.mxu0
        %v2955 = vadd.f32 %v2810, %v2954
        %v2956 = vpop.f32.mrf.mxu0
        %v2957 = vpop.f32.mrf.mxu0
        %v2958 = vadd.f32 %v2813, %v2957
        %v2959 = vpop.f32.mrf.mxu0
        %2960 = vmatprep.mubr.bf16.mxu0 0
        %2961 = vmatmul.mubr.bf16.gmra.mxu0 %v2664
        %v2962 = vpop.f32.mrf.mxu0
        %v2963 = vadd.f32 %v2818, %v2962
        %v2964 = vpop.f32.mrf.mxu0
        %v2965 = vpop.f32.mrf.mxu0
        %v2966 = vadd.f32 %v2821, %v2965
        %v2967 = vpop.f32.mrf.mxu0
        %2968 = vmatprep.mubr.bf16.mxu0 0
        %2969 = vmatmul.mubr.bf16.gmra.mxu0 %v2665
        %v2970 = vpop.f32.mrf.mxu0
        %v2971 = vadd.f32 %v2826, %v2970
        %v2972 = vpop.f32.mrf.mxu0
        %v2973 = vpop.f32.mrf.mxu0
        %v2974 = vadd.f32 %v2829, %v2973
        %v2975 = vpop.f32.mrf.mxu0
        %2976 = vmatprep.mubr.bf16.mxu0 0
        %2977 = vmatmul.mubr.bf16.gmra.mxu0 %v2666
        %v2978 = vpop.f32.mrf.mxu0
        %v2979 = vadd.f32 %v2834, %v2978
        %v2980 = vpop.f32.mrf.mxu0
        %v2981 = vpop.f32.mrf.mxu0
        %v2982 = vadd.f32 %v2837, %v2981
        %v2983 = vpop.f32.mrf.mxu0
        %2984 = vmatprep.mubr.bf16.mxu0 0
        %2985 = vmatmul.mubr.bf16.gmra.mxu0 %v2667
        %v2986 = vpop.f32.mrf.mxu0
        %v2987 = vadd.f32 %v2842, %v2986
        %v2988 = vpop.f32.mrf.mxu0
        %v2989 = vpop.f32.mrf.mxu0
        %v2990 = vadd.f32 %v2845, %v2989
        %v2991 = vpop.f32.mrf.mxu0
        %2992 = vmatprep.mubr.bf16.mxu0 0
        %2993 = vmatmul.mubr.bf16.gmra.mxu0 %v2668
        %v2994 = vpop.f32.mrf.mxu0
        %v2995 = vadd.f32 %v2850, %v2994
        %v2996 = vpop.f32.mrf.mxu0
        %v2997 = vpop.f32.mrf.mxu0
        %v2998 = vadd.f32 %v2853, %v2997
        %v2999 = vpop.f32.mrf.mxu0
        %3000 = vmatprep.mubr.bf16.mxu0 0
        %3001 = vmatmul.mubr.bf16.gmra.mxu0 %v2669
        %v3002 = vpop.f32.mrf.mxu0
        %v3003 = vadd.f32 %v2858, %v3002
        %v3004 = vpop.f32.mrf.mxu0
        %v3005 = vpop.f32.mrf.mxu0
        %v3006 = vadd.f32 %v2861, %v3005
        %v3007 = vpop.f32.mrf.mxu0
        %3008 = vdwg.mxu0
        %v3009 = vld [vmem:[%s7] sm:$0x1]
        %v3011 = vlaneseq
        %v3012 = vshrl.u32 %v3011, 7
        %v3013 = vsub.s32 0, %v3012
        %v3014 = vrot.slane %v3009, %v3013
        %v3016 = vadd.f32 %v2947, %v3014
        %v3017 = vadd.f32 %v2950, %v3014
        %v3018 = vadd.f32 %v2955, %v3014
        %v3019 = vadd.f32 %v2958, %v3014
        %v3020 = vadd.f32 %v2963, %v3014
        %v3021 = vadd.f32 %v2966, %v3014
        %v3022 = vadd.f32 %v2971, %v3014
        %v3023 = vadd.f32 %v2974, %v3014
        %v3024 = vadd.f32 %v2979, %v3014
        %v3025 = vadd.f32 %v2982, %v3014
        %v3026 = vadd.f32 %v2987, %v3014
        %v3027 = vadd.f32 %v2990, %v3014
        %v3028 = vadd.f32 %v2995, %v3014
        %v3029 = vadd.f32 %v2998, %v3014
        %v3030 = vadd.f32 %v3003, %v3014
        %v3031 = vadd.f32 %v3006, %v3014
        %v3032 = vmax.f32 %v3016, 0.0
        %v3033 = vmax.f32 %v3017, 0.0
        %v3034 = vmax.f32 %v3018, 0.0
        %v3035 = vmax.f32 %v3019, 0.0
        %v3036 = vmax.f32 %v3020, 0.0
        %v3037 = vmax.f32 %v3021, 0.0
        %v3038 = vmax.f32 %v3022, 0.0
        %v3039 = vmax.f32 %v3023, 0.0
        %v3040 = vmax.f32 %v3024, 0.0
        %v3041 = vmax.f32 %v3025, 0.0
        %v3042 = vmax.f32 %v3026, 0.0
        %v3043 = vmax.f32 %v3027, 0.0
        %v3044 = vmax.f32 %v3028, 0.0
        %v3045 = vmax.f32 %v3029, 0.0
        %v3046 = vmax.f32 %v3030, 0.0
        %v3047 = vmax.f32 %v3031, 0.0
        %v3048 = vpack.c.bf16 %v3033, %v3032
        %v3049 = vpack.c.bf16 %v3035, %v3034
        %v3050 = vpack.c.bf16 %v3037, %v3036
        %v3051 = vpack.c.bf16 %v3039, %v3038
        %v3052 = vpack.c.bf16 %v3041, %v3040
        %v3053 = vpack.c.bf16 %v3043, %v3042
        %v3054 = vpack.c.bf16 %v3045, %v3044
        %v3055 = vpack.c.bf16 %v3047, %v3046
        %v3056 = vld [vmem:[%s8] sm:$0xf]
        %v3057 = vld [vmem:[%s8 + $0x4] sm:$0xf]
        %v3058 = vld [vmem:[%s8 + $0x8] sm:$0xf]
        %v3059 = vld [vmem:[%s8 + $0xc] sm:$0xf]
        %v3060 = vld [vmem:[%s8 + $0x10] sm:$0xf]
        %v3061 = vld [vmem:[%s8 + $0x14] sm:$0xf]
        %v3062 = vld [vmem:[%s8 + $0x18] sm:$0xf]
        %v3063 = vld [vmem:[%s8 + $0x1c] sm:$0xf]
        %v3064 = vld [vmem:[%s8 + $0x20] sm:$0xf]
        %v3065 = vld [vmem:[%s8 + $0x24] sm:$0xf]
        %v3066 = vld [vmem:[%s8 + $0x28] sm:$0xf]
        %v3067 = vld [vmem:[%s8 + $0x2c] sm:$0xf]
        %v3068 = vld [vmem:[%s8 + $0x30] sm:$0xf]
        %v3069 = vld [vmem:[%s8 + $0x34] sm:$0xf]
        %v3070 = vld [vmem:[%s8 + $0x38] sm:$0xf]
        %v3071 = vld [vmem:[%s8 + $0x3c] sm:$0xf]
        %v3072 = vld [vmem:[%s9] sm:$0x1]
        %v3074 = vlaneseq
        %v3075 = vshrl.u32 %v3074, 7
        %v3076 = vsub.s32 0, %v3075
        %v3077 = vrot.slane %v3072, %v3076
        %v3095 = vunpack.c.l.b16 %v3056
        %v3096 = vunpack.c.l.b16 %v3057
        %v3097 = vunpack.c.l.b16 %v3058
        %v3098 = vunpack.c.l.b16 %v3059
        %v3099 = vunpack.c.l.b16 %v3060
        %v3100 = vunpack.c.l.b16 %v3061
        %v3101 = vunpack.c.l.b16 %v3062
        %v3102 = vunpack.c.l.b16 %v3063
        %v3103 = vunpack.c.l.b16 %v3064
        %v3104 = vunpack.c.l.b16 %v3065
        %v3105 = vunpack.c.l.b16 %v3066
        %v3106 = vunpack.c.l.b16 %v3067
        %v3107 = vunpack.c.l.b16 %v3068
        %v3108 = vunpack.c.l.b16 %v3069
        %v3109 = vunpack.c.l.b16 %v3070
        %v3110 = vunpack.c.l.b16 %v3071
        %v3111 = vpack.c.b16 %v3096, %v3095
        %v3112 = vpack.c.b16 %v3098, %v3097
        %v3113 = vpack.c.b16 %v3100, %v3099
        %v3114 = vpack.c.b16 %v3102, %v3101
        %v3115 = vpack.c.b16 %v3104, %v3103
        %v3116 = vpack.c.b16 %v3106, %v3105
        %v3117 = vpack.c.b16 %v3108, %v3107
        %v3118 = vpack.c.b16 %v3110, %v3109
        %3127 = vmatprep.subr.bf16.mxu0 0
        %3128 = vmatpush1.bf16.msra.mxu0 %v3118
        %3129 = vmatprep.subr.bf16.mxu0 0
        %3130 = vmatpush1.bf16.msra.mxu0 %v3117
        %3131 = vmatprep.subr.bf16.mxu0 0
        %3132 = vmatpush1.bf16.msra.mxu0 %v3116
        %3133 = vmatprep.subr.bf16.mxu0 0
        %3134 = vmatpush1.bf16.msra.mxu0 %v3115
        %3135 = vmatprep.subr.bf16.mxu0 0
        %3136 = vmatpush1.bf16.msra.mxu0 %v3114
        %3137 = vmatprep.subr.bf16.mxu0 0
        %3138 = vmatpush1.bf16.msra.mxu0 %v3113
        %3139 = vmatprep.subr.bf16.mxu0 0
        %3140 = vmatpush1.bf16.msra.mxu0 %v3112
        %3141 = vmatprep.subr.bf16.mxu0 0
        %3142 = vmatpush1.bf16.msra.mxu0 %v3111
        %3143 = vmatprep.subr.bf16.mxu0 0
        %3144 = vmatpush2.bf16.msra.mxu0 0
        %3145 = vmatprep.subr.bf16.mxu0 0
        %3146 = vmatpush2.bf16.msra.mxu0 0
        %3147 = vmatprep.subr.bf16.mxu0 0
        %3148 = vmatpush2.bf16.msra.mxu0 0
        %3149 = vmatprep.subr.bf16.mxu0 0
        %3150 = vmatpush2.bf16.msra.mxu0 0
        %3151 = vmatprep.subr.bf16.mxu0 0
        %3152 = vmatpush2.bf16.msra.mxu0 0
        %3153 = vmatprep.subr.bf16.mxu0 0
        %3154 = vmatpush2.bf16.msra.mxu0 0
        %3155 = vmatprep.subr.bf16.mxu0 0
        %3156 = vmatpush2.bf16.msra.mxu0 0
        %3157 = vmatprep.subr.bf16.mxu0 0
        %3158 = vmatpush2.bf16.msra.mxu0 0
        %3159 = vmatprep.mubr.bf16.mxu0 0
        %3160 = vmatmul.mubr.bf16.gmra.mxu0 %v3048
        %v3161 = vpop.f32.mrf.mxu0
        %v3162 = vadd.f32 %v3077, %v3161
        %v3163 = vpop.f32.mrf.mxu0
        %v3164 = vpop.f32.mrf.mxu0
        %v3165 = vadd.f32 %v3077, %v3164
        %v3166 = vpop.f32.mrf.mxu0
        %3167 = vmatprep.mubr.bf16.mxu0 0
        %3168 = vmatmul.mubr.bf16.gmra.mxu0 %v3049
        %v3169 = vpop.f32.mrf.mxu0
        %v3170 = vadd.f32 %v3077, %v3169
        %v3171 = vpop.f32.mrf.mxu0
        %v3172 = vpop.f32.mrf.mxu0
        %v3173 = vadd.f32 %v3077, %v3172
        %v3174 = vpop.f32.mrf.mxu0
        %3175 = vmatprep.mubr.bf16.mxu0 0
        %3176 = vmatmul.mubr.bf16.gmra.mxu0 %v3050
        %v3177 = vpop.f32.mrf.mxu0
        %v3178 = vadd.f32 %v3077, %v3177
        %v3179 = vpop.f32.mrf.mxu0
        %v3180 = vpop.f32.mrf.mxu0
        %v3181 = vadd.f32 %v3077, %v3180
        %v3182 = vpop.f32.mrf.mxu0
        %3183 = vmatprep.mubr.bf16.mxu0 0
        %3184 = vmatmul.mubr.bf16.gmra.mxu0 %v3051
        %v3185 = vpop.f32.mrf.mxu0
        %v3186 = vadd.f32 %v3077, %v3185
        %v3187 = vpop.f32.mrf.mxu0
        %v3188 = vpop.f32.mrf.mxu0
        %v3189 = vadd.f32 %v3077, %v3188
        %v3190 = vpop.f32.mrf.mxu0
        %3191 = vmatprep.mubr.bf16.mxu0 0
        %3192 = vmatmul.mubr.bf16.gmra.mxu0 %v3052
        %v3193 = vpop.f32.mrf.mxu0
        %v3194 = vadd.f32 %v3077, %v3193
        %v3195 = vpop.f32.mrf.mxu0
        %v3196 = vpop.f32.mrf.mxu0
        %v3197 = vadd.f32 %v3077, %v3196
        %v3198 = vpop.f32.mrf.mxu0
        %3199 = vmatprep.mubr.bf16.mxu0 0
        %3200 = vmatmul.mubr.bf16.gmra.mxu0 %v3053
        %v3201 = vpop.f32.mrf.mxu0
        %v3202 = vadd.f32 %v3077, %v3201
        %v3203 = vpop.f32.mrf.mxu0
        %v3204 = vpop.f32.mrf.mxu0
        %v3205 = vadd.f32 %v3077, %v3204
        %v3206 = vpop.f32.mrf.mxu0
        %3207 = vmatprep.mubr.bf16.mxu0 0
        %3208 = vmatmul.mubr.bf16.gmra.mxu0 %v3054
        %v3209 = vpop.f32.mrf.mxu0
        %v3210 = vadd.f32 %v3077, %v3209
        %v3211 = vpop.f32.mrf.mxu0
        %v3212 = vpop.f32.mrf.mxu0
        %v3213 = vadd.f32 %v3077, %v3212
        %v3214 = vpop.f32.mrf.mxu0
        %3215 = vmatprep.mubr.bf16.mxu0 0
        %3216 = vmatmul.mubr.bf16.gmra.mxu0 %v3055
        %v3217 = vpop.f32.mrf.mxu0
        %v3218 = vadd.f32 %v3077, %v3217
        %v3219 = vpop.f32.mrf.mxu0
        %v3220 = vpop.f32.mrf.mxu0
        %v3221 = vadd.f32 %v3077, %v3220
        %v3222 = vpop.f32.mrf.mxu0
        %3223 = vdwg.mxu0
        %v3224 = vpack.c.bf16 %v2202, %v2198
        %v3225 = vpack.c.bf16 %v2204, %v2200
        %v3226 = vpack.c.bf16 %v2411, %v2408
        %v3227 = vpack.c.bf16 %v2212, %v2208
        %v3228 = vpack.c.bf16 %v2214, %v2210
        %v3229 = vpack.c.bf16 %v2419, %v2416
        %v3230 = vpack.c.bf16 %v2222, %v2218
        %v3231 = vpack.c.bf16 %v2224, %v2220
        %v3232 = vpack.c.bf16 %v2427, %v2424
        %v3233 = vpack.c.bf16 %v2232, %v2228
        %v3234 = vpack.c.bf16 %v2234, %v2230
        %v3235 = vpack.c.bf16 %v2435, %v2432
        %v3236 = vpack.c.bf16 %v2242, %v2238
        %v3237 = vpack.c.bf16 %v2244, %v2240
        %v3238 = vpack.c.bf16 %v2443, %v2440
        %v3239 = vpack.c.bf16 %v2252, %v2248
        %v3240 = vpack.c.bf16 %v2254, %v2250
        %v3241 = vpack.c.bf16 %v2451, %v2448
        %v3242 = vpack.c.bf16 %v2262, %v2258
        %v3243 = vpack.c.bf16 %v2264, %v2260
        %v3244 = vpack.c.bf16 %v2459, %v2456
        %v3245 = vpack.c.bf16 %v2272, %v2268
        %v3246 = vpack.c.bf16 %v2274, %v2270
        %v3247 = vpack.c.bf16 %v2467, %v2464
        %v3248 = vld [vmem:[%s10] sm:$0xf]
        %v3249 = vld [vmem:[%s10 + $0x4] sm:$0xf]
        %v3250 = vld [vmem:[%s10 + $0x8] sm:$0xf]
        %v3251 = vld [vmem:[%s10 + $0xc] sm:$0xf]
        %v3252 = vld [vmem:[%s10 + $0x10] sm:$0xf]
        %v3253 = vld [vmem:[%s10 + $0x14] sm:$0xf]
        %v3254 = vld [vmem:[%s10 + $0x18] sm:$0xf]
        %v3255 = vld [vmem:[%s10 + $0x1c] sm:$0xf]
        %v3256 = vld [vmem:[%s10 + $0x20] sm:$0xf]
        %v3257 = vld [vmem:[%s10 + $0x24] sm:$0xf]
        %v3258 = vld [vmem:[%s10 + $0x28] sm:$0xf]
        %v3259 = vld [vmem:[%s10 + $0x2c] sm:$0xf]
        %v3260 = vld [vmem:[%s10 + $0x30] sm:$0xf]
        %v3261 = vld [vmem:[%s10 + $0x34] sm:$0xf]
        %v3262 = vld [vmem:[%s10 + $0x38] sm:$0xf]
        %v3263 = vld [vmem:[%s10 + $0x3c] sm:$0xf]
        %v3264 = vld [vmem:[%s10 + $0x40] sm:$0xf]
        %v3265 = vld [vmem:[%s10 + $0x44] sm:$0xf]
        %v3266 = vld [vmem:[%s10 + $0x48] sm:$0xf]
        %v3267 = vld [vmem:[%s10 + $0x4c] sm:$0xf]
        %v3268 = vld [vmem:[%s10 + $0x50] sm:$0xf]
        %v3269 = vld [vmem:[%s10 + $0x54] sm:$0xf]
        %v3270 = vld [vmem:[%s10 + $0x58] sm:$0xf]
        %v3271 = vld [vmem:[%s10 + $0x5c] sm:$0xf]
        %v3272 = vld [vmem:[%s10 + $0x60] sm:$0xf]
        %v3273 = vld [vmem:[%s10 + $0x64] sm:$0xf]
        %v3274 = vld [vmem:[%s10 + $0x68] sm:$0xf]
        %v3275 = vld [vmem:[%s10 + $0x6c] sm:$0xf]
        %v3276 = vld [vmem:[%s10 + $0x70] sm:$0xf]
        %v3277 = vld [vmem:[%s10 + $0x74] sm:$0xf]
        %v3278 = vld [vmem:[%s10 + $0x78] sm:$0xf]
        %v3279 = vld [vmem:[%s10 + $0x7c] sm:$0xf]
        %v3280 = vld [vmem:[%s10 + $0x80] sm:$0xf]
        %v3281 = vld [vmem:[%s10 + $0x84] sm:$0xf]
        %v3282 = vld [vmem:[%s10 + $0x88] sm:$0xf]
        %v3283 = vld [vmem:[%s10 + $0x8c] sm:$0xf]
        %v3284 = vld [vmem:[%s10 + $0x90] sm:$0xf]
        %v3285 = vld [vmem:[%s10 + $0x94] sm:$0xf]
        %v3286 = vld [vmem:[%s10 + $0x98] sm:$0xf]
        %v3287 = vld [vmem:[%s10 + $0x9c] sm:$0xf]
        %v3288 = vld [vmem:[%s10 + $0xa0] sm:$0xf]
        %v3289 = vld [vmem:[%s10 + $0xa4] sm:$0xf]
        %v3290 = vld [vmem:[%s10 + $0xa8] sm:$0xf]
        %v3291 = vld [vmem:[%s10 + $0xac] sm:$0xf]
        %v3292 = vld [vmem:[%s10 + $0xb0] sm:$0xf]
        %v3293 = vld [vmem:[%s10 + $0xb4] sm:$0xf]
        %v3294 = vld [vmem:[%s10 + $0xb8] sm:$0xf]
        %v3295 = vld [vmem:[%s10 + $0xbc] sm:$0xf]
        %v3296 = vld [vmem:[%s11] sm:$0x1]
        %v3298 = vlaneseq
        %v3299 = vshrl.u32 %v3298, 7
        %v3300 = vsub.s32 0, %v3299
        %v3301 = vrot.slane %v3296, %v3300
        %v3351 = vunpack.c.l.b16 %v3248
        %v3352 = vunpack.c.l.b16 %v3249
        %v3353 = vunpack.c.l.b16 %v3250
        %v3354 = vunpack.c.l.b16 %v3251
        %v3355 = vunpack.c.l.b16 %v3252
        %v3356 = vunpack.c.l.b16 %v3253
        %v3357 = vunpack.c.l.b16 %v3254
        %v3358 = vunpack.c.l.b16 %v3255
        %v3359 = vunpack.c.l.b16 %v3256
        %v3360 = vunpack.c.l.b16 %v3257
        %v3361 = vunpack.c.l.b16 %v3258
        %v3362 = vunpack.c.l.b16 %v3259
        %v3363 = vunpack.c.l.b16 %v3260
        %v3364 = vunpack.c.l.b16 %v3261
        %v3365 = vunpack.c.l.b16 %v3262
        %v3366 = vunpack.c.l.b16 %v3263
        %v3367 = vunpack.c.l.b16 %v3264
        %v3368 = vunpack.c.l.b16 %v3265
        %v3369 = vunpack.c.l.b16 %v3266
        %v3370 = vunpack.c.l.b16 %v3267
        %v3371 = vunpack.c.l.b16 %v3268
        %v3372 = vunpack.c.l.b16 %v3269
        %v3373 = vunpack.c.l.b16 %v3270
        %v3374 = vunpack.c.l.b16 %v3271
        %v3375 = vunpack.c.l.b16 %v3272
        %v3376 = vunpack.c.l.b16 %v3273
        %v3377 = vunpack.c.l.b16 %v3274
        %v3378 = vunpack.c.l.b16 %v3275
        %v3379 = vunpack.c.l.b16 %v3276
        %v3380 = vunpack.c.l.b16 %v3277
        %v3381 = vunpack.c.l.b16 %v3278
        %v3382 = vunpack.c.l.b16 %v3279
        %v3383 = vunpack.c.l.b16 %v3280
        %v3384 = vunpack.c.l.b16 %v3281
        %v3385 = vunpack.c.l.b16 %v3282
        %v3386 = vunpack.c.l.b16 %v3283
        %v3387 = vunpack.c.l.b16 %v3284
        %v3388 = vunpack.c.l.b16 %v3285
        %v3389 = vunpack.c.l.b16 %v3286
        %v3390 = vunpack.c.l.b16 %v3287
        %v3391 = vunpack.c.l.b16 %v3288
        %v3392 = vunpack.c.l.b16 %v3289
        %v3393 = vunpack.c.l.b16 %v3290
        %v3394 = vunpack.c.l.b16 %v3291
        %v3395 = vunpack.c.l.b16 %v3292
        %v3396 = vunpack.c.l.b16 %v3293
        %v3397 = vunpack.c.l.b16 %v3294
        %v3398 = vunpack.c.l.b16 %v3295
        %v3399 = vpack.c.b16 %v3352, %v3351
        %v3400 = vpack.c.b16 %v3354, %v3353
        %v3401 = vpack.c.b16 %v3356, %v3355
        %v3402 = vpack.c.b16 %v3358, %v3357
        %v3403 = vpack.c.b16 %v3360, %v3359
        %v3404 = vpack.c.b16 %v3362, %v3361
        %v3405 = vpack.c.b16 %v3364, %v3363
        %v3406 = vpack.c.b16 %v3366, %v3365
        %v3407 = vpack.c.b16 %v3368, %v3367
        %v3408 = vpack.c.b16 %v3370, %v3369
        %v3409 = vpack.c.b16 %v3372, %v3371
        %v3410 = vpack.c.b16 %v3374, %v3373
        %v3411 = vpack.c.b16 %v3376, %v3375
        %v3412 = vpack.c.b16 %v3378, %v3377
        %v3413 = vpack.c.b16 %v3380, %v3379
        %v3414 = vpack.c.b16 %v3382, %v3381
        %v3415 = vpack.c.b16 %v3384, %v3383
        %v3416 = vpack.c.b16 %v3386, %v3385
        %v3417 = vpack.c.b16 %v3388, %v3387
        %v3418 = vpack.c.b16 %v3390, %v3389
        %v3419 = vpack.c.b16 %v3392, %v3391
        %v3420 = vpack.c.b16 %v3394, %v3393
        %v3421 = vpack.c.b16 %v3396, %v3395
        %v3422 = vpack.c.b16 %v3398, %v3397
        %3447 = vmatprep.subr.bf16.mxu0 0
        %3448 = vmatpush1.bf16.msra.mxu0 %v3406
        %3449 = vmatprep.subr.bf16.mxu0 0
        %3450 = vmatpush1.bf16.msra.mxu0 %v3405
        %3451 = vmatprep.subr.bf16.mxu0 0
        %3452 = vmatpush1.bf16.msra.mxu0 %v3404
        %3453 = vmatprep.subr.bf16.mxu0 0
        %3454 = vmatpush1.bf16.msra.mxu0 %v3403
        %3455 = vmatprep.subr.bf16.mxu0 0
        %3456 = vmatpush1.bf16.msra.mxu0 %v3402
        %3457 = vmatprep.subr.bf16.mxu0 0
        %3458 = vmatpush1.bf16.msra.mxu0 %v3401
        %3459 = vmatprep.subr.bf16.mxu0 0
        %3460 = vmatpush1.bf16.msra.mxu0 %v3400
        %3461 = vmatprep.subr.bf16.mxu0 0
        %3462 = vmatpush1.bf16.msra.mxu0 %v3399
        %3463 = vmatprep.subr.bf16.mxu0 0
        %3464 = vmatpush2.bf16.msra.mxu0 %v3414
        %3465 = vmatprep.subr.bf16.mxu0 0
        %3466 = vmatpush2.bf16.msra.mxu0 %v3413
        %3467 = vmatprep.subr.bf16.mxu0 0
        %3468 = vmatpush2.bf16.msra.mxu0 %v3412
        %3469 = vmatprep.subr.bf16.mxu0 0
        %3470 = vmatpush2.bf16.msra.mxu0 %v3411
        %3471 = vmatprep.subr.bf16.mxu0 0
        %3472 = vmatpush2.bf16.msra.mxu0 %v3410
        %3473 = vmatprep.subr.bf16.mxu0 0
        %3474 = vmatpush2.bf16.msra.mxu0 %v3409
        %3475 = vmatprep.subr.bf16.mxu0 0
        %3476 = vmatpush2.bf16.msra.mxu0 %v3408
        %3477 = vmatprep.subr.bf16.mxu0 0
        %3478 = vmatpush2.bf16.msra.mxu0 %v3407
        %3479 = vmatprep.mubr.bf16.mxu0 %v3225
        %3480 = vmatmul.mubr.bf16.gmra.mxu0 %v3224
        %v3481 = vpop.f32.mrf.mxu0
        %v3482 = vadd.f32 %v3301, %v3481
        %v3483 = vpop.f32.mrf.mxu0
        %v3484 = vpop.f32.mrf.mxu0
        %v3485 = vadd.f32 %v3301, %v3484
        %v3486 = vpop.f32.mrf.mxu0
        %3487 = vmatprep.mubr.bf16.mxu0 %v3228
        %3488 = vmatmul.mubr.bf16.gmra.mxu0 %v3227
        %v3489 = vpop.f32.mrf.mxu0
        %v3490 = vadd.f32 %v3301, %v3489
        %v3491 = vpop.f32.mrf.mxu0
        %v3492 = vpop.f32.mrf.mxu0
        %v3493 = vadd.f32 %v3301, %v3492
        %v3494 = vpop.f32.mrf.mxu0
        %3495 = vmatprep.mubr.bf16.mxu0 %v3231
        %3496 = vmatmul.mubr.bf16.gmra.mxu0 %v3230
        %v3497 = vpop.f32.mrf.mxu0
        %v3498 = vadd.f32 %v3301, %v3497
        %v3499 = vpop.f32.mrf.mxu0
        %v3500 = vpop.f32.mrf.mxu0
        %v3501 = vadd.f32 %v3301, %v3500
        %v3502 = vpop.f32.mrf.mxu0
        %3503 = vmatprep.mubr.bf16.mxu0 %v3234
        %3504 = vmatmul.mubr.bf16.gmra.mxu0 %v3233
        %v3505 = vpop.f32.mrf.mxu0
        %v3506 = vadd.f32 %v3301, %v3505
        %v3507 = vpop.f32.mrf.mxu0
        %v3508 = vpop.f32.mrf.mxu0
        %v3509 = vadd.f32 %v3301, %v3508
        %v3510 = vpop.f32.mrf.mxu0
        %3511 = vmatprep.mubr.bf16.mxu0 %v3237
        %3512 = vmatmul.mubr.bf16.gmra.mxu0 %v3236
        %v3513 = vpop.f32.mrf.mxu0
        %v3514 = vadd.f32 %v3301, %v3513
        %v3515 = vpop.f32.mrf.mxu0
        %v3516 = vpop.f32.mrf.mxu0
        %v3517 = vadd.f32 %v3301, %v3516
        %v3518 = vpop.f32.mrf.mxu0
        %3519 = vmatprep.mubr.bf16.mxu0 %v3240
        %3520 = vmatmul.mubr.bf16.gmra.mxu0 %v3239
        %v3521 = vpop.f32.mrf.mxu0
        %v3522 = vadd.f32 %v3301, %v3521
        %v3523 = vpop.f32.mrf.mxu0
        %v3524 = vpop.f32.mrf.mxu0
        %v3525 = vadd.f32 %v3301, %v3524
        %v3526 = vpop.f32.mrf.mxu0
        %3527 = vmatprep.mubr.bf16.mxu0 %v3243
        %3528 = vmatmul.mubr.bf16.gmra.mxu0 %v3242
        %v3529 = vpop.f32.mrf.mxu0
        %v3530 = vadd.f32 %v3301, %v3529
        %v3531 = vpop.f32.mrf.mxu0
        %v3532 = vpop.f32.mrf.mxu0
        %v3533 = vadd.f32 %v3301, %v3532
        %v3534 = vpop.f32.mrf.mxu0
        %3535 = vmatprep.mubr.bf16.mxu0 %v3246
        %3536 = vmatmul.mubr.bf16.gmra.mxu0 %v3245
        %v3537 = vpop.f32.mrf.mxu0
        %v3538 = vadd.f32 %v3301, %v3537
        %v3539 = vpop.f32.mrf.mxu0
        %v3540 = vpop.f32.mrf.mxu0
        %v3541 = vadd.f32 %v3301, %v3540
        %v3542 = vpop.f32.mrf.mxu0
        %3543 = vdwg.mxu0
        %3544 = vmatprep.subr.bf16.mxu0 0
        %3545 = vmatpush1.bf16.msra.mxu0 %v3422
        %3546 = vmatprep.subr.bf16.mxu0 0
        %3547 = vmatpush1.bf16.msra.mxu0 %v3421
        %3548 = vmatprep.subr.bf16.mxu0 0
        %3549 = vmatpush1.bf16.msra.mxu0 %v3420
        %3550 = vmatprep.subr.bf16.mxu0 0
        %3551 = vmatpush1.bf16.msra.mxu0 %v3419
        %3552 = vmatprep.subr.bf16.mxu0 0
        %3553 = vmatpush1.bf16.msra.mxu0 %v3418
        %3554 = vmatprep.subr.bf16.mxu0 0
        %3555 = vmatpush1.bf16.msra.mxu0 %v3417
        %3556 = vmatprep.subr.bf16.mxu0 0
        %3557 = vmatpush1.bf16.msra.mxu0 %v3416
        %3558 = vmatprep.subr.bf16.mxu0 0
        %3559 = vmatpush1.bf16.msra.mxu0 %v3415
        %3560 = vmatprep.subr.bf16.mxu0 0
        %3561 = vmatpush2.bf16.msra.mxu0 0
        %3562 = vmatprep.subr.bf16.mxu0 0
        %3563 = vmatpush2.bf16.msra.mxu0 0
        %3564 = vmatprep.subr.bf16.mxu0 0
        %3565 = vmatpush2.bf16.msra.mxu0 0
        %3566 = vmatprep.subr.bf16.mxu0 0
        %3567 = vmatpush2.bf16.msra.mxu0 0
        %3568 = vmatprep.subr.bf16.mxu0 0
        %3569 = vmatpush2.bf16.msra.mxu0 0
        %3570 = vmatprep.subr.bf16.mxu0 0
        %3571 = vmatpush2.bf16.msra.mxu0 0
        %3572 = vmatprep.subr.bf16.mxu0 0
        %3573 = vmatpush2.bf16.msra.mxu0 0
        %3574 = vmatprep.subr.bf16.mxu0 0
        %3575 = vmatpush2.bf16.msra.mxu0 0
        %3576 = vmatprep.mubr.bf16.mxu0 0
        %3577 = vmatmul.mubr.bf16.gmra.mxu0 %v3226
        %v3578 = vpop.f32.mrf.mxu0
        %v3579 = vadd.f32 %v3482, %v3578
        %v3580 = vpop.f32.mrf.mxu0
        %v3581 = vpop.f32.mrf.mxu0
        %v3582 = vadd.f32 %v3485, %v3581
        %v3583 = vpop.f32.mrf.mxu0
        %3584 = vmatprep.mubr.bf16.mxu0 0
        %3585 = vmatmul.mubr.bf16.gmra.mxu0 %v3229
        %v3586 = vpop.f32.mrf.mxu0
        %v3587 = vadd.f32 %v3490, %v3586
        %v3588 = vpop.f32.mrf.mxu0
        %v3589 = vpop.f32.mrf.mxu0
        %v3590 = vadd.f32 %v3493, %v3589
        %v3591 = vpop.f32.mrf.mxu0
        %3592 = vmatprep.mubr.bf16.mxu0 0
        %3593 = vmatmul.mubr.bf16.gmra.mxu0 %v3232
        %v3594 = vpop.f32.mrf.mxu0
        %v3595 = vadd.f32 %v3498, %v3594
        %v3596 = vpop.f32.mrf.mxu0
        %v3597 = vpop.f32.mrf.mxu0
        %v3598 = vadd.f32 %v3501, %v3597
        %v3599 = vpop.f32.mrf.mxu0
        %3600 = vmatprep.mubr.bf16.mxu0 0
        %3601 = vmatmul.mubr.bf16.gmra.mxu0 %v3235
        %v3602 = vpop.f32.mrf.mxu0
        %v3603 = vadd.f32 %v3506, %v3602
        %v3604 = vpop.f32.mrf.mxu0
        %v3605 = vpop.f32.mrf.mxu0
        %v3606 = vadd.f32 %v3509, %v3605
        %v3607 = vpop.f32.mrf.mxu0
        %3608 = vmatprep.mubr.bf16.mxu0 0
        %3609 = vmatmul.mubr.bf16.gmra.mxu0 %v3238
        %v3610 = vpop.f32.mrf.mxu0
        %v3611 = vadd.f32 %v3514, %v3610
        %v3612 = vpop.f32.mrf.mxu0
        %v3613 = vpop.f32.mrf.mxu0
        %v3614 = vadd.f32 %v3517, %v3613
        %v3615 = vpop.f32.mrf.mxu0
        %3616 = vmatprep.mubr.bf16.mxu0 0
        %3617 = vmatmul.mubr.bf16.gmra.mxu0 %v3241
        %v3618 = vpop.f32.mrf.mxu0
        %v3619 = vadd.f32 %v3522, %v3618
        %v3620 = vpop.f32.mrf.mxu0
        %v3621 = vpop.f32.mrf.mxu0
        %v3622 = vadd.f32 %v3525, %v3621
        %v3623 = vpop.f32.mrf.mxu0
        %3624 = vmatprep.mubr.bf16.mxu0 0
        %3625 = vmatmul.mubr.bf16.gmra.mxu0 %v3244
        %v3626 = vpop.f32.mrf.mxu0
        %v3627 = vadd.f32 %v3530, %v3626
        %v3628 = vpop.f32.mrf.mxu0
        %v3629 = vpop.f32.mrf.mxu0
        %v3630 = vadd.f32 %v3533, %v3629
        %v3631 = vpop.f32.mrf.mxu0
        %3632 = vmatprep.mubr.bf16.mxu0 0
        %3633 = vmatmul.mubr.bf16.gmra.mxu0 %v3247
        %v3634 = vpop.f32.mrf.mxu0
        %v3635 = vadd.f32 %v3538, %v3634
        %v3636 = vpop.f32.mrf.mxu0
        %v3637 = vpop.f32.mrf.mxu0
        %v3638 = vadd.f32 %v3541, %v3637
        %v3639 = vpop.f32.mrf.mxu0
        %3640 = vdwg.mxu0
        %v3641 = vmax.f32 %v3579, 0.0
        %v3642 = vmax.f32 %v3582, 0.0
        %v3643 = vmax.f32 %v3587, 0.0
        %v3644 = vmax.f32 %v3590, 0.0
        %v3645 = vmax.f32 %v3595, 0.0
        %v3646 = vmax.f32 %v3598, 0.0
        %v3647 = vmax.f32 %v3603, 0.0
        %v3648 = vmax.f32 %v3606, 0.0
        %v3649 = vmax.f32 %v3611, 0.0
        %v3650 = vmax.f32 %v3614, 0.0
        %v3651 = vmax.f32 %v3619, 0.0
        %v3652 = vmax.f32 %v3622, 0.0
        %v3653 = vmax.f32 %v3627, 0.0
        %v3654 = vmax.f32 %v3630, 0.0
        %v3655 = vmax.f32 %v3635, 0.0
        %v3656 = vmax.f32 %v3638, 0.0
        %v3657 = vpack.c.bf16 %v3642, %v3641
        %v3658 = vpack.c.bf16 %v3644, %v3643
        %v3659 = vpack.c.bf16 %v3646, %v3645
        %v3660 = vpack.c.bf16 %v3648, %v3647
        %v3661 = vpack.c.bf16 %v3650, %v3649
        %v3662 = vpack.c.bf16 %v3652, %v3651
        %v3663 = vpack.c.bf16 %v3654, %v3653
        %v3664 = vpack.c.bf16 %v3656, %v3655
        %v3665 = vld [vmem:[%s12] sm:$0xf]
        %v3666 = vld [vmem:[%s12 + $0x4] sm:$0xf]
        %v3667 = vld [vmem:[%s12 + $0x8] sm:$0xf]
        %v3668 = vld [vmem:[%s12 + $0xc] sm:$0xf]
        %v3669 = vld [vmem:[%s12 + $0x10] sm:$0xf]
        %v3670 = vld [vmem:[%s12 + $0x14] sm:$0xf]
        %v3671 = vld [vmem:[%s12 + $0x18] sm:$0xf]
        %v3672 = vld [vmem:[%s12 + $0x1c] sm:$0xf]
        %v3673 = vld [vmem:[%s12 + $0x20] sm:$0xf]
        %v3674 = vld [vmem:[%s12 + $0x24] sm:$0xf]
        %v3675 = vld [vmem:[%s12 + $0x28] sm:$0xf]
        %v3676 = vld [vmem:[%s12 + $0x2c] sm:$0xf]
        %v3677 = vld [vmem:[%s12 + $0x30] sm:$0xf]
        %v3678 = vld [vmem:[%s12 + $0x34] sm:$0xf]
        %v3679 = vld [vmem:[%s12 + $0x38] sm:$0xf]
        %v3680 = vld [vmem:[%s12 + $0x3c] sm:$0xf]
        %v3681 = vld [vmem:[%s13] sm:$0x1]
        %v3683 = vlaneseq
        %v3684 = vshrl.u32 %v3683, 7
        %v3685 = vsub.s32 0, %v3684
        %v3686 = vrot.slane %v3681, %v3685
        %v3704 = vunpack.c.l.b16 %v3665
        %v3705 = vunpack.c.l.b16 %v3666
        %v3706 = vunpack.c.l.b16 %v3667
        %v3707 = vunpack.c.l.b16 %v3668
        %v3708 = vunpack.c.l.b16 %v3669
        %v3709 = vunpack.c.l.b16 %v3670
        %v3710 = vunpack.c.l.b16 %v3671
        %v3711 = vunpack.c.l.b16 %v3672
        %v3712 = vunpack.c.l.b16 %v3673
        %v3713 = vunpack.c.l.b16 %v3674
        %v3714 = vunpack.c.l.b16 %v3675
        %v3715 = vunpack.c.l.b16 %v3676
        %v3716 = vunpack.c.l.b16 %v3677
        %v3717 = vunpack.c.l.b16 %v3678
        %v3718 = vunpack.c.l.b16 %v3679
        %v3719 = vunpack.c.l.b16 %v3680
        %v3720 = vpack.c.b16 %v3705, %v3704
        %v3721 = vpack.c.b16 %v3707, %v3706
        %v3722 = vpack.c.b16 %v3709, %v3708
        %v3723 = vpack.c.b16 %v3711, %v3710
        %v3724 = vpack.c.b16 %v3713, %v3712
        %v3725 = vpack.c.b16 %v3715, %v3714
        %v3726 = vpack.c.b16 %v3717, %v3716
        %v3727 = vpack.c.b16 %v3719, %v3718
        %3736 = vmatprep.subr.bf16.mxu0 0
        %3737 = vmatpush1.bf16.msra.mxu0 %v3727
        %3738 = vmatprep.subr.bf16.mxu0 0
        %3739 = vmatpush1.bf16.msra.mxu0 %v3726
        %3740 = vmatprep.subr.bf16.mxu0 0
        %3741 = vmatpush1.bf16.msra.mxu0 %v3725
        %3742 = vmatprep.subr.bf16.mxu0 0
        %3743 = vmatpush1.bf16.msra.mxu0 %v3724
        %3744 = vmatprep.subr.bf16.mxu0 0
        %3745 = vmatpush1.bf16.msra.mxu0 %v3723
        %3746 = vmatprep.subr.bf16.mxu0 0
        %3747 = vmatpush1.bf16.msra.mxu0 %v3722
        %3748 = vmatprep.subr.bf16.mxu0 0
        %3749 = vmatpush1.bf16.msra.mxu0 %v3721
        %3750 = vmatprep.subr.bf16.mxu0 0
        %3751 = vmatpush1.bf16.msra.mxu0 %v3720
        %3752 = vmatprep.subr.bf16.mxu0 0
        %3753 = vmatpush2.bf16.msra.mxu0 0
        %3754 = vmatprep.subr.bf16.mxu0 0
        %3755 = vmatpush2.bf16.msra.mxu0 0
        %3756 = vmatprep.subr.bf16.mxu0 0
        %3757 = vmatpush2.bf16.msra.mxu0 0
        %3758 = vmatprep.subr.bf16.mxu0 0
        %3759 = vmatpush2.bf16.msra.mxu0 0
        %3760 = vmatprep.subr.bf16.mxu0 0
        %3761 = vmatpush2.bf16.msra.mxu0 0
        %3762 = vmatprep.subr.bf16.mxu0 0
        %3763 = vmatpush2.bf16.msra.mxu0 0
        %3764 = vmatprep.subr.bf16.mxu0 0
        %3765 = vmatpush2.bf16.msra.mxu0 0
        %3766 = vmatprep.subr.bf16.mxu0 0
        %3767 = vmatpush2.bf16.msra.mxu0 0
        %3768 = vmatprep.mubr.bf16.mxu0 0
        %3769 = vmatmul.mubr.bf16.gmra.mxu0 %v3657
        %v3770 = vpop.f32.mrf.mxu0
        %v3771 = vadd.f32 %v3686, %v3770
        %v3772 = vpop.f32.mrf.mxu0
        %v3773 = vpop.f32.mrf.mxu0
        %v3774 = vadd.f32 %v3686, %v3773
        %v3775 = vpop.f32.mrf.mxu0
        %3776 = vmatprep.mubr.bf16.mxu0 0
        %3777 = vmatmul.mubr.bf16.gmra.mxu0 %v3658
        %v3778 = vpop.f32.mrf.mxu0
        %v3779 = vadd.f32 %v3686, %v3778
        %v3780 = vpop.f32.mrf.mxu0
        %v3781 = vpop.f32.mrf.mxu0
        %v3782 = vadd.f32 %v3686, %v3781
        %v3783 = vpop.f32.mrf.mxu0
        %3784 = vmatprep.mubr.bf16.mxu0 0
        %3785 = vmatmul.mubr.bf16.gmra.mxu0 %v3659
        %v3786 = vpop.f32.mrf.mxu0
        %v3787 = vadd.f32 %v3686, %v3786
        %v3788 = vpop.f32.mrf.mxu0
        %v3789 = vpop.f32.mrf.mxu0
        %v3790 = vadd.f32 %v3686, %v3789
        %v3791 = vpop.f32.mrf.mxu0
        %3792 = vmatprep.mubr.bf16.mxu0 0
        %3793 = vmatmul.mubr.bf16.gmra.mxu0 %v3660
        %v3794 = vpop.f32.mrf.mxu0
        %v3795 = vadd.f32 %v3686, %v3794
        %v3796 = vpop.f32.mrf.mxu0
        %v3797 = vpop.f32.mrf.mxu0
        %v3798 = vadd.f32 %v3686, %v3797
        %v3799 = vpop.f32.mrf.mxu0
        %3800 = vmatprep.mubr.bf16.mxu0 0
        %3801 = vmatmul.mubr.bf16.gmra.mxu0 %v3661
        %v3802 = vpop.f32.mrf.mxu0
        %v3803 = vadd.f32 %v3686, %v3802
        %v3804 = vpop.f32.mrf.mxu0
        %v3805 = vpop.f32.mrf.mxu0
        %v3806 = vadd.f32 %v3686, %v3805
        %v3807 = vpop.f32.mrf.mxu0
        %3808 = vmatprep.mubr.bf16.mxu0 0
        %3809 = vmatmul.mubr.bf16.gmra.mxu0 %v3662
        %v3810 = vpop.f32.mrf.mxu0
        %v3811 = vadd.f32 %v3686, %v3810
        %v3812 = vpop.f32.mrf.mxu0
        %v3813 = vpop.f32.mrf.mxu0
        %v3814 = vadd.f32 %v3686, %v3813
        %v3815 = vpop.f32.mrf.mxu0
        %3816 = vmatprep.mubr.bf16.mxu0 0
        %3817 = vmatmul.mubr.bf16.gmra.mxu0 %v3663
        %v3818 = vpop.f32.mrf.mxu0
        %v3819 = vadd.f32 %v3686, %v3818
        %v3820 = vpop.f32.mrf.mxu0
        %v3821 = vpop.f32.mrf.mxu0
        %v3822 = vadd.f32 %v3686, %v3821
        %v3823 = vpop.f32.mrf.mxu0
        %3824 = vmatprep.mubr.bf16.mxu0 0
        %3825 = vmatmul.mubr.bf16.gmra.mxu0 %v3664
        %v3826 = vpop.f32.mrf.mxu0
        %v3827 = vadd.f32 %v3686, %v3826
        %v3828 = vpop.f32.mrf.mxu0
        %v3829 = vpop.f32.mrf.mxu0
        %v3830 = vadd.f32 %v3686, %v3829
        %v3831 = vpop.f32.mrf.mxu0
        %3832 = vdwg.mxu0
        %v3833 = vmax.f32 %v3162, 0.0
        %v3834 = vmax.f32 %v3165, 0.0
        %v3835 = vmax.f32 %v3170, 0.0
        %v3836 = vmax.f32 %v3173, 0.0
        %v3837 = vmax.f32 %v3178, 0.0
        %v3838 = vmax.f32 %v3181, 0.0
        %v3839 = vmax.f32 %v3186, 0.0
        %v3840 = vmax.f32 %v3189, 0.0
        %v3841 = vmax.f32 %v3194, 0.0
        %v3842 = vmax.f32 %v3197, 0.0
        %v3843 = vmax.f32 %v3202, 0.0
        %v3844 = vmax.f32 %v3205, 0.0
        %v3845 = vmax.f32 %v3210, 0.0
        %v3846 = vmax.f32 %v3213, 0.0
        %v3847 = vmax.f32 %v3218, 0.0
        %v3848 = vmax.f32 %v3221, 0.0
        %v3849 = vpack.c.bf16 %v3834, %v3833
        %v3850 = vpack.c.bf16 %v3836, %v3835
        %v3851 = vpack.c.bf16 %v3838, %v3837
        %v3852 = vpack.c.bf16 %v3840, %v3839
        %v3853 = vpack.c.bf16 %v3842, %v3841
        %v3854 = vpack.c.bf16 %v3844, %v3843
        %v3855 = vpack.c.bf16 %v3846, %v3845
        %v3856 = vpack.c.bf16 %v3848, %v3847
        %v3857 = vld [vmem:[%s14] sm:$0xf]
        %v3858 = vld [vmem:[%s14 + $0x4] sm:$0xf]
        %v3859 = vld [vmem:[%s14 + $0x8] sm:$0xf]
        %v3860 = vld [vmem:[%s14 + $0xc] sm:$0xf]
        %v3861 = vld [vmem:[%s14 + $0x10] sm:$0xf]
        %v3862 = vld [vmem:[%s14 + $0x14] sm:$0xf]
        %v3863 = vld [vmem:[%s14 + $0x18] sm:$0xf]
        %v3864 = vld [vmem:[%s14 + $0x1c] sm:$0xf]
        %v3865 = vmax.f32 %v3771, 0.0
        %v3866 = vmax.f32 %v3774, 0.0
        %v3867 = vmax.f32 %v3779, 0.0
        %v3868 = vmax.f32 %v3782, 0.0
        %v3869 = vmax.f32 %v3787, 0.0
        %v3870 = vmax.f32 %v3790, 0.0
        %v3871 = vmax.f32 %v3795, 0.0
        %v3872 = vmax.f32 %v3798, 0.0
        %v3873 = vmax.f32 %v3803, 0.0
        %v3874 = vmax.f32 %v3806, 0.0
        %v3875 = vmax.f32 %v3811, 0.0
        %v3876 = vmax.f32 %v3814, 0.0
        %v3877 = vmax.f32 %v3819, 0.0
        %v3878 = vmax.f32 %v3822, 0.0
        %v3879 = vmax.f32 %v3827, 0.0
        %v3880 = vmax.f32 %v3830, 0.0
        %v3881 = vpack.c.bf16 %v3866, %v3865
        %v3882 = vpack.c.bf16 %v3868, %v3867
        %v3883 = vpack.c.bf16 %v3870, %v3869
        %v3884 = vpack.c.bf16 %v3872, %v3871
        %v3885 = vpack.c.bf16 %v3874, %v3873
        %v3886 = vpack.c.bf16 %v3876, %v3875
        %v3887 = vpack.c.bf16 %v3878, %v3877
        %v3888 = vpack.c.bf16 %v3880, %v3879
        %v3889 = vld [vmem:[%s15] sm:$0xf]
        %v3890 = vld [vmem:[%s15 + $0x4] sm:$0xf]
        %v3891 = vld [vmem:[%s15 + $0x8] sm:$0xf]
        %v3892 = vld [vmem:[%s15 + $0xc] sm:$0xf]
        %v3893 = vld [vmem:[%s15 + $0x10] sm:$0xf]
        %v3894 = vld [vmem:[%s15 + $0x14] sm:$0xf]
        %v3895 = vld [vmem:[%s15 + $0x18] sm:$0xf]
        %v3896 = vld [vmem:[%s15 + $0x1c] sm:$0xf]
        %v3905 = vunpack.c.l.b16 %v3889
        %v3906 = vunpack.c.l.b16 %v3890
        %v3907 = vunpack.c.l.b16 %v3891
        %v3908 = vunpack.c.l.b16 %v3892
        %v3909 = vunpack.c.l.b16 %v3893
        %v3910 = vunpack.c.l.b16 %v3894
        %v3911 = vunpack.c.l.b16 %v3895
        %v3912 = vunpack.c.l.b16 %v3896
        %v3913 = vpack.c.b16 %v3906, %v3905
        %v3914 = vpack.c.b16 %v3908, %v3907
        %v3915 = vpack.c.b16 %v3910, %v3909
        %v3916 = vpack.c.b16 %v3912, %v3911
        %vm3921 = vcmask 523264
        %v3923 = vsel %vm3921, %v3881, 0
        %v3926 = vsel %vm3921, %v3882, 0
        %v3929 = vsel %vm3921, %v3883, 0
        %v3932 = vsel %vm3921, %v3884, 0
        %v3935 = vsel %vm3921, %v3885, 0
        %v3938 = vsel %vm3921, %v3886, 0
        %v3941 = vsel %vm3921, %v3887, 0
        %v3944 = vsel %vm3921, %v3888, 0
        %3946 = vmatprep.subr.bf16.mxu0 0
        %3947 = vmatpush1.bf16.msra.mxu0 0
        %3948 = vmatprep.subr.bf16.mxu0 0
        %3949 = vmatpush1.bf16.msra.mxu0 0
        %3950 = vmatprep.subr.bf16.mxu0 0
        %3951 = vmatpush1.bf16.msra.mxu0 0
        %3952 = vmatprep.subr.bf16.mxu0 0
        %3953 = vmatpush1.bf16.msra.mxu0 0
        %3954 = vmatprep.subr.bf16.mxu0 0
        %3955 = vmatpush1.bf16.msra.mxu0 %v3916
        %3956 = vmatprep.subr.bf16.mxu0 0
        %3957 = vmatpush1.bf16.msra.mxu0 %v3915
        %3958 = vmatprep.subr.bf16.mxu0 0
        %3959 = vmatpush1.bf16.msra.mxu0 %v3914
        %3960 = vmatprep.subr.bf16.mxu0 0
        %3961 = vmatpush1.bf16.msra.mxu0 %v3913
        %3962 = vmatprep.subr.bf16.mxu0 0
        %3963 = vmatpush2.bf16.msra.mxu0 0
        %3964 = vmatprep.subr.bf16.mxu0 0
        %3965 = vmatpush2.bf16.msra.mxu0 0
        %3966 = vmatprep.subr.bf16.mxu0 0
        %3967 = vmatpush2.bf16.msra.mxu0 0
        %3968 = vmatprep.subr.bf16.mxu0 0
        %3969 = vmatpush2.bf16.msra.mxu0 0
        %3970 = vmatprep.subr.bf16.mxu0 0
        %3971 = vmatpush2.bf16.msra.mxu0 0
        %3972 = vmatprep.subr.bf16.mxu0 0
        %3973 = vmatpush2.bf16.msra.mxu0 0
        %3974 = vmatprep.subr.bf16.mxu0 0
        %3975 = vmatpush2.bf16.msra.mxu0 0
        %3976 = vmatprep.subr.bf16.mxu0 0
        %3977 = vmatpush2.bf16.msra.mxu0 0
        %3978 = vmatprep.mubr.bf16.mxu0 0
        %3979 = vmatmul.mubr.bf16.gmra.mxu0 %v3923
        %v3980 = vpop.f32.mrf.mxu0
        %v3981 = vadd.f32 0.0, %v3980
        %v3982 = vpop.f32.mrf.mxu0
        %v3983 = vpop.f32.mrf.mxu0
        %v3984 = vadd.f32 0.0, %v3983
        %v3985 = vpop.f32.mrf.mxu0
        %3986 = vmatprep.mubr.bf16.mxu0 0
        %3987 = vmatmul.mubr.bf16.gmra.mxu0 %v3926
        %v3988 = vpop.f32.mrf.mxu0
        %v3989 = vadd.f32 0.0, %v3988
        %v3990 = vpop.f32.mrf.mxu0
        %v3991 = vpop.f32.mrf.mxu0
        %v3992 = vadd.f32 0.0, %v3991
        %v3993 = vpop.f32.mrf.mxu0
        %3994 = vmatprep.mubr.bf16.mxu0 0
        %3995 = vmatmul.mubr.bf16.gmra.mxu0 %v3929
        %v3996 = vpop.f32.mrf.mxu0
        %v3997 = vadd.f32 0.0, %v3996
        %v3998 = vpop.f32.mrf.mxu0
        %v3999 = vpop.f32.mrf.mxu0
        %v4000 = vadd.f32 0.0, %v3999
        %v4001 = vpop.f32.mrf.mxu0
        %4002 = vmatprep.mubr.bf16.mxu0 0
        %4003 = vmatmul.mubr.bf16.gmra.mxu0 %v3932
        %v4004 = vpop.f32.mrf.mxu0
        %v4005 = vadd.f32 0.0, %v4004
        %v4006 = vpop.f32.mrf.mxu0
        %v4007 = vpop.f32.mrf.mxu0
        %v4008 = vadd.f32 0.0, %v4007
        %v4009 = vpop.f32.mrf.mxu0
        %4010 = vmatprep.mubr.bf16.mxu0 0
        %4011 = vmatmul.mubr.bf16.gmra.mxu0 %v3935
        %v4012 = vpop.f32.mrf.mxu0
        %v4013 = vadd.f32 0.0, %v4012
        %v4014 = vpop.f32.mrf.mxu0
        %v4015 = vpop.f32.mrf.mxu0
        %v4016 = vadd.f32 0.0, %v4015
        %v4017 = vpop.f32.mrf.mxu0
        %4018 = vmatprep.mubr.bf16.mxu0 0
        %4019 = vmatmul.mubr.bf16.gmra.mxu0 %v3938
        %v4020 = vpop.f32.mrf.mxu0
        %v4021 = vadd.f32 0.0, %v4020
        %v4022 = vpop.f32.mrf.mxu0
        %v4023 = vpop.f32.mrf.mxu0
        %v4024 = vadd.f32 0.0, %v4023
        %v4025 = vpop.f32.mrf.mxu0
        %4026 = vmatprep.mubr.bf16.mxu0 0
        %4027 = vmatmul.mubr.bf16.gmra.mxu0 %v3941
        %v4028 = vpop.f32.mrf.mxu0
        %v4029 = vadd.f32 0.0, %v4028
        %v4030 = vpop.f32.mrf.mxu0
        %v4031 = vpop.f32.mrf.mxu0
        %v4032 = vadd.f32 0.0, %v4031
        %v4033 = vpop.f32.mrf.mxu0
        %4034 = vmatprep.mubr.bf16.mxu0 0
        %4035 = vmatmul.mubr.bf16.gmra.mxu0 %v3944
        %v4036 = vpop.f32.mrf.mxu0
        %v4037 = vadd.f32 0.0, %v4036
        %v4038 = vpop.f32.mrf.mxu0
        %v4039 = vpop.f32.mrf.mxu0
        %v4040 = vadd.f32 0.0, %v4039
        %v4041 = vpop.f32.mrf.mxu0
        %4042 = vdwg.mxu0
        %v4051 = vunpack.c.l.b16 %v3857
        %v4052 = vunpack.c.l.b16 %v3858
        %v4053 = vunpack.c.l.b16 %v3859
        %v4054 = vunpack.c.l.b16 %v3860
        %v4055 = vunpack.c.l.b16 %v3861
        %v4056 = vunpack.c.l.b16 %v3862
        %v4057 = vunpack.c.l.b16 %v3863
        %v4058 = vunpack.c.l.b16 %v3864
        %v4059 = vpack.c.b16 %v4052, %v4051
        %v4060 = vpack.c.b16 %v4054, %v4053
        %v4061 = vpack.c.b16 %v4056, %v4055
        %v4062 = vpack.c.b16 %v4058, %v4057
        %v4068 = vsel %vm3921, %v3849, 0
        %v4071 = vsel %vm3921, %v3850, 0
        %v4074 = vsel %vm3921, %v3851, 0
        %v4077 = vsel %vm3921, %v3852, 0
        %v4080 = vsel %vm3921, %v3853, 0
        %v4083 = vsel %vm3921, %v3854, 0
        %v4086 = vsel %vm3921, %v3855, 0
        %v4089 = vsel %vm3921, %v3856, 0
        %4091 = vmatprep.subr.bf16.mxu0 0
        %4092 = vmatpush1.bf16.msra.mxu0 0
        %4093 = vmatprep.subr.bf16.mxu0 0
        %4094 = vmatpush1.bf16.msra.mxu0 0
        %4095 = vmatprep.subr.bf16.mxu0 0
        %4096 = vmatpush1.bf16.msra.mxu0 0
        %4097 = vmatprep.subr.bf16.mxu0 0
        %4098 = vmatpush1.bf16.msra.mxu0 0
        %4099 = vmatprep.subr.bf16.mxu0 0
        %4100 = vmatpush1.bf16.msra.mxu0 %v4062
        %4101 = vmatprep.subr.bf16.mxu0 0
        %4102 = vmatpush1.bf16.msra.mxu0 %v4061
        %4103 = vmatprep.subr.bf16.mxu0 0
        %4104 = vmatpush1.bf16.msra.mxu0 %v4060
        %4105 = vmatprep.subr.bf16.mxu0 0
        %4106 = vmatpush1.bf16.msra.mxu0 %v4059
        %4107 = vmatprep.subr.bf16.mxu0 0
        %4108 = vmatpush2.bf16.msra.mxu0 0
        %4109 = vmatprep.subr.bf16.mxu0 0
        %4110 = vmatpush2.bf16.msra.mxu0 0
        %4111 = vmatprep.subr.bf16.mxu0 0
        %4112 = vmatpush2.bf16.msra.mxu0 0
        %4113 = vmatprep.subr.bf16.mxu0 0
        %4114 = vmatpush2.bf16.msra.mxu0 0
        %4115 = vmatprep.subr.bf16.mxu0 0
        %4116 = vmatpush2.bf16.msra.mxu0 0
        %4117 = vmatprep.subr.bf16.mxu0 0
        %4118 = vmatpush2.bf16.msra.mxu0 0
        %4119 = vmatprep.subr.bf16.mxu0 0
        %4120 = vmatpush2.bf16.msra.mxu0 0
        %4121 = vmatprep.subr.bf16.mxu0 0
        %4122 = vmatpush2.bf16.msra.mxu0 0
        %4123 = vmatprep.mubr.bf16.mxu0 0
        %4124 = vmatmul.mubr.bf16.gmra.mxu0 %v4068
        %v4125 = vpop.f32.mrf.mxu0
        %v4126 = vadd.f32 %v3981, %v4125
        %v4127 = vpop.f32.mrf.mxu0
        %v4128 = vpop.f32.mrf.mxu0
        %v4129 = vadd.f32 %v3984, %v4128
        %v4130 = vpop.f32.mrf.mxu0
        %4131 = vmatprep.mubr.bf16.mxu0 0
        %4132 = vmatmul.mubr.bf16.gmra.mxu0 %v4071
        %v4133 = vpop.f32.mrf.mxu0
        %v4134 = vadd.f32 %v3989, %v4133
        %v4135 = vpop.f32.mrf.mxu0
        %v4136 = vpop.f32.mrf.mxu0
        %v4137 = vadd.f32 %v3992, %v4136
        %v4138 = vpop.f32.mrf.mxu0
        %4139 = vmatprep.mubr.bf16.mxu0 0
        %4140 = vmatmul.mubr.bf16.gmra.mxu0 %v4074
        %v4141 = vpop.f32.mrf.mxu0
        %v4142 = vadd.f32 %v3997, %v4141
        %v4143 = vpop.f32.mrf.mxu0
        %v4144 = vpop.f32.mrf.mxu0
        %v4145 = vadd.f32 %v4000, %v4144
        %v4146 = vpop.f32.mrf.mxu0
        %4147 = vmatprep.mubr.bf16.mxu0 0
        %4148 = vmatmul.mubr.bf16.gmra.mxu0 %v4077
        %v4149 = vpop.f32.mrf.mxu0
        %v4150 = vadd.f32 %v4005, %v4149
        %v4151 = vpop.f32.mrf.mxu0
        %v4152 = vpop.f32.mrf.mxu0
        %v4153 = vadd.f32 %v4008, %v4152
        %v4154 = vpop.f32.mrf.mxu0
        %4155 = vmatprep.mubr.bf16.mxu0 0
        %4156 = vmatmul.mubr.bf16.gmra.mxu0 %v4080
        %v4157 = vpop.f32.mrf.mxu0
        %v4158 = vadd.f32 %v4013, %v4157
        %v4159 = vpop.f32.mrf.mxu0
        %v4160 = vpop.f32.mrf.mxu0
        %v4161 = vadd.f32 %v4016, %v4160
        %v4162 = vpop.f32.mrf.mxu0
        %4163 = vmatprep.mubr.bf16.mxu0 0
        %4164 = vmatmul.mubr.bf16.gmra.mxu0 %v4083
        %v4165 = vpop.f32.mrf.mxu0
        %v4166 = vadd.f32 %v4021, %v4165
        %v4167 = vpop.f32.mrf.mxu0
        %v4168 = vpop.f32.mrf.mxu0
        %v4169 = vadd.f32 %v4024, %v4168
        %v4170 = vpop.f32.mrf.mxu0
        %4171 = vmatprep.mubr.bf16.mxu0 0
        %4172 = vmatmul.mubr.bf16.gmra.mxu0 %v4086
        %v4173 = vpop.f32.mrf.mxu0
        %v4174 = vadd.f32 %v4029, %v4173
        %v4175 = vpop.f32.mrf.mxu0
        %v4176 = vpop.f32.mrf.mxu0
        %v4177 = vadd.f32 %v4032, %v4176
        %v4178 = vpop.f32.mrf.mxu0
        %4179 = vmatprep.mubr.bf16.mxu0 0
        %4180 = vmatmul.mubr.bf16.gmra.mxu0 %v4089
        %v4181 = vpop.f32.mrf.mxu0
        %v4182 = vadd.f32 %v4037, %v4181
        %v4183 = vpop.f32.mrf.mxu0
        %v4184 = vpop.f32.mrf.mxu0
        %v4185 = vadd.f32 %v4040, %v4184
        %v4186 = vpop.f32.mrf.mxu0
        %4187 = vdwg.mxu0
        %v4188 = vmax.f32 %v2600, 0.0
        %v4189 = vmax.f32 %v2603, 0.0
        %v4190 = vmax.f32 %v2608, 0.0
        %v4191 = vmax.f32 %v2611, 0.0
        %v4192 = vmax.f32 %v2616, 0.0
        %v4193 = vmax.f32 %v2619, 0.0
        %v4194 = vmax.f32 %v2624, 0.0
        %v4195 = vmax.f32 %v2627, 0.0
        %v4196 = vmax.f32 %v2632, 0.0
        %v4197 = vmax.f32 %v2635, 0.0
        %v4198 = vmax.f32 %v2640, 0.0
        %v4199 = vmax.f32 %v2643, 0.0
        %v4200 = vmax.f32 %v2648, 0.0
        %v4201 = vmax.f32 %v2651, 0.0
        %v4202 = vmax.f32 %v2656, 0.0
        %v4203 = vmax.f32 %v2659, 0.0
        %v4204 = vpack.c.bf16 %v4189, %v4188
        %v4205 = vpack.c.bf16 %v4191, %v4190
        %v4206 = vpack.c.bf16 %v4193, %v4192
        %v4207 = vpack.c.bf16 %v4195, %v4194
        %v4208 = vpack.c.bf16 %v4197, %v4196
        %v4209 = vpack.c.bf16 %v4199, %v4198
        %v4210 = vpack.c.bf16 %v4201, %v4200
        %v4211 = vpack.c.bf16 %v4203, %v4202
        %v4212 = vld [vmem:[%s16] sm:$0xf]
        %v4213 = vld [vmem:[%s16 + $0x4] sm:$0xf]
        %v4214 = vld [vmem:[%s16 + $0x8] sm:$0xf]
        %v4215 = vld [vmem:[%s16 + $0xc] sm:$0xf]
        %v4216 = vld [vmem:[%s16 + $0x10] sm:$0xf]
        %v4217 = vld [vmem:[%s16 + $0x14] sm:$0xf]
        %v4218 = vld [vmem:[%s16 + $0x18] sm:$0xf]
        %v4219 = vld [vmem:[%s16 + $0x1c] sm:$0xf]
        %v4220 = vld [vmem:[%s16 + $0x20] sm:$0xf]
        %v4221 = vld [vmem:[%s16 + $0x24] sm:$0xf]
        %v4222 = vld [vmem:[%s16 + $0x28] sm:$0xf]
        %v4223 = vld [vmem:[%s16 + $0x2c] sm:$0xf]
        %v4236 = vunpack.c.l.b16 %v4212
        %v4237 = vunpack.c.l.b16 %v4213
        %v4238 = vunpack.c.l.b16 %v4214
        %v4239 = vunpack.c.l.b16 %v4215
        %v4240 = vunpack.c.l.b16 %v4216
        %v4241 = vunpack.c.l.b16 %v4217
        %v4242 = vunpack.c.l.b16 %v4218
        %v4243 = vunpack.c.l.b16 %v4219
        %v4244 = vunpack.c.l.b16 %v4220
        %v4245 = vunpack.c.l.b16 %v4221
        %v4246 = vunpack.c.l.b16 %v4222
        %v4247 = vunpack.c.l.b16 %v4223
        %v4248 = vpack.c.b16 %v4237, %v4236
        %v4249 = vpack.c.b16 %v4239, %v4238
        %v4250 = vpack.c.b16 %v4241, %v4240
        %v4251 = vpack.c.b16 %v4243, %v4242
        %v4252 = vpack.c.b16 %v4245, %v4244
        %v4253 = vpack.c.b16 %v4247, %v4246
        %v4261 = vsel %vm2742, %v4204, 0
        %v4264 = vsel %vm2742, %v4205, 0
        %v4267 = vsel %vm2742, %v4206, 0
        %v4270 = vsel %vm2742, %v4207, 0
        %v4273 = vsel %vm2742, %v4208, 0
        %v4276 = vsel %vm2742, %v4209, 0
        %v4279 = vsel %vm2742, %v4210, 0
        %v4282 = vsel %vm2742, %v4211, 0
        %4284 = vmatprep.subr.bf16.mxu0 0
        %4285 = vmatpush1.bf16.msra.mxu0 0
        %4286 = vmatprep.subr.bf16.mxu0 0
        %4287 = vmatpush1.bf16.msra.mxu0 0
        %4288 = vmatprep.subr.bf16.mxu0 0
        %4289 = vmatpush1.bf16.msra.mxu0 %v4253
        %4290 = vmatprep.subr.bf16.mxu0 0
        %4291 = vmatpush1.bf16.msra.mxu0 %v4252
        %4292 = vmatprep.subr.bf16.mxu0 0
        %4293 = vmatpush1.bf16.msra.mxu0 %v4251
        %4294 = vmatprep.subr.bf16.mxu0 0
        %4295 = vmatpush1.bf16.msra.mxu0 %v4250
        %4296 = vmatprep.subr.bf16.mxu0 0
        %4297 = vmatpush1.bf16.msra.mxu0 %v4249
        %4298 = vmatprep.subr.bf16.mxu0 0
        %4299 = vmatpush1.bf16.msra.mxu0 %v4248
        %4300 = vmatprep.subr.bf16.mxu0 0
        %4301 = vmatpush2.bf16.msra.mxu0 0
        %4302 = vmatprep.subr.bf16.mxu0 0
        %4303 = vmatpush2.bf16.msra.mxu0 0
        %4304 = vmatprep.subr.bf16.mxu0 0
        %4305 = vmatpush2.bf16.msra.mxu0 0
        %4306 = vmatprep.subr.bf16.mxu0 0
        %4307 = vmatpush2.bf16.msra.mxu0 0
        %4308 = vmatprep.subr.bf16.mxu0 0
        %4309 = vmatpush2.bf16.msra.mxu0 0
        %4310 = vmatprep.subr.bf16.mxu0 0
        %4311 = vmatpush2.bf16.msra.mxu0 0
        %4312 = vmatprep.subr.bf16.mxu0 0
        %4313 = vmatpush2.bf16.msra.mxu0 0
        %4314 = vmatprep.subr.bf16.mxu0 0
        %4315 = vmatpush2.bf16.msra.mxu0 0
        %4316 = vmatprep.mubr.bf16.mxu0 0
        %4317 = vmatmul.mubr.bf16.gmra.mxu0 %v4261
        %v4318 = vpop.f32.mrf.mxu0
        %v4319 = vadd.f32 0.0, %v4318
        %v4320 = vpop.f32.mrf.mxu0
        %v4321 = vpop.f32.mrf.mxu0
        %v4322 = vadd.f32 0.0, %v4321
        %v4323 = vpop.f32.mrf.mxu0
        %4324 = vmatprep.mubr.bf16.mxu0 0
        %4325 = vmatmul.mubr.bf16.gmra.mxu0 %v4264
        %v4326 = vpop.f32.mrf.mxu0
        %v4327 = vadd.f32 0.0, %v4326
        %v4328 = vpop.f32.mrf.mxu0
        %v4329 = vpop.f32.mrf.mxu0
        %v4330 = vadd.f32 0.0, %v4329
        %v4331 = vpop.f32.mrf.mxu0
        %4332 = vmatprep.mubr.bf16.mxu0 0
        %4333 = vmatmul.mubr.bf16.gmra.mxu0 %v4267
        %v4334 = vpop.f32.mrf.mxu0
        %v4335 = vadd.f32 0.0, %v4334
        %v4336 = vpop.f32.mrf.mxu0
        %v4337 = vpop.f32.mrf.mxu0
        %v4338 = vadd.f32 0.0, %v4337
        %v4339 = vpop.f32.mrf.mxu0
        %4340 = vmatprep.mubr.bf16.mxu0 0
        %4341 = vmatmul.mubr.bf16.gmra.mxu0 %v4270
        %v4342 = vpop.f32.mrf.mxu0
        %v4343 = vadd.f32 0.0, %v4342
        %v4344 = vpop.f32.mrf.mxu0
        %v4345 = vpop.f32.mrf.mxu0
        %v4346 = vadd.f32 0.0, %v4345
        %v4347 = vpop.f32.mrf.mxu0
        %4348 = vmatprep.mubr.bf16.mxu0 0
        %4349 = vmatmul.mubr.bf16.gmra.mxu0 %v4273
        %v4350 = vpop.f32.mrf.mxu0
        %v4351 = vadd.f32 0.0, %v4350
        %v4352 = vpop.f32.mrf.mxu0
        %v4353 = vpop.f32.mrf.mxu0
        %v4354 = vadd.f32 0.0, %v4353
        %v4355 = vpop.f32.mrf.mxu0
        %4356 = vmatprep.mubr.bf16.mxu0 0
        %4357 = vmatmul.mubr.bf16.gmra.mxu0 %v4276
        %v4358 = vpop.f32.mrf.mxu0
        %v4359 = vadd.f32 0.0, %v4358
        %v4360 = vpop.f32.mrf.mxu0
        %v4361 = vpop.f32.mrf.mxu0
        %v4362 = vadd.f32 0.0, %v4361
        %v4363 = vpop.f32.mrf.mxu0
        %4364 = vmatprep.mubr.bf16.mxu0 0
        %4365 = vmatmul.mubr.bf16.gmra.mxu0 %v4279
        %v4366 = vpop.f32.mrf.mxu0
        %v4367 = vadd.f32 0.0, %v4366
        %v4368 = vpop.f32.mrf.mxu0
        %v4369 = vpop.f32.mrf.mxu0
        %v4370 = vadd.f32 0.0, %v4369
        %v4371 = vpop.f32.mrf.mxu0
        %4372 = vmatprep.mubr.bf16.mxu0 0
        %4373 = vmatmul.mubr.bf16.gmra.mxu0 %v4282
        %v4374 = vpop.f32.mrf.mxu0
        %v4375 = vadd.f32 0.0, %v4374
        %v4376 = vpop.f32.mrf.mxu0
        %v4377 = vpop.f32.mrf.mxu0
        %v4378 = vadd.f32 0.0, %v4377
        %v4379 = vpop.f32.mrf.mxu0
        %4380 = vdwg.mxu0
        %v4381 = vadd.f32 %v4126, %v4319
        %v4382 = vadd.f32 %v4129, %v4322
        %v4383 = vadd.f32 %v4134, %v4327
        %v4384 = vadd.f32 %v4137, %v4330
        %v4385 = vadd.f32 %v4142, %v4335
        %v4386 = vadd.f32 %v4145, %v4338
        %v4387 = vadd.f32 %v4150, %v4343
        %v4388 = vadd.f32 %v4153, %v4346
        %v4389 = vadd.f32 %v4158, %v4351
        %v4390 = vadd.f32 %v4161, %v4354
        %v4391 = vadd.f32 %v4166, %v4359
        %v4392 = vadd.f32 %v4169, %v4362
        %v4393 = vadd.f32 %v4174, %v4367
        %v4394 = vadd.f32 %v4177, %v4370
        %v4395 = vadd.f32 %v4182, %v4375
        %v4396 = vadd.f32 %v4185, %v4378
        %v4397 = vld [vmem:[%s17] sm:$0x1]
        %v4399 = vlaneseq
        %v4400 = vshrl.u32 %v4399, 7
        %v4401 = vsub.s32 0, %v4400
        %v4402 = vrot.slane %v4397, %v4401
        %v4404 = vadd.f32 %v4381, %v4402
        %v4405 = vadd.f32 %v4382, %v4402
        %v4406 = vadd.f32 %v4383, %v4402
        %v4407 = vadd.f32 %v4384, %v4402
        %v4408 = vadd.f32 %v4385, %v4402
        %v4409 = vadd.f32 %v4386, %v4402
        %v4410 = vadd.f32 %v4387, %v4402
        %v4411 = vadd.f32 %v4388, %v4402
        %v4412 = vadd.f32 %v4389, %v4402
        %v4413 = vadd.f32 %v4390, %v4402
        %v4414 = vadd.f32 %v4391, %v4402
        %v4415 = vadd.f32 %v4392, %v4402
        %v4416 = vadd.f32 %v4393, %v4402
        %v4417 = vadd.f32 %v4394, %v4402
        %v4418 = vadd.f32 %v4395, %v4402
        %v4419 = vadd.f32 %v4396, %v4402
        %4420 = vst [vmem:[%s571] sm:$0xff] %v4404
        %4421 = vst [vmem:[%s571 + $0x8] sm:$0xff] %v4405
        %4422 = vst [vmem:[%s571 + $0x10] sm:$0xff] %v4406
        %4423 = vst [vmem:[%s571 + $0x18] sm:$0xff] %v4407
        %4424 = vst [vmem:[%s571 + $0x20] sm:$0xff] %v4408
        %4425 = vst [vmem:[%s571 + $0x28] sm:$0xff] %v4409
        %4426 = vst [vmem:[%s571 + $0x30] sm:$0xff] %v4410
        %4427 = vst [vmem:[%s571 + $0x38] sm:$0xff] %v4411
        %4428 = vst [vmem:[%s571 + $0x40] sm:$0xff] %v4412
        %4429 = vst [vmem:[%s571 + $0x48] sm:$0xff] %v4413
        %4430 = vst [vmem:[%s571 + $0x50] sm:$0xff] %v4414
        %4431 = vst [vmem:[%s571 + $0x58] sm:$0xff] %v4415
        %4432 = vst [vmem:[%s571 + $0x60] sm:$0xff] %v4416
        %4433 = vst [vmem:[%s571 + $0x68] sm:$0xff] %v4417
        %4434 = vst [vmem:[%s571 + $0x70] sm:$0xff] %v4418
        %4435 = vst [vmem:[%s571 + $0x78] sm:$0xff] %v4419
        %s4436 = sand.u32 %s423, 1
        %s4437 = scalar_lea.sflag [#allocation3], %s4436
        %s4438 = sand.u32 %s423, 1
        %s4439 = smul.addr %s4438, 128
        %s4440 = scalar_lea.vmem [#allocation2], %s4439
        // Predicated region
        $region93: #{agent_encoder_forward.1} parent=91 // pred_check
          %p4441 = pneg %p433
        $region94: #{agent_encoder_forward.1} parent=91 // pred_check_branch
          %4443 = sbr.rel (%p4441) target = $region96
        $region95: #{agent_encoder_forward.1} parent=91 // pred_region
          %s4444 = smul.u32 16, %s32
          %s4446 = ssub.s32 2048, 2048
          %4447 = vsyncadd %s4437, %s4446
          %s4448 = smul.addr %s4444, 128
          %s4449 = scalar_lea.hbm %s18, %s4448
          %s4450 = sshll.u32 %s4440, 4
          %s4451 = int_to_ptr.vmem [resolvable:$true] %s4450
          %4456 = dma.vmem_to_hbm [thread:$0]  %s4451, 2048, %s4449, %s4437, 128, 128, 8
        $region96: #{agent_encoder_forward.1} parent=91 // pred_fallthru
          _
      $region92: #{agent_encoder_forward.1} parent=5 // pred_fallthru
        _
      %p4457 = scmp.le.s32.totalorder 2, %s27
      // Predicated region
      $region97: #{agent_encoder_forward.1} parent=5 // pred_check
        %p4458 = pneg %p4457
      $region98: #{agent_encoder_forward.1} parent=5 // pred_check_branch
        %4460 = sbr.rel (%p4458) target = $region100
      $region99: #{agent_encoder_forward.1} parent=5 // pred_region
        %s4461 = ssub.s32 %s27, 2
        // Predicated region
        $region101: #{agent_encoder_forward.1} parent=99 // pred_check
          %p4462 = pneg %p439
        $region102: #{agent_encoder_forward.1} parent=99 // pred_check_branch
          %4464 = sbr.rel (%p4462) target = $region104
        $region103: #{agent_encoder_forward.1} parent=99 // pred_region
          %s4465 = sand.u32 %s424, 1
          %s4466 = scalar_lea.sflag [#allocation3], %s4465
          %s4467 = sand.u32 %s424, 1
          %s4468 = smul.addr %s4467, 128
          %s4469 = scalar_lea.vmem [#allocation2], %s4468
          %4470 = dma.done %s4466, 2048
        $region104: #{agent_encoder_forward.1} parent=99 // pred_fallthru
          _
      $region100: #{agent_encoder_forward.1} parent=5 // pred_fallthru
        _
    $region6: #{agent_encoder_forward.1} parent=1 // loop_footer
      %s31 = sadd.s32 1, %s27
    $region7: #{agent_encoder_forward.1} parent=1 // loop_footer_branch
      %26 = sbr.rel target = $region3
    $region8: #{agent_encoder_forward.1} parent=1 // loop_exit
      _
    %4471 = vsyncpa [#allocation3], 1
    %s4472 = scalar_lea.sflag [#allocation3], 1
    %4473 = vsyncpa %s4472, 1

</llo_original>
